<compile_context>
chip_gen: v7x
topology: tpu7x:2x2x1
jax: 0.10.0
libtpu: 0.0.40
codegen_flags: <defaults>
</compile_context>

<pallas_src>
import math

import jax
import jax.numpy as jnp
from jax.experimental import pallas as pl
from jax.experimental.pallas import tpu as pltpu

# ---------------- model config (small, consistent with the module) ----------------
MODE = "glob_only"
LAT_DIM_EXPR = 16
LAT_DIM_GLOB_SHAPE = 8
LAT_DIM_GEO_TOTAL = 40            # width of the raw 'geo' latent; only [:8] is used in glob_only
LAT_DIM = LAT_DIM_GLOB_SHAPE + LAT_DIM_EXPR   # 24
HIDDEN_DIM = 32
NLAYERS = 8
OUT_DIM = 3                        # offsets (n_hyper=0, sdf_corrective=False)
INPUT_DIM = 3
BETA = 100.0

D_IN = LAT_DIM + INPUT_DIM         # 27 (no freq bands)
NUM_LIN = NLAYERS + 1              # 9 linear layers
SKIP_IN = NLAYERS // 2             # skip connection at layer 4

G = 4                              # points packed per 128-lane vreg row
PACKED_HID = G * HIDDEN_DIM        # 128
assert PACKED_HID == 128


def _round_up(x, m):
    return ((x + m - 1) // m) * m


def layer_dims():
    """[(in_dim, out_dim)] for each linear layer of the inner DeepSDF (legacy=False)."""
    dims = [D_IN] + [HIDDEN_DIM] * NLAYERS + [OUT_DIM]
    shapes = []
    for layer in range(NUM_LIN):
        in_dim = dims[layer] + (D_IN if layer == SKIP_IN else 0)
        shapes.append((in_dim, dims[layer + 1]))
    return shapes


def init_params(key):
    """Deterministic synthetic init. DeformationNetwork builds its DeepSDF with
    geometric_init=False, so every layer uses the default nn.Linear-style uniform init."""
    params = []
    for in_dim, out_dim in layer_dims():
        key, kw, kb = jax.random.split(key, 3)
        bound = 1.0 / math.sqrt(in_dim)
        w = jax.random.uniform(kw, (in_dim, out_dim), jnp.float32, -bound, bound)
        b = jax.random.uniform(kb, (1, out_dim), jnp.float32, -bound, bound)
        params.append((w, b))
    return params


def _softplus_beta(x, beta):
    # torch.nn.Softplus(beta, threshold=20): (1/beta)*log1p(exp(beta*x)), linear above threshold.
    bx = beta * x
    return jnp.where(bx > 20.0, x, jnp.log1p(jnp.exp(jnp.minimum(bx, 20.0))) / beta)


# ---------------- weight packing (block-diagonal lane packing, skip split) ----------------
def pack_params(params, dtype=jnp.float32):
    """Repack the per-layer (W, b) into 4-way block-diagonal / lane-tiled form.

    Returns (w_geo, w_lat, w_hid, b_hid, w_out, b_out):
      w_geo : (2, G*3, 128)   block-diag xyz parts of layer 0 and the skip layer (1/sqrt2 folded)
      w_lat : (2, LAT, 128)   lane-tiled latent parts of layer 0 / skip layer (1/sqrt2 folded)
      w_hid : (NUM_LIN-2, 128, 128) block-diag hidden weights (skip layer's hidden part scaled)
      b_hid : (NUM_LIN-1, 128) lane-tiled biases for layers 0..NUM_LIN-2
      w_out : (128, G*OUT_DIM) block-diag final weight,  b_out : (1, G*OUT_DIM)
    """
    inv_sqrt2 = 1.0 / math.sqrt(2.0)
    eye = jnp.eye(G, dtype=jnp.float32)

    def blockdiag(w):        # (k, n) -> (G*k, G*n), one copy per packed group
        return jnp.kron(eye, w)

    def lanetile(w):         # (k, n) -> (k, G*n), same values broadcast to every group
        return jnp.tile(w, (1, G))

    w0, _ = params[0]
    w0_xyz, w0_lat = w0[:INPUT_DIM], w0[INPUT_DIM:]

    ws, _ = params[SKIP_IN]                       # (HIDDEN + D_IN, HIDDEN): [hidden | xyz | lat]
    ws_h = ws[:HIDDEN_DIM] * inv_sqrt2
    ws_xyz = ws[HIDDEN_DIM:HIDDEN_DIM + INPUT_DIM] * inv_sqrt2
    ws_lat = ws[HIDDEN_DIM + INPUT_DIM:] * inv_sqrt2

    w_geo = jnp.stack([blockdiag(w0_xyz), blockdiag(ws_xyz)])           # (2, 12, 128)
    w_lat = jnp.stack([lanetile(w0_lat), lanetile(ws_lat)])             # (2, LAT, 128)

    hid = []
    for layer in range(1, NUM_LIN - 1):
        w = ws_h if layer == SKIP_IN else params[layer][0]
        hid.append(blockdiag(w))
    w_hid = jnp.stack(hid)                                              # (7, 128, 128)

    b_hid = jnp.stack([lanetile(params[l][1])[0] for l in range(NUM_LIN - 1)])  # (8, 128)

    w_last, b_last = params[NUM_LIN - 1]
    w_out = blockdiag(w_last)                                           # (128, 12)
    b_out = lanetile(b_last)                                            # (1, 12)

    return (w_geo.astype(dtype), w_lat, w_hid.astype(dtype),
            b_hid.astype(jnp.float32), w_out.astype(dtype), b_out.astype(jnp.float32))


# ---------------- Pallas kernel: whole packed MLP over one row tile ----------------
def deform_mlp_kernel(xyz_ref, lat_ref, w_geo_ref, w_hid_ref, b_hid_ref,
                      w_out_ref, b_out_ref, out_ref):
    cd = w_hid_ref.dtype
    x_geo = xyz_ref[0].astype(cd)        # (tp, G*3): 4 query points per vreg row
    lat = lat_ref[0]                     # (2, 128) f32: per-batch latent contributions

    # layer 0: xyz part on the MXU, latent part folded in as a per-batch bias row
    z = jnp.dot(x_geo, w_geo_ref[0], preferred_element_type=jnp.float32)
    z = z + lat[0:1, :] + b_hid_ref[0:1, :]
    h = _softplus_beta(z, BETA).astype(cd)

    # hidden layers 1 .. NUM_LIN-2; the skip layer adds its xyz/latent parts (1/sqrt2 pre-folded)
    for layer in range(1, NUM_LIN - 1):
        z = jnp.dot(h, w_hid_ref[layer - 1], preferred_element_type=jnp.float32)
        if layer == SKIP_IN:
            z = z + jnp.dot(x_geo, w_geo_ref[1], preferred_element_type=jnp.float32)
            z = z + lat[1:2, :]
        z = z + b_hid_ref[layer:layer + 1, :]
        h = _softplus_beta(z, BETA).astype(cd)

    # final linear layer (no activation): (tp, 128) @ (128, G*OUT_DIM)
    out = jnp.dot(h, w_out_ref[...], preferred_element_type=jnp.float32) + b_out_ref[...]
    out_ref[0] = out.astype(out_ref.dtype)


# ---------------- wrapper: DeformationNetwork.forward (mode='glob_only') ----------------
def deformation_forward(xyz, lat_rep_geo, lat_rep_exp, params, *, tm=512,
                        compute_dtype=jnp.float32):
    """xyz: (B, N, 3) or (N, 3); lat_rep_geo: (B, 1, >=lat_dim_glob_shape);
    lat_rep_exp: (B, 1, lat_dim_expr).  Returns {'offsets': (B, N, 3)} like the module."""
    if xyz.ndim < 3:
        xyz = xyz[None]
    B, N, _ = xyz.shape

    # TODO(synk): per-point latents (shape (B, N, .)), modes 'compress'/'GNN'/'interpolate',
    # local_arch ensemble and neutral_only early-exit are not implemented here.
    assert lat_rep_geo.shape[1] == 1 and lat_rep_exp.shape[1] == 1, \
        "this kernel expects per-batch latents (B, 1, .)"
    cond = jnp.concatenate(
        [lat_rep_geo[:, 0, :LAT_DIM_GLOB_SHAPE], lat_rep_exp[:, 0, :]], axis=-1)  # (B, LAT)

    # Row tiling: tm points per grid step, packed 4 per vreg row.  Pad ragged N.
    tm = min(tm, _round_up(N, 8 * G))
    tm = _round_up(tm, 8 * G)
    n_pad = _round_up(N, tm)
    tp = tm // G
    n_tiles = n_pad // tm

    xyz_pad = jnp.pad(xyz.astype(jnp.float32), ((0, 0), (0, n_pad - N), (0, 0)))
    xyz_p = xyz_pad.reshape(B, n_pad // G, G * INPUT_DIM).astype(compute_dtype)

    w_geo, w_lat, w_hid, b_hid, w_out, b_out = pack_params(params, compute_dtype)
    # Per-batch latent contribution to layer 0 / skip layer, computed ONCE per batch
    # (B x 24 x 128 flops) instead of streaming a tiled (B, N, LAT) latent through HBM.
    lat_bias = jnp.einsum("bl,slh->bsh", cond, w_lat).astype(jnp.float32)  # (B, 2, 128)

    out = pl.pallas_call(
        deform_mlp_kernel,
        out_shape=jax.ShapeDtypeStruct((B, n_pad // G, G * OUT_DIM), jnp.float32),
        grid_spec=pltpu.PrefetchScalarGridSpec(
            num_scalar_prefetch=0,
            grid=(B, n_tiles),
            in_specs=[
                pl.BlockSpec((1, tp, G * INPUT_DIM), lambda b, i: (b, i, 0)),  # packed xyz
                pl.BlockSpec((1, 2, PACKED_HID), lambda b, i: (b, 0, 0)),      # per-batch latent
                pl.BlockSpec(w_geo.shape, lambda b, i: (0, 0, 0)),             # resident params
                pl.BlockSpec(w_hid.shape, lambda b, i: (0, 0, 0)),
                pl.BlockSpec(b_hid.shape, lambda b, i: (0, 0)),
                pl.BlockSpec(w_out.shape, lambda b, i: (0, 0)),
                pl.BlockSpec(b_out.shape, lambda b, i: (0, 0)),
            ],
            out_specs=pl.BlockSpec((1, tp, G * OUT_DIM), lambda b, i: (b, i, 0)),
        ),
        compiler_params=pltpu.CompilerParams(
            dimension_semantics=("parallel", "parallel")),
    )(xyz_p, lat_bias, w_geo, w_hid, b_hid, w_out, b_out)

    # Unpack: packed row r, group g  ->  point 4r+g.  Pure reshape, then drop padding.
    offsets = out.reshape(B, n_pad, OUT_DIM)[:, :N, :]
    return {"offsets": offsets}


# ---------------- pure-JAX reference (mirrors the PyTorch forward exactly) ----------------
def deformation_reference(xyz, lat_rep_geo, lat_rep_exp, params):
    if xyz.ndim < 3:
        xyz = xyz[None]
    B, N, _ = xyz.shape
    lat_geo = jnp.tile(lat_rep_geo, (1, N, 1)) if lat_rep_geo.shape[1] == 1 else lat_rep_geo
    lat_exp = jnp.tile(lat_rep_exp, (1, N, 1)) if lat_rep_exp.shape[1] == 1 else lat_rep_exp
    cond = jnp.concatenate([lat_geo[:, :, :LAT_DIM_GLOB_SHAPE], lat_exp], axis=-1)
    inp = jnp.concatenate([xyz, cond], axis=-1)
    x = inp
    for layer, (w, b) in enumerate(params):
        if layer == SKIP_IN:
            x = jnp.concatenate([x, inp], axis=-1) / math.sqrt(2.0)
        x = x @ w + b
        if layer < NUM_LIN - 1:
            x = _softplus_beta(x, BETA)
    return {"offsets": x[..., :OUT_DIM]}


if __name__ == "__main__":
    key = jax.random.PRNGKey(0)
    k_params, k_xyz, k_geo, k_exp = jax.random.split(key, 4)

    params = init_params(k_params)

    B, N = 2, 1000                                  # ragged N exercises the padding path
    xyz = jax.random.normal(k_xyz, (B, N, INPUT_DIM), jnp.float32)
    lat_rep_geo = jax.random.normal(k_geo, (B, 1, LAT_DIM_GEO_TOTAL), jnp.float32)
    lat_rep_exp = jax.random.normal(k_exp, (B, 1, LAT_DIM_EXPR), jnp.float32)

    # compute_dtype=jnp.bfloat16 is the recommended setting on v6e/v7x; float32 here so the
    # correctness check against the f32 reference stays tight.
    out = deformation_forward(xyz, lat_rep_geo, lat_rep_exp, params, tm=512,
                              compute_dtype=jnp.float32)
    offsets = jax.block_until_ready(out["offsets"])

    ref = deformation_reference(xyz, lat_rep_geo, lat_rep_exp, params)["offsets"]
    assert offsets.shape == (B, N, OUT_DIM)
    assert jnp.allclose(offsets, ref, atol=1e-3, rtol=1e-3), "mismatch vs JAX reference"
    print("KERNEL_OK")
</pallas_src>

<mosaic_0001>
module attributes {stable_mosaic.version = 11 : i64} {
  func.func @deform_mlp_kernel(%arg0: i32, %arg1: i32, %arg2: memref<1x128x12xf32, #tpu.memory_space<vmem>>, %arg3: memref<1x2x128xf32, #tpu.memory_space<vmem>>, %arg4: memref<2x12x128xf32, #tpu.memory_space<vmem>>, %arg5: memref<7x128x128xf32, #tpu.memory_space<vmem>>, %arg6: memref<8x128xf32, #tpu.memory_space<vmem>>, %arg7: memref<128x12xf32, #tpu.memory_space<vmem>>, %arg8: memref<1x12xf32, #tpu.memory_space<vmem>>, %arg9: memref<1x128x12xf32, #tpu.memory_space<vmem>>) attributes {dimension_semantics = [#tpu.dimension_semantics<parallel>, #tpu.dimension_semantics<parallel>], iteration_bounds = array<i64: 2, 2>, scalar_prefetch = 0 : i64, scratch_operands = 0 : i64, tpu.core_type = #tpu.core_type<tc>, window_params = [{transform_indices = @transform_0, window_bounds = array<i64: 1, 128, 12>}, {transform_indices = @transform_1, window_bounds = array<i64: 1, 2, 128>}, {pipeline_mode = #tpu.pipeline_mode<synchronous>, transform_indices = @transform_2, window_bounds = array<i64: 2, 12, 128>}, {pipeline_mode = #tpu.pipeline_mode<synchronous>, transform_indices = @transform_3, window_bounds = array<i64: 7, 128, 128>}, {pipeline_mode = #tpu.pipeline_mode<synchronous>, transform_indices = @transform_4, window_bounds = array<i64: 8, 128>}, {pipeline_mode = #tpu.pipeline_mode<synchronous>, transform_indices = @transform_5, window_bounds = array<i64: 128, 12>}, {pipeline_mode = #tpu.pipeline_mode<synchronous>, transform_indices = @transform_6, window_bounds = array<i64: 1, 12>}, {transform_indices = @transform_7, window_bounds = array<i64: 1, 128, 12>}]} {
    %c0 = arith.constant 0 : index
    %c0_0 = arith.constant 0 : index
    %c0_1 = arith.constant 0 : index
    %0 = vector.load %arg2[%c0, %c0_0, %c0_1] : memref<1x128x12xf32, #tpu.memory_space<vmem>>, vector<1x128x12xf32>
    %1 = vector.shape_cast %0 : vector<1x128x12xf32> to vector<128x12xf32>
    %c0_2 = arith.constant 0 : index
    %c0_3 = arith.constant 0 : index
    %c0_4 = arith.constant 0 : index
    %2 = vector.load %arg3[%c0_2, %c0_3, %c0_4] : memref<1x2x128xf32, #tpu.memory_space<vmem>>, vector<1x2x128xf32>
    %3 = vector.shape_cast %2 : vector<1x2x128xf32> to vector<2x128xf32>
    %c0_5 = arith.constant 0 : index
    %c0_6 = arith.constant 0 : index
    %c0_7 = arith.constant 0 : index
    %4 = vector.load %arg4[%c0_5, %c0_6, %c0_7] : memref<2x12x128xf32, #tpu.memory_space<vmem>>, vector<1x12x128xf32>
    %5 = vector.shape_cast %4 : vector<1x12x128xf32> to vector<12x128xf32>
    %cst = arith.constant dense<0.000000e+00> : vector<128x128xf32>
    %6 = tpu.matmul %1, %5, %cst {dimension_numbers = #tpu.dot_dimension_numbers<[1], [0], [0], [1], [0, 0, 1, 1], [], []>} : vector<128x12xf32>, vector<12x128xf32>, vector<128x128xf32> -> vector<128x128xf32>
    %7 = vector.extract_strided_slice %3 {offsets = [0, 0], sizes = [1, 128], strides = [1, 1]} : vector<2x128xf32> to vector<1x128xf32>
    %8 = vector.broadcast %7 : vector<1x128xf32> to vector<128x128xf32>
    %9 = arith.addf %6, %8 : vector<128x128xf32>
    %c0_8 = arith.constant 0 : index
    %c0_9 = arith.constant 0 : index
    %10 = vector.load %arg6[%c0_8, %c0_9] : memref<8x128xf32, #tpu.memory_space<vmem>>, vector<1x128xf32>
    %11 = vector.broadcast %10 : vector<1x128xf32> to vector<128x128xf32>
    %12 = arith.addf %9, %11 : vector<128x128xf32>
    %cst_10 = arith.constant 1.000000e+02 : f32
    %13 = vector.broadcast %cst_10 : f32 to vector<128x128xf32>
    %14 = arith.mulf %13, %12 : vector<128x128xf32>
    %cst_11 = arith.constant 2.000000e+01 : f32
    %15 = vector.broadcast %cst_11 : f32 to vector<128x128xf32>
    %16 = arith.cmpf ogt, %14, %15 : vector<128x128xf32>
    %cst_12 = arith.constant 2.000000e+01 : f32
    %17 = vector.broadcast %cst_12 : f32 to vector<128x128xf32>
    %18 = arith.minimumf %14, %17 : vector<128x128xf32>
    %19 = math.exp %18 : vector<128x128xf32>
    %20 = math.log1p %19 : vector<128x128xf32>
    %cst_13 = arith.constant 1.000000e+02 : f32
    %21 = vector.broadcast %cst_13 : f32 to vector<128x128xf32>
    %22 = arith.divf %20, %21 : vector<128x128xf32>
    %23 = arith.select %16, %12, %22 : vector<128x128xi1>, vector<128x128xf32>
    %c0_14 = arith.constant 0 : index
    %c0_15 = arith.constant 0 : index
    %c0_16 = arith.constant 0 : index
    %24 = vector.load %arg5[%c0_14, %c0_15, %c0_16] : memref<7x128x128xf32, #tpu.memory_space<vmem>>, vector<1x128x128xf32>
    %25 = vector.shape_cast %24 : vector<1x128x128xf32> to vector<128x128xf32>
    %cst_17 = arith.constant dense<0.000000e+00> : vector<128x128xf32>
    %26 = tpu.matmul %23, %25, %cst_17 {dimension_numbers = #tpu.dot_dimension_numbers<[1], [0], [0], [1], [0, 0, 1, 1], [], []>} : vector<128x128xf32>, vector<128x128xf32>, vector<128x128xf32> -> vector<128x128xf32>
    %c1 = arith.constant 1 : index
    %c0_18 = arith.constant 0 : index
    %27 = vector.load %arg6[%c1, %c0_18] : memref<8x128xf32, #tpu.memory_space<vmem>>, vector<1x128xf32>
    %28 = vector.broadcast %27 : vector<1x128xf32> to vector<128x128xf32>
    %29 = arith.addf %26, %28 : vector<128x128xf32>
    %cst_19 = arith.constant 1.000000e+02 : f32
    %30 = vector.broadcast %cst_19 : f32 to vector<128x128xf32>
    %31 = arith.mulf %30, %29 : vector<128x128xf32>
    %cst_20 = arith.constant 2.000000e+01 : f32
    %32 = vector.broadcast %cst_20 : f32 to vector<128x128xf32>
    %33 = arith.cmpf ogt, %31, %32 : vector<128x128xf32>
    %cst_21 = arith.constant 2.000000e+01 : f32
    %34 = vector.broadcast %cst_21 : f32 to vector<128x128xf32>
    %35 = arith.minimumf %31, %34 : vector<128x128xf32>
    %36 = math.exp %35 : vector<128x128xf32>
    %37 = math.log1p %36 : vector<128x128xf32>
    %cst_22 = arith.constant 1.000000e+02 : f32
    %38 = vector.broadcast %cst_22 : f32 to vector<128x128xf32>
    %39 = arith.divf %37, %38 : vector<128x128xf32>
    %40 = arith.select %33, %29, %39 : vector<128x128xi1>, vector<128x128xf32>
    %c1_23 = arith.constant 1 : index
    %c0_24 = arith.constant 0 : index
    %c0_25 = arith.constant 0 : index
    %41 = vector.load %arg5[%c1_23, %c0_24, %c0_25] : memref<7x128x128xf32, #tpu.memory_space<vmem>>, vector<1x128x128xf32>
    %42 = vector.shape_cast %41 : vector<1x128x128xf32> to vector<128x128xf32>
    %cst_26 = arith.constant dense<0.000000e+00> : vector<128x128xf32>
    %43 = tpu.matmul %40, %42, %cst_26 {dimension_numbers = #tpu.dot_dimension_numbers<[1], [0], [0], [1], [0, 0, 1, 1], [], []>} : vector<128x128xf32>, vector<128x128xf32>, vector<128x128xf32> -> vector<128x128xf32>
    %c2 = arith.constant 2 : index
    %c0_27 = arith.constant 0 : index
    %44 = vector.load %arg6[%c2, %c0_27] : memref<8x128xf32, #tpu.memory_space<vmem>>, vector<1x128xf32>
    %45 = vector.broadcast %44 : vector<1x128xf32> to vector<128x128xf32>
    %46 = arith.addf %43, %45 : vector<128x128xf32>
    %cst_28 = arith.constant 1.000000e+02 : f32
    %47 = vector.broadcast %cst_28 : f32 to vector<128x128xf32>
    %48 = arith.mulf %47, %46 : vector<128x128xf32>
    %cst_29 = arith.constant 2.000000e+01 : f32
    %49 = vector.broadcast %cst_29 : f32 to vector<128x128xf32>
    %50 = arith.cmpf ogt, %48, %49 : vector<128x128xf32>
    %cst_30 = arith.constant 2.000000e+01 : f32
    %51 = vector.broadcast %cst_30 : f32 to vector<128x128xf32>
    %52 = arith.minimumf %48, %51 : vector<128x128xf32>
    %53 = math.exp %52 : vector<128x128xf32>
    %54 = math.log1p %53 : vector<128x128xf32>
    %cst_31 = arith.constant 1.000000e+02 : f32
    %55 = vector.broadcast %cst_31 : f32 to vector<128x128xf32>
    %56 = arith.divf %54, %55 : vector<128x128xf32>
    %57 = arith.select %50, %46, %56 : vector<128x128xi1>, vector<128x128xf32>
    %c2_32 = arith.constant 2 : index
    %c0_33 = arith.constant 0 : index
    %c0_34 = arith.constant 0 : index
    %58 = vector.load %arg5[%c2_32, %c0_33, %c0_34] : memref<7x128x128xf32, #tpu.memory_space<vmem>>, vector<1x128x128xf32>
    %59 = vector.shape_cast %58 : vector<1x128x128xf32> to vector<128x128xf32>
    %cst_35 = arith.constant dense<0.000000e+00> : vector<128x128xf32>
    %60 = tpu.matmul %57, %59, %cst_35 {dimension_numbers = #tpu.dot_dimension_numbers<[1], [0], [0], [1], [0, 0, 1, 1], [], []>} : vector<128x128xf32>, vector<128x128xf32>, vector<128x128xf32> -> vector<128x128xf32>
    %c3 = arith.constant 3 : index
    %c0_36 = arith.constant 0 : index
    %61 = vector.load %arg6[%c3, %c0_36] : memref<8x128xf32, #tpu.memory_space<vmem>>, vector<1x128xf32>
    %62 = vector.broadcast %61 : vector<1x128xf32> to vector<128x128xf32>
    %63 = arith.addf %60, %62 : vector<128x128xf32>
    %cst_37 = arith.constant 1.000000e+02 : f32
    %64 = vector.broadcast %cst_37 : f32 to vector<128x128xf32>
    %65 = arith.mulf %64, %63 : vector<128x128xf32>
    %cst_38 = arith.constant 2.000000e+01 : f32
    %66 = vector.broadcast %cst_38 : f32 to vector<128x128xf32>
    %67 = arith.cmpf ogt, %65, %66 : vector<128x128xf32>
    %cst_39 = arith.constant 2.000000e+01 : f32
    %68 = vector.broadcast %cst_39 : f32 to vector<128x128xf32>
    %69 = arith.minimumf %65, %68 : vector<128x128xf32>
    %70 = math.exp %69 : vector<128x128xf32>
    %71 = math.log1p %70 : vector<128x128xf32>
    %cst_40 = arith.constant 1.000000e+02 : f32
    %72 = vector.broadcast %cst_40 : f32 to vector<128x128xf32>
    %73 = arith.divf %71, %72 : vector<128x128xf32>
    %74 = arith.select %67, %63, %73 : vector<128x128xi1>, vector<128x128xf32>
    %c3_41 = arith.constant 3 : index
    %c0_42 = arith.constant 0 : index
    %c0_43 = arith.constant 0 : index
    %75 = vector.load %arg5[%c3_41, %c0_42, %c0_43] : memref<7x128x128xf32, #tpu.memory_space<vmem>>, vector<1x128x128xf32>
    %76 = vector.shape_cast %75 : vector<1x128x128xf32> to vector<128x128xf32>
    %cst_44 = arith.constant dense<0.000000e+00> : vector<128x128xf32>
    %77 = tpu.matmul %74, %76, %cst_44 {dimension_numbers = #tpu.dot_dimension_numbers<[1], [0], [0], [1], [0, 0, 1, 1], [], []>} : vector<128x128xf32>, vector<128x128xf32>, vector<128x128xf32> -> vector<128x128xf32>
    %c1_45 = arith.constant 1 : index
    %c0_46 = arith.constant 0 : index
    %c0_47 = arith.constant 0 : index
    %78 = vector.load %arg4[%c1_45, %c0_46, %c0_47] : memref<2x12x128xf32, #tpu.memory_space<vmem>>, vector<1x12x128xf32>
    %79 = vector.shape_cast %78 : vector<1x12x128xf32> to vector<12x128xf32>
    %cst_48 = arith.constant dense<0.000000e+00> : vector<128x128xf32>
    %80 = tpu.matmul %1, %79, %cst_48 {dimension_numbers = #tpu.dot_dimension_numbers<[1], [0], [0], [1], [0, 0, 1, 1], [], []>} : vector<128x12xf32>, vector<12x128xf32>, vector<128x128xf32> -> vector<128x128xf32>
    %81 = arith.addf %77, %80 : vector<128x128xf32>
    %82 = vector.extract_strided_slice %3 {offsets = [1, 0], sizes = [1, 128], strides = [1, 1]} : vector<2x128xf32> to vector<1x128xf32>
    %83 = vector.broadcast %82 : vector<1x128xf32> to vector<128x128xf32>
    %84 = arith.addf %81, %83 : vector<128x128xf32>
    %c4 = arith.constant 4 : index
    %c0_49 = arith.constant 0 : index
    %85 = vector.load %arg6[%c4, %c0_49] : memref<8x128xf32, #tpu.memory_space<vmem>>, vector<1x128xf32>
    %86 = vector.broadcast %85 : vector<1x128xf32> to vector<128x128xf32>
    %87 = arith.addf %84, %86 : vector<128x128xf32>
    %cst_50 = arith.constant 1.000000e+02 : f32
    %88 = vector.broadcast %cst_50 : f32 to vector<128x128xf32>
    %89 = arith.mulf %88, %87 : vector<128x128xf32>
    %cst_51 = arith.constant 2.000000e+01 : f32
    %90 = vector.broadcast %cst_51 : f32 to vector<128x128xf32>
    %91 = arith.cmpf ogt, %89, %90 : vector<128x128xf32>
    %cst_52 = arith.constant 2.000000e+01 : f32
    %92 = vector.broadcast %cst_52 : f32 to vector<128x128xf32>
    %93 = arith.minimumf %89, %92 : vector<128x128xf32>
    %94 = math.exp %93 : vector<128x128xf32>
    %95 = math.log1p %94 : vector<128x128xf32>
    %cst_53 = arith.constant 1.000000e+02 : f32
    %96 = vector.broadcast %cst_53 : f32 to vector<128x128xf32>
    %97 = arith.divf %95, %96 : vector<128x128xf32>
    %98 = arith.select %91, %87, %97 : vector<128x128xi1>, vector<128x128xf32>
    %c4_54 = arith.constant 4 : index
    %c0_55 = arith.constant 0 : index
    %c0_56 = arith.constant 0 : index
    %99 = vector.load %arg5[%c4_54, %c0_55, %c0_56] : memref<7x128x128xf32, #tpu.memory_space<vmem>>, vector<1x128x128xf32>
    %100 = vector.shape_cast %99 : vector<1x128x128xf32> to vector<128x128xf32>
    %cst_57 = arith.constant dense<0.000000e+00> : vector<128x128xf32>
    %101 = tpu.matmul %98, %100, %cst_57 {dimension_numbers = #tpu.dot_dimension_numbers<[1], [0], [0], [1], [0, 0, 1, 1], [], []>} : vector<128x128xf32>, vector<128x128xf32>, vector<128x128xf32> -> vector<128x128xf32>
    %c5 = arith.constant 5 : index
    %c0_58 = arith.constant 0 : index
    %102 = vector.load %arg6[%c5, %c0_58] : memref<8x128xf32, #tpu.memory_space<vmem>>, vector<1x128xf32>
    %103 = vector.broadcast %102 : vector<1x128xf32> to vector<128x128xf32>
    %104 = arith.addf %101, %103 : vector<128x128xf32>
    %cst_59 = arith.constant 1.000000e+02 : f32
    %105 = vector.broadcast %cst_59 : f32 to vector<128x128xf32>
    %106 = arith.mulf %105, %104 : vector<128x128xf32>
    %cst_60 = arith.constant 2.000000e+01 : f32
    %107 = vector.broadcast %cst_60 : f32 to vector<128x128xf32>
    %108 = arith.cmpf ogt, %106, %107 : vector<128x128xf32>
    %cst_61 = arith.constant 2.000000e+01 : f32
    %109 = vector.broadcast %cst_61 : f32 to vector<128x128xf32>
    %110 = arith.minimumf %106, %109 : vector<128x128xf32>
    %111 = math.exp %110 : vector<128x128xf32>
    %112 = math.log1p %111 : vector<128x128xf32>
    %cst_62 = arith.constant 1.000000e+02 : f32
    %113 = vector.broadcast %cst_62 : f32 to vector<128x128xf32>
    %114 = arith.divf %112, %113 : vector<128x128xf32>
    %115 = arith.select %108, %104, %114 : vector<128x128xi1>, vector<128x128xf32>
    %c5_63 = arith.constant 5 : index
    %c0_64 = arith.constant 0 : index
    %c0_65 = arith.constant 0 : index
    %116 = vector.load %arg5[%c5_63, %c0_64, %c0_65] : memref<7x128x128xf32, #tpu.memory_space<vmem>>, vector<1x128x128xf32>
    %117 = vector.shape_cast %116 : vector<1x128x128xf32> to vector<128x128xf32>
    %cst_66 = arith.constant dense<0.000000e+00> : vector<128x128xf32>
    %118 = tpu.matmul %115, %117, %cst_66 {dimension_numbers = #tpu.dot_dimension_numbers<[1], [0], [0], [1], [0, 0, 1, 1], [], []>} : vector<128x128xf32>, vector<128x128xf32>, vector<128x128xf32> -> vector<128x128xf32>
    %c6 = arith.constant 6 : index
    %c0_67 = arith.constant 0 : index
    %119 = vector.load %arg6[%c6, %c0_67] : memref<8x128xf32, #tpu.memory_space<vmem>>, vector<1x128xf32>
    %120 = vector.broadcast %119 : vector<1x128xf32> to vector<128x128xf32>
    %121 = arith.addf %118, %120 : vector<128x128xf32>
    %cst_68 = arith.constant 1.000000e+02 : f32
    %122 = vector.broadcast %cst_68 : f32 to vector<128x128xf32>
    %123 = arith.mulf %122, %121 : vector<128x128xf32>
    %cst_69 = arith.constant 2.000000e+01 : f32
    %124 = vector.broadcast %cst_69 : f32 to vector<128x128xf32>
    %125 = arith.cmpf ogt, %123, %124 : vector<128x128xf32>
    %cst_70 = arith.constant 2.000000e+01 : f32
    %126 = vector.broadcast %cst_70 : f32 to vector<128x128xf32>
    %127 = arith.minimumf %123, %126 : vector<128x128xf32>
    %128 = math.exp %127 : vector<128x128xf32>
    %129 = math.log1p %128 : vector<128x128xf32>
    %cst_71 = arith.constant 1.000000e+02 : f32
    %130 = vector.broadcast %cst_71 : f32 to vector<128x128xf32>
    %131 = arith.divf %129, %130 : vector<128x128xf32>
    %132 = arith.select %125, %121, %131 : vector<128x128xi1>, vector<128x128xf32>
    %c6_72 = arith.constant 6 : index
    %c0_73 = arith.constant 0 : index
    %c0_74 = arith.constant 0 : index
    %133 = vector.load %arg5[%c6_72, %c0_73, %c0_74] : memref<7x128x128xf32, #tpu.memory_space<vmem>>, vector<1x128x128xf32>
    %134 = vector.shape_cast %133 : vector<1x128x128xf32> to vector<128x128xf32>
    %cst_75 = arith.constant dense<0.000000e+00> : vector<128x128xf32>
    %135 = tpu.matmul %132, %134, %cst_75 {dimension_numbers = #tpu.dot_dimension_numbers<[1], [0], [0], [1], [0, 0, 1, 1], [], []>} : vector<128x128xf32>, vector<128x128xf32>, vector<128x128xf32> -> vector<128x128xf32>
    %c7 = arith.constant 7 : index
    %c0_76 = arith.constant 0 : index
    %136 = vector.load %arg6[%c7, %c0_76] : memref<8x128xf32, #tpu.memory_space<vmem>>, vector<1x128xf32>
    %137 = vector.broadcast %136 : vector<1x128xf32> to vector<128x128xf32>
    %138 = arith.addf %135, %137 : vector<128x128xf32>
    %cst_77 = arith.constant 1.000000e+02 : f32
    %139 = vector.broadcast %cst_77 : f32 to vector<128x128xf32>
    %140 = arith.mulf %139, %138 : vector<128x128xf32>
    %cst_78 = arith.constant 2.000000e+01 : f32
    %141 = vector.broadcast %cst_78 : f32 to vector<128x128xf32>
    %142 = arith.cmpf ogt, %140, %141 : vector<128x128xf32>
    %cst_79 = arith.constant 2.000000e+01 : f32
    %143 = vector.broadcast %cst_79 : f32 to vector<128x128xf32>
    %144 = arith.minimumf %140, %143 : vector<128x128xf32>
    %145 = math.exp %144 : vector<128x128xf32>
    %146 = math.log1p %145 : vector<128x128xf32>
    %cst_80 = arith.constant 1.000000e+02 : f32
    %147 = vector.broadcast %cst_80 : f32 to vector<128x128xf32>
    %148 = arith.divf %146, %147 : vector<128x128xf32>
    %149 = arith.select %142, %138, %148 : vector<128x128xi1>, vector<128x128xf32>
    %c0_81 = arith.constant 0 : index
    %c0_82 = arith.constant 0 : index
    %150 = vector.load %arg7[%c0_81, %c0_82] : memref<128x12xf32, #tpu.memory_space<vmem>>, vector<128x12xf32>
    %cst_83 = arith.constant dense<0.000000e+00> : vector<128x12xf32>
    %151 = tpu.matmul %149, %150, %cst_83 {dimension_numbers = #tpu.dot_dimension_numbers<[1], [0], [0], [1], [0, 0, 1, 1], [], []>} : vector<128x128xf32>, vector<128x12xf32>, vector<128x12xf32> -> vector<128x12xf32>
    %c0_84 = arith.constant 0 : index
    %c0_85 = arith.constant 0 : index
    %152 = vector.load %arg8[%c0_84, %c0_85] : memref<1x12xf32, #tpu.memory_space<vmem>>, vector<1x12xf32>
    %153 = vector.broadcast %152 : vector<1x12xf32> to vector<128x12xf32>
    %154 = arith.addf %151, %153 : vector<128x12xf32>
    %c0_86 = arith.constant 0 : index
    %c0_87 = arith.constant 0 : index
    %c0_88 = arith.constant 0 : index
    %155 = vector.load %arg9[%c0_86, %c0_87, %c0_88] : memref<1x128x12xf32, #tpu.memory_space<vmem>>, vector<1x128x12xf32>
    %156 = vector.shape_cast %155 : vector<1x128x12xf32> to vector<128x12xf32>
    %157 = vector.shape_cast %154 : vector<128x12xf32> to vector<1x128x12xf32>
    tpu.vector_store %arg9[%c0_86, %c0_87, %c0_88], %157 {strides = array<i32>} : memref<1x128x12xf32, #tpu.memory_space<vmem>>, vector<1x128x12xf32>,
    return
  }
  func.func @transform_0(%arg0: i32, %arg1: i32) -> (i32, i32, i32) {
    %c0_i32 = arith.constant 0 : i32
    %c0_i32_0 = arith.constant 0 : i32
    return %arg0, %arg1, %c0_i32 : i32, i32, i32
  }
  func.func @transform_1(%arg0: i32, %arg1: i32) -> (i32, i32, i32) {
    %c0_i32 = arith.constant 0 : i32
    %c0_i32_0 = arith.constant 0 : i32
    %c0_i32_1 = arith.constant 0 : i32
    return %arg0, %c0_i32, %c0_i32_0 : i32, i32, i32
  }
  func.func @transform_2(%arg0: i32, %arg1: i32) -> (i32, i32, i32) {
    %c0_i32 = arith.constant 0 : i32
    %c0_i32_0 = arith.constant 0 : i32
    %c0_i32_1 = arith.constant 0 : i32
    %c0_i32_2 = arith.constant 0 : i32
    return %c0_i32, %c0_i32_0, %c0_i32_1 : i32, i32, i32
  }
  func.func @transform_3(%arg0: i32, %arg1: i32) -> (i32, i32, i32) {
    %c0_i32 = arith.constant 0 : i32
    %c0_i32_0 = arith.constant 0 : i32
    %c0_i32_1 = arith.constant 0 : i32
    %c0_i32_2 = arith.constant 0 : i32
    return %c0_i32, %c0_i32_0, %c0_i32_1 : i32, i32, i32
  }
  func.func @transform_4(%arg0: i32, %arg1: i32) -> (i32, i32) {
    %c0_i32 = arith.constant 0 : i32
    %c0_i32_0 = arith.constant 0 : i32
    %c0_i32_1 = arith.constant 0 : i32
    return %c0_i32, %c0_i32_0 : i32, i32
  }
  func.func @transform_5(%arg0: i32, %arg1: i32) -> (i32, i32) {
    %c0_i32 = arith.constant 0 : i32
    %c0_i32_0 = arith.constant 0 : i32
    %c0_i32_1 = arith.constant 0 : i32
    return %c0_i32, %c0_i32_0 : i32, i32
  }
  func.func @transform_6(%arg0: i32, %arg1: i32) -> (i32, i32) {
    %c0_i32 = arith.constant 0 : i32
    %c0_i32_0 = arith.constant 0 : i32
    %c0_i32_1 = arith.constant 0 : i32
    return %c0_i32, %c0_i32_0 : i32, i32
  }
  func.func @transform_7(%arg0: i32, %arg1: i32) -> (i32, i32, i32) {
    %c0_i32 = arith.constant 0 : i32
    %c0_i32_0 = arith.constant 0 : i32
    return %arg0, %arg1, %c0_i32 : i32, i32, i32
  }
}

</mosaic_0001>

<llo_original>
// kernel: tpu_custom_call.1
$region0: #{tpu_custom_call.1}
  #allocation0 [shape = 'u32[]', space=smem, size = 0x4, offset = 0x4, fixed_abs, tag = 'smem constant byte address 0x4 - core index']
  #allocation1 [shape = 'u32[144,128]{1,0:T(1,128)}', space=vmem, size = 0x12000, scoped, tag = 'internal scratch']
  %s0 = inlined_call_operand.vmem [shape: f32[2,256,12], index: 0, kind: input, shape index: {}]
  %s1 = inlined_call_operand.vmem [shape: f32[2,2,128], index: 1, kind: input, shape index: {}]
  %s2 = inlined_call_operand.vmem [shape: f32[2,12,128], index: 2, kind: input, shape index: {}]
  %s3 = inlined_call_operand.hbm [shape: f32[7,128,128], index: 3, kind: input, shape index: {}]
  %s4 = inlined_call_operand.vmem [shape: f32[8,128], index: 4, kind: input, shape index: {}]
  %s5 = inlined_call_operand.vmem [shape: f32[128,12], index: 5, kind: input, shape index: {}]
  %s6 = inlined_call_operand.vmem [shape: f32[1,12], index: 6, kind: input, shape index: {}]
  %s7 = inlined_call_operand.vmem [shape: f32[2,256,12], index: 7, kind: output, shape index: {}]
  %s8 = sld [smem:[#allocation0]]
  $region65: #{tpu_custom_call.1} parent=0
    _
  %s10 = ssub.s32 1, %s8
  %s11 = scalar_select 0, %s10, %s8
  $region1: #{tpu_custom_call.1} parent=0
    #allocation2 [shape = 'u8[458752]{0}', space=vmem, size = 0x70000, scoped, tag = 'input window, operand 3, single buffered']
    #allocation3 [shape = 's32[2]{0}', space=sflag, size = 0x8, scoped, tag = 'scoped memory for tpu_custom_call.1']
    %12 = vsyncpa [#allocation3], 0
    loop: start=0, step=1, limit=6
    $region2: #{tpu_custom_call.1} parent=1 // loop_pre_header
      _
    $region3: #{tpu_custom_call.1} parent=1 // loop_header
      %s14 = sphi 0, %s18
      %p15 = scmp.ge.s32.totalorder %s14, 6
      %s21 = sphi 0, %s33
      %s22 = sphi 0, %s29
      %s23 = sphi 0, %s21
      %s24 = sphi 0, %s22
      %s25 = sphi 0, %s23
      %s26 = sphi 0, %s24
      %s38 = sphi 0, %s40
      %s41 = sphi 0, %s38
      %s42 = sphi 0, %s41
      %s58 = sphi 0, %s42
      %s64 = sphi 0, %s66
      %s67 = sphi 0, %s64
      %s68 = sphi 0, %s67
      %s84 = sphi 0, %s68
      %s88 = sphi 0, %s88
      %s90 = sphi 0, %s88
      %s91 = sphi 0, %s90
      %s105 = sphi 0, %s91
      %s109 = sphi 0, %s109
      %s111 = sphi 0, %s109
      %s112 = sphi 0, %s111
      %s126 = sphi 0, %s112
      %s130 = sphi 0, %s130
      %s132 = sphi 0, %s130
      %s133 = sphi 0, %s132
      %s147 = sphi 0, %s133
      %s151 = sphi 0, %s151
      %s153 = sphi 0, %s151
      %s154 = sphi 0, %s153
      %s168 = sphi 0, %s154
      %s172 = sphi 0, %s172
      %s174 = sphi 0, %s172
      %s175 = sphi 0, %s174
      %s189 = sphi 0, %s175
      %s197 = sphi 0, %s199
      %s200 = sphi 0, %s197
      %s201 = sphi 0, %s200
      %s217 = sphi 0, %s201
    $region4: #{tpu_custom_call.1} parent=1 // loop_header_branch
      %17 = sbr.rel (%p15) target = $region8
    $region5: #{tpu_custom_call.1} parent=1 // loop_body
      %s19 = ssub.s32 %s14, 1
      %s20 = ssub.s32 %s14, 2
      %s27 = sadd.s32 1, %s22
      %p28 = scmp.ge.s32.totalorder %s27, 2
      %s29 = scalar_select %p28, 0, %s27
      %s30 = sadd.s32 1, %s21
      %s31 = scalar_select %p28, %s30, %s21
      %p32 = scmp.ge.s32.totalorder %s31, 2
      %s33 = scalar_select %p32, 0, %s31
      %s34 = ssub.s32 %s21, %s33
      %s35 = ssub.s32 %s22, %s29
      %s36 = sor.u32 %s34, %s35
      %p37 = scmp.eq.s32.totalorder %s36, 0
      %s39 = sadd.s32 %s38, 1
      %s40 = scalar_select %p37, %s38, %s39
      %p43 = pneg %p37
      %p44 = scmp.eq.s32.totalorder %s14, 3
      %p45 = por %p43, %p44
      %p46 = scmp.ne.s32.totalorder %s38, %s41
      %p47 = scmp.eq.s32.totalorder %s14, 0
      %p48 = por %p46, %p47
      %p49 = scmp.ne.s32.totalorder %s38, %s41
      %p50 = scmp.eq.s32.totalorder %s19, 3
      %p51 = por %p49, %p50
      %p52 = scmp.ne.s32.totalorder %s41, %s42
      %p53 = scmp.eq.s32.totalorder %s19, 0
      %p54 = por %p52, %p53
      %p55 = scmp.ne.s32.totalorder %s41, %s42
      %p56 = scmp.eq.s32.totalorder %s20, 3
      %p57 = por %p55, %p56
      %p59 = scmp.ne.s32.totalorder %s42, %s58
      %p60 = scmp.eq.s32.totalorder %s20, 0
      %p61 = por %p59, %p60
      %s62 = ssub.s32 %s21, %s33
      %p63 = scmp.eq.s32.totalorder %s62, 0
      %s65 = sadd.s32 %s64, 1
      %s66 = scalar_select %p63, %s64, %s65
      %p69 = pneg %p63
      %p70 = scmp.eq.s32.totalorder %s14, 3
      %p71 = por %p69, %p70
      %p72 = scmp.ne.s32.totalorder %s64, %s67
      %p73 = scmp.eq.s32.totalorder %s14, 0
      %p74 = por %p72, %p73
      %p75 = scmp.ne.s32.totalorder %s64, %s67
      %p76 = scmp.eq.s32.totalorder %s19, 3
      %p77 = por %p75, %p76
      %p78 = scmp.ne.s32.totalorder %s67, %s68
      %p79 = scmp.eq.s32.totalorder %s19, 0
      %p80 = por %p78, %p79
      %p81 = scmp.ne.s32.totalorder %s67, %s68
      %p82 = scmp.eq.s32.totalorder %s20, 3
      %p83 = por %p81, %p82
      %p85 = scmp.ne.s32.totalorder %s68, %s84
      %p86 = scmp.eq.s32.totalorder %s20, 0
      %p87 = por %p85, %p86
      %s89 = sadd.s32 %s88, 1
      %p92 = scmp.eq.s32.totalorder %s14, 3
      %p93 = scmp.ne.s32.totalorder %s88, %s90
      %p94 = scmp.eq.s32.totalorder %s14, 0
      %p95 = por %p93, %p94
      %p96 = scmp.ne.s32.totalorder %s88, %s90
      %p97 = scmp.eq.s32.totalorder %s19, 3
      %p98 = por %p96, %p97
      %p99 = scmp.ne.s32.totalorder %s90, %s91
      %p100 = scmp.eq.s32.totalorder %s19, 0
      %p101 = por %p99, %p100
      %p102 = scmp.ne.s32.totalorder %s90, %s91
      %p103 = scmp.eq.s32.totalorder %s20, 3
      %p104 = por %p102, %p103
      %p106 = scmp.ne.s32.totalorder %s91, %s105
      %p107 = scmp.eq.s32.totalorder %s20, 0
      %p108 = por %p106, %p107
      %s110 = sadd.s32 %s109, 1
      %p113 = scmp.eq.s32.totalorder %s14, 3
      %p114 = scmp.ne.s32.totalorder %s109, %s111
      %p115 = scmp.eq.s32.totalorder %s14, 0
      %p116 = por %p114, %p115
      %p117 = scmp.ne.s32.totalorder %s109, %s111
      %p118 = scmp.eq.s32.totalorder %s19, 3
      %p119 = por %p117, %p118
      %p120 = scmp.ne.s32.totalorder %s111, %s112
      %p121 = scmp.eq.s32.totalorder %s19, 0
      %p122 = por %p120, %p121
      %p123 = scmp.ne.s32.totalorder %s111, %s112
      %p124 = scmp.eq.s32.totalorder %s20, 3
      %p125 = por %p123, %p124
      %p127 = scmp.ne.s32.totalorder %s112, %s126
      %p128 = scmp.eq.s32.totalorder %s20, 0
      %p129 = por %p127, %p128
      %s131 = sadd.s32 %s130, 1
      %p134 = scmp.eq.s32.totalorder %s14, 3
      %p135 = scmp.ne.s32.totalorder %s130, %s132
      %p136 = scmp.eq.s32.totalorder %s14, 0
      %p137 = por %p135, %p136
      %p138 = scmp.ne.s32.totalorder %s130, %s132
      %p139 = scmp.eq.s32.totalorder %s19, 3
      %p140 = por %p138, %p139
      %p141 = scmp.ne.s32.totalorder %s132, %s133
      %p142 = scmp.eq.s32.totalorder %s19, 0
      %p143 = por %p141, %p142
      %p144 = scmp.ne.s32.totalorder %s132, %s133
      %p145 = scmp.eq.s32.totalorder %s20, 3
      %p146 = por %p144, %p145
      %p148 = scmp.ne.s32.totalorder %s133, %s147
      %p149 = scmp.eq.s32.totalorder %s20, 0
      %p150 = por %p148, %p149
      %s152 = sadd.s32 %s151, 1
      %p155 = scmp.eq.s32.totalorder %s14, 3
      %p156 = scmp.ne.s32.totalorder %s151, %s153
      %p157 = scmp.eq.s32.totalorder %s14, 0
      %p158 = por %p156, %p157
      %p159 = scmp.ne.s32.totalorder %s151, %s153
      %p160 = scmp.eq.s32.totalorder %s19, 3
      %p161 = por %p159, %p160
      %p162 = scmp.ne.s32.totalorder %s153, %s154
      %p163 = scmp.eq.s32.totalorder %s19, 0
      %p164 = por %p162, %p163
      %p165 = scmp.ne.s32.totalorder %s153, %s154
      %p166 = scmp.eq.s32.totalorder %s20, 3
      %p167 = por %p165, %p166
      %p169 = scmp.ne.s32.totalorder %s154, %s168
      %p170 = scmp.eq.s32.totalorder %s20, 0
      %p171 = por %p169, %p170
      %s173 = sadd.s32 %s172, 1
      %p176 = scmp.eq.s32.totalorder %s14, 3
      %p177 = scmp.ne.s32.totalorder %s172, %s174
      %p178 = scmp.eq.s32.totalorder %s14, 0
      %p179 = por %p177, %p178
      %p180 = scmp.ne.s32.totalorder %s172, %s174
      %p181 = scmp.eq.s32.totalorder %s19, 3
      %p182 = por %p180, %p181
      %p183 = scmp.ne.s32.totalorder %s174, %s175
      %p184 = scmp.eq.s32.totalorder %s19, 0
      %p185 = por %p183, %p184
      %p186 = scmp.ne.s32.totalorder %s174, %s175
      %p187 = scmp.eq.s32.totalorder %s20, 3
      %p188 = por %p186, %p187
      %p190 = scmp.ne.s32.totalorder %s175, %s189
      %p191 = scmp.eq.s32.totalorder %s20, 0
      %p192 = por %p190, %p191
      %s193 = ssub.s32 %s21, %s33
      %s194 = ssub.s32 %s22, %s29
      %s195 = sor.u32 %s193, %s194
      %p196 = scmp.eq.s32.totalorder %s195, 0
      %s198 = sadd.s32 %s197, 1
      %s199 = scalar_select %p196, %s197, %s198
      %p202 = pneg %p196
      %p203 = scmp.eq.s32.totalorder %s14, 3
      %p204 = por %p202, %p203
      %p205 = scmp.ne.s32.totalorder %s197, %s200
      %p206 = scmp.eq.s32.totalorder %s14, 0
      %p207 = por %p205, %p206
      %p208 = scmp.ne.s32.totalorder %s197, %s200
      %p209 = scmp.eq.s32.totalorder %s19, 3
      %p210 = por %p208, %p209
      %p211 = scmp.ne.s32.totalorder %s200, %s201
      %p212 = scmp.eq.s32.totalorder %s19, 0
      %p213 = por %p211, %p212
      %p214 = scmp.ne.s32.totalorder %s200, %s201
      %p215 = scmp.eq.s32.totalorder %s20, 3
      %p216 = por %p214, %p215
      %p218 = scmp.ne.s32.totalorder %s201, %s217
      %p219 = scmp.eq.s32.totalorder %s20, 0
      %p220 = por %p218, %p219
      %p221 = scmp.le.s32.totalorder 1, %s14
      %p222 = scmp.lt.s32.totalorder %s14, 5
      %p223 = pnand %p221, %p222
      %p224 = pneg %p223
      // Predicated region
      $region9: #{tpu_custom_call.1} parent=5 // pred_check
        _
      $region10: #{tpu_custom_call.1} parent=5 // pred_check_branch
        %226 = sbr.rel (%p223) target = $region12
      $region11: #{tpu_custom_call.1} parent=5 // pred_region
        %s227 = ssub.s32 %s14, 1
        // Predicated region
        $region13: #{tpu_custom_call.1} parent=11 // pred_check
          %p228 = pneg %p101
        $region14: #{tpu_custom_call.1} parent=11 // pred_check_branch
          %230 = sbr.rel (%p228) target = $region16
        $region15: #{tpu_custom_call.1} parent=11 // pred_region
          _
        $region16: #{tpu_custom_call.1} parent=11 // pred_fallthru
          _
        // Predicated region
        $region17: #{tpu_custom_call.1} parent=11 // pred_check
          %p231 = pneg %p122
        $region18: #{tpu_custom_call.1} parent=11 // pred_check_branch
          %233 = sbr.rel (%p231) target = $region20
        $region19: #{tpu_custom_call.1} parent=11 // pred_region
          %s235 = ssub.s32 14336, 14336
          %236 = vsyncadd [#allocation3], %s235
          %s237 = sshll.u32 [#allocation2], 4
          %s238 = int_to_ptr.vmem [resolvable:$true] %s237
          %243 = dma.hbm_to_vmem [thread:$0]  %s3, 14336, %s238, [#allocation3], 128, 128, 8
        $region20: #{tpu_custom_call.1} parent=11 // pred_fallthru
          _
        // Predicated region
        $region21: #{tpu_custom_call.1} parent=11 // pred_check
          %p244 = pneg %p143
        $region22: #{tpu_custom_call.1} parent=11 // pred_check_branch
          %246 = sbr.rel (%p244) target = $region24
        $region23: #{tpu_custom_call.1} parent=11 // pred_region
          _
        $region24: #{tpu_custom_call.1} parent=11 // pred_fallthru
          _
        // Predicated region
        $region25: #{tpu_custom_call.1} parent=11 // pred_check
          %p247 = pneg %p164
        $region26: #{tpu_custom_call.1} parent=11 // pred_check_branch
          %249 = sbr.rel (%p247) target = $region28
        $region27: #{tpu_custom_call.1} parent=11 // pred_region
          _
        $region28: #{tpu_custom_call.1} parent=11 // pred_fallthru
          _
        // Predicated region
        $region29: #{tpu_custom_call.1} parent=11 // pred_check
          %p250 = pneg %p185
        $region30: #{tpu_custom_call.1} parent=11 // pred_check_branch
          %252 = sbr.rel (%p250) target = $region32
        $region31: #{tpu_custom_call.1} parent=11 // pred_region
          _
        $region32: #{tpu_custom_call.1} parent=11 // pred_fallthru
          _
      $region12: #{tpu_custom_call.1} parent=5 // pred_fallthru
        _
      %p253 = scmp.lt.s32.totalorder %s14, 4
      // Predicated region
      $region33: #{tpu_custom_call.1} parent=5 // pred_check
        %p254 = pneg %p253
      $region34: #{tpu_custom_call.1} parent=5 // pred_check_branch
        %256 = sbr.rel (%p254) target = $region36
      $region35: #{tpu_custom_call.1} parent=5 // pred_region
        // Predicated region
        $region37: #{tpu_custom_call.1} parent=35 // pred_check
          %p257 = pneg %p48
        $region38: #{tpu_custom_call.1} parent=35 // pred_check_branch
          %259 = sbr.rel (%p257) target = $region40
        $region39: #{tpu_custom_call.1} parent=35 // pred_region
          %s260 = smul.u32 16, %s22
          %p261 = scmp.lt.s32.totalorder %s21, 1
          %s262 = scalar_select %p261, %s21, 1
          %p263 = scmp.lt.s32.totalorder %s260, 31
          %s264 = scalar_select %p263, %s260, 31
          %s265 = smul.addr %s262, 32
          %s266 = sadd.s32 %s264, %s265
          %s267 = smul.addr %s266, 8
          %s268 = scalar_lea.vmem %s0, %s267
          %s269 = smul.u32 16, %s22
        $region40: #{tpu_custom_call.1} parent=35 // pred_fallthru
          _
        // Predicated region
        $region41: #{tpu_custom_call.1} parent=35 // pred_check
          %p270 = pneg %p74
        $region42: #{tpu_custom_call.1} parent=35 // pred_check_branch
          %272 = sbr.rel (%p270) target = $region44
        $region43: #{tpu_custom_call.1} parent=35 // pred_region
          %p273 = scmp.lt.s32.totalorder %s21, 1
          %s274 = scalar_select %p273, %s21, 1
          %s275 = smul.addr %s274, 2
          %s276 = scalar_lea.vmem %s1, %s275
        $region44: #{tpu_custom_call.1} parent=35 // pred_fallthru
          _
      $region36: #{tpu_custom_call.1} parent=5 // pred_fallthru
        _
      %p277 = scmp.le.s32.totalorder 1, %s14
      %p278 = scmp.lt.s32.totalorder %s14, 5
      %p279 = pnand %p277, %p278
      %p280 = pneg %p279
      // Predicated region
      $region45: #{tpu_custom_call.1} parent=5 // pred_check
        _
      $region46: #{tpu_custom_call.1} parent=5 // pred_check_branch
        %282 = sbr.rel (%p279) target = $region48
      $region47: #{tpu_custom_call.1} parent=5 // pred_region
        %s283 = ssub.s32 %s14, 1
        // Predicated region
        $region49: #{tpu_custom_call.1} parent=47 // pred_check
          %p284 = pneg %p122
        $region50: #{tpu_custom_call.1} parent=47 // pred_check_branch
          %286 = sbr.rel (%p284) target = $region52
        $region51: #{tpu_custom_call.1} parent=47 // pred_region
          %287 = dma.done [#allocation3], 14336
        $region52: #{tpu_custom_call.1} parent=47 // pred_fallthru
          _
        %s288 = smul.u32 16, %s24
        %p289 = scmp.lt.s32.totalorder %s23, 1
        %s290 = scalar_select %p289, %s23, 1
        %p291 = scmp.lt.s32.totalorder %s288, 31
        %s292 = scalar_select %p291, %s288, 31
        %s293 = smul.addr %s290, 32
        %s294 = sadd.s32 %s292, %s293
        %s295 = smul.addr %s294, 8
        %s296 = scalar_lea.vmem %s0, %s295
        %p297 = pneg %p54
        %p298 = pneg %p51
        %p299 = scmp.lt.s32.totalorder %s23, 1
        %s300 = scalar_select %p299, %s23, 1
        %s301 = smul.addr %s300, 2
        %s302 = scalar_lea.vmem %s1, %s301
        %p303 = pneg %p80
        %p304 = pneg %p77
        %p305 = pneg %p101
        %p306 = pneg %p98
        %p307 = pneg %p122
        %p308 = pneg %p119
        %p309 = pneg %p143
        %p310 = pneg %p140
        %p311 = pneg %p164
        %p312 = pneg %p161
        %p313 = pneg %p185
        %p314 = pneg %p182
        %p315 = pneg %p213
        %p316 = pneg %p210
        %s317 = smul.u32 16, %s24
        %p318 = scmp.lt.s32.totalorder %s23, 1
        %s319 = scalar_select %p318, %s23, 1
        %p320 = scmp.lt.s32.totalorder %s317, 31
        %s321 = scalar_select %p320, %s317, 31
        %s322 = smul.addr %s319, 32
        %s323 = sadd.s32 %s321, %s322
        %s324 = smul.addr %s323, 8
        %s325 = scalar_lea.vmem %s7, %s324
        %s326 = smul.u32 16, %s24
        %p327 = scmp.lt.s32.totalorder %s23, 1
        %s328 = scalar_select %p327, %s23, 1
        %p329 = scmp.lt.s32.totalorder %s326, 31
        %s330 = scalar_select %p329, %s326, 31
        %s331 = smul.addr %s328, 32
        %s332 = sadd.s32 %s330, %s331
        %s333 = smul.addr %s332, 8
        %s334 = scalar_lea.vmem %s0, %s333
        %s335 = smul.u32 16, %s24
        %p336 = scmp.lt.s32.totalorder %s23, 1
        %s337 = scalar_select %p336, %s23, 1
        %s338 = smul.addr %s337, 2
        %s339 = scalar_lea.vmem %s1, %s338
        %s340 = smul.u32 16, %s24
        %p341 = scmp.lt.s32.totalorder %s23, 1
        %s342 = scalar_select %p341, %s23, 1
        %p343 = scmp.lt.s32.totalorder %s340, 31
        %s344 = scalar_select %p343, %s340, 31
        %s345 = smul.addr %s342, 32
        %s346 = sadd.s32 %s344, %s345
        %s347 = smul.addr %s346, 8
        %s348 = scalar_lea.vmem %s7, %s347
        %s349 = smul.u32 16, %s24
        %v350 = vld [vmem:[%s334] sm:$0xff]
        %v351 = vld [vmem:[%s334 + $0x8] sm:$0xff]
        %v352 = vld [vmem:[%s334 + $0x10] sm:$0xff]
        %v353 = vld [vmem:[%s334 + $0x18] sm:$0xff]
        %v354 = vld [vmem:[%s334 + $0x20] sm:$0xff]
        %v355 = vld [vmem:[%s334 + $0x28] sm:$0xff]
        %v356 = vld [vmem:[%s334 + $0x30] sm:$0xff]
        %v357 = vld [vmem:[%s334 + $0x38] sm:$0xff]
        %v358 = vld [vmem:[%s334 + $0x40] sm:$0xff]
        %v359 = vld [vmem:[%s334 + $0x48] sm:$0xff]
        %v360 = vld [vmem:[%s334 + $0x50] sm:$0xff]
        %v361 = vld [vmem:[%s334 + $0x58] sm:$0xff]
        %v362 = vld [vmem:[%s334 + $0x60] sm:$0xff]
        %v363 = vld [vmem:[%s334 + $0x68] sm:$0xff]
        %v364 = vld [vmem:[%s334 + $0x70] sm:$0xff]
        %v365 = vld [vmem:[%s334 + $0x78] sm:$0xff]
        %v366 = vld [vmem:[%s339] sm:$0x3]
        %v367 = vld [vmem:[%s2] sm:$0xff]
        %v368 = vld [vmem:[%s2 + $0x8] sm:$0xf]
        %v369 = vlaneseq
        %v370 = vshrl.u32 %v369, 7
        %v371 = vsub.s32 0, %v370
        %v372 = vrot.slane %v366, %v371
        %vm373 = vcmask 97280
        %v375 = vsel %vm373, %v350, 0
        %v378 = vsel %vm373, %v351, 0
        %v381 = vsel %vm373, %v352, 0
        %v384 = vsel %vm373, %v353, 0
        %v387 = vsel %vm373, %v354, 0
        %v390 = vsel %vm373, %v355, 0
        %v393 = vsel %vm373, %v356, 0
        %v396 = vsel %vm373, %v357, 0
        %v399 = vsel %vm373, %v358, 0
        %v402 = vsel %vm373, %v359, 0
        %v405 = vsel %vm373, %v360, 0
        %v408 = vsel %vm373, %v361, 0
        %v411 = vsel %vm373, %v362, 0
        %v414 = vsel %vm373, %v363, 0
        %v417 = vsel %vm373, %v364, 0
        %v420 = vsel %vm373, %v365, 0
        %vm422 = vcmask 1043456
        %v424 = vsel %vm422, %v368, 0
        %426 = vmatprep.subr.mxu0 0.0
        %427 = vmatpush1.msra.mxu0 %v367
        %428 = vmatprep.subr.mxu0 0.0
        %429 = vmatpush1.msra.mxu0 %v424
        %430 = vmatprep.subr.mxu0 0.0
        %431 = vmatpush1.msra.mxu0 0.0
        %432 = vmatprep.subr.mxu0 0.0
        %433 = vmatpush1.msra.mxu0 0.0
        %434 = vmatprep.subr.mxu0 0.0
        %435 = vmatpush1.msra.mxu0 0.0
        %436 = vmatprep.subr.mxu0 0.0
        %437 = vmatpush1.msra.mxu0 0.0
        %438 = vmatprep.subr.mxu0 0.0
        %439 = vmatpush1.msra.mxu0 0.0
        %440 = vmatprep.subr.mxu0 0.0
        %441 = vmatpush1.msra.mxu0 0.0
        %442 = vmatprep.subr.mxu0 0.0
        %443 = vmatpush1.msra.mxu0 0.0
        %444 = vmatprep.subr.mxu0 0.0
        %445 = vmatpush1.msra.mxu0 0.0
        %446 = vmatprep.subr.mxu0 0.0
        %447 = vmatpush1.msra.mxu0 0.0
        %448 = vmatprep.subr.mxu0 0.0
        %449 = vmatpush1.msra.mxu0 0.0
        %450 = vmatprep.subr.mxu0 0.0
        %451 = vmatpush1.msra.mxu0 0.0
        %452 = vmatprep.subr.mxu0 0.0
        %453 = vmatpush1.msra.mxu0 0.0
        %454 = vmatprep.subr.mxu0 0.0
        %455 = vmatpush1.msra.mxu0 0.0
        %456 = vmatprep.subr.mxu0 0.0
        %457 = vmatpush1.msra.mxu0 0.0
        %458 = vmatprep.subr.mxu0 0.0
        %459 = vmatpush1.msra.mxu0 0.0
        %460 = vmatprep.subr.mxu0 0.0
        %461 = vmatpush1.msra.mxu0 0.0
        %462 = vmatprep.subr.mxu0 0.0
        %463 = vmatpush1.msra.mxu0 0.0
        %464 = vmatprep.subr.mxu0 0.0
        %465 = vmatpush1.msra.mxu0 0.0
        %466 = vmatprep.subr.mxu0 0.0
        %467 = vmatpush1.msra.mxu0 0.0
        %468 = vmatprep.subr.mxu0 0.0
        %469 = vmatpush1.msra.mxu0 0.0
        %470 = vmatprep.subr.mxu0 0.0
        %471 = vmatpush1.msra.mxu0 0.0
        %472 = vmatprep.subr.mxu0 0.0
        %473 = vmatpush1.msra.mxu0 0.0
        %474 = vmatprep.subr.mxu0 0.0
        %475 = vmatpush1.msra.mxu0 0.0
        %476 = vmatprep.subr.mxu0 0.0
        %477 = vmatpush1.msra.mxu0 0.0
        %478 = vmatprep.subr.mxu0 0.0
        %479 = vmatpush1.msra.mxu0 0.0
        %480 = vmatprep.subr.mxu0 0.0
        %481 = vmatpush1.msra.mxu0 0.0
        %482 = vmatprep.subr.mxu0 0.0
        %483 = vmatpush1.msra.mxu0 0.0
        %484 = vmatprep.subr.mxu0 0.0
        %485 = vmatpush1.msra.mxu0 0.0
        %486 = vmatprep.subr.mxu0 0.0
        %487 = vmatpush1.msra.mxu0 0.0
        %488 = vmatprep.subr.mxu0 0.0
        %489 = vmatpush1.msra.mxu0 0.0
        %490 = vmatprep.mubr.f32.mxu0 0.0
        %491 = vmatmul.mubr.f32.gmra.mrb[0].mxu0 %v375
        %v492 = vpop.f32.mrb[0].mxu0
        %v493 = vadd.f32 %v372, %v492
        %v494 = vpop.f32.mrb[0].mxu0
        %495 = vmatprep.mubr.f32.mxu0 0.0
        %496 = vmatmul.mubr.f32.gmra.mrb[0].mxu0 %v378
        %v497 = vpop.f32.mrb[0].mxu0
        %v498 = vadd.f32 %v372, %v497
        %v499 = vpop.f32.mrb[0].mxu0
        %500 = vmatprep.mubr.f32.mxu0 0.0
        %501 = vmatmul.mubr.f32.gmra.mrb[0].mxu0 %v381
        %v502 = vpop.f32.mrb[0].mxu0
        %v503 = vadd.f32 %v372, %v502
        %v504 = vpop.f32.mrb[0].mxu0
        %505 = vmatprep.mubr.f32.mxu0 0.0
        %506 = vmatmul.mubr.f32.gmra.mrb[0].mxu0 %v384
        %v507 = vpop.f32.mrb[0].mxu0
        %v508 = vadd.f32 %v372, %v507
        %v509 = vpop.f32.mrb[0].mxu0
        %510 = vmatprep.mubr.f32.mxu0 0.0
        %511 = vmatmul.mubr.f32.gmra.mrb[0].mxu0 %v387
        %v512 = vpop.f32.mrb[0].mxu0
        %v513 = vadd.f32 %v372, %v512
        %v514 = vpop.f32.mrb[0].mxu0
        %515 = vmatprep.mubr.f32.mxu0 0.0
        %516 = vmatmul.mubr.f32.gmra.mrb[0].mxu0 %v390
        %v517 = vpop.f32.mrb[0].mxu0
        %v518 = vadd.f32 %v372, %v517
        %v519 = vpop.f32.mrb[0].mxu0
        %520 = vmatprep.mubr.f32.mxu0 0.0
        %521 = vmatmul.mubr.f32.gmra.mrb[0].mxu0 %v393
        %v522 = vpop.f32.mrb[0].mxu0
        %v523 = vadd.f32 %v372, %v522
        %v524 = vpop.f32.mrb[0].mxu0
        %525 = vmatprep.mubr.f32.mxu0 0.0
        %526 = vmatmul.mubr.f32.gmra.mrb[0].mxu0 %v396
        %v527 = vpop.f32.mrb[0].mxu0
        %v528 = vadd.f32 %v372, %v527
        %v529 = vpop.f32.mrb[0].mxu0
        %530 = vmatprep.mubr.f32.mxu0 0.0
        %531 = vmatmul.mubr.f32.gmra.mrb[0].mxu0 %v399
        %v532 = vpop.f32.mrb[0].mxu0
        %v533 = vadd.f32 %v372, %v532
        %v534 = vpop.f32.mrb[0].mxu0
        %535 = vmatprep.mubr.f32.mxu0 0.0
        %536 = vmatmul.mubr.f32.gmra.mrb[0].mxu0 %v402
        %v537 = vpop.f32.mrb[0].mxu0
        %v538 = vadd.f32 %v372, %v537
        %v539 = vpop.f32.mrb[0].mxu0
        %540 = vmatprep.mubr.f32.mxu0 0.0
        %541 = vmatmul.mubr.f32.gmra.mrb[0].mxu0 %v405
        %v542 = vpop.f32.mrb[0].mxu0
        %v543 = vadd.f32 %v372, %v542
        %v544 = vpop.f32.mrb[0].mxu0
        %545 = vmatprep.mubr.f32.mxu0 0.0
        %546 = vmatmul.mubr.f32.gmra.mrb[0].mxu0 %v408
        %v547 = vpop.f32.mrb[0].mxu0
        %v548 = vadd.f32 %v372, %v547
        %v549 = vpop.f32.mrb[0].mxu0
        %550 = vmatprep.mubr.f32.mxu0 0.0
        %551 = vmatmul.mubr.f32.gmra.mrb[0].mxu0 %v411
        %v552 = vpop.f32.mrb[0].mxu0
        %v553 = vadd.f32 %v372, %v552
        %v554 = vpop.f32.mrb[0].mxu0
        %555 = vmatprep.mubr.f32.mxu0 0.0
        %556 = vmatmul.mubr.f32.gmra.mrb[0].mxu0 %v414
        %v557 = vpop.f32.mrb[0].mxu0
        %v558 = vadd.f32 %v372, %v557
        %v559 = vpop.f32.mrb[0].mxu0
        %560 = vmatprep.mubr.f32.mxu0 0.0
        %561 = vmatmul.mubr.f32.gmra.mrb[0].mxu0 %v417
        %v562 = vpop.f32.mrb[0].mxu0
        %v563 = vadd.f32 %v372, %v562
        %v564 = vpop.f32.mrb[0].mxu0
        %565 = vmatprep.mubr.f32.mxu0 0.0
        %566 = vmatmul.mubr.f32.gmra.mrb[0].mxu0 %v420
        %v567 = vpop.f32.mrb[0].mxu0
        %v568 = vadd.f32 %v372, %v567
        %v569 = vpop.f32.mrb[0].mxu0
        %570 = vdwg.mxu0
        %v571 = vld [vmem:[%s4] sm:$0x1]
        %v572 = vlaneseq
        %v573 = vshrl.u32 %v572, 7
        %v574 = vsub.s32 0, %v573
        %v575 = vrot.slane %v571, %v574
        %v576 = vadd.f32 %v493, %v575
        %v577 = vadd.f32 %v498, %v575
        %v578 = vadd.f32 %v503, %v575
        %v579 = vadd.f32 %v508, %v575
        %v580 = vadd.f32 %v513, %v575
        %v581 = vadd.f32 %v518, %v575
        %v582 = vadd.f32 %v523, %v575
        %v583 = vadd.f32 %v528, %v575
        %v584 = vadd.f32 %v533, %v575
        %v585 = vadd.f32 %v538, %v575
        %v586 = vadd.f32 %v543, %v575
        %v587 = vadd.f32 %v548, %v575
        %v588 = vadd.f32 %v553, %v575
        %v589 = vadd.f32 %v558, %v575
        %v590 = vadd.f32 %v563, %v575
        %v591 = vadd.f32 %v568, %v575
        %v592 = vmul.f32 %v576, 100.0
        %v593 = vmul.f32 %v577, 100.0
        %v594 = vmul.f32 %v578, 100.0
        %v595 = vmul.f32 %v579, 100.0
        %v596 = vmul.f32 %v580, 100.0
        %v597 = vmul.f32 %v581, 100.0
        %v598 = vmul.f32 %v582, 100.0
        %v599 = vmul.f32 %v583, 100.0
        %v600 = vmul.f32 %v584, 100.0
        %v601 = vmul.f32 %v585, 100.0
        %v602 = vmul.f32 %v586, 100.0
        %v603 = vmul.f32 %v587, 100.0
        %v604 = vmul.f32 %v588, 100.0
        %v605 = vmul.f32 %v589, 100.0
        %v606 = vmul.f32 %v590, 100.0
        %v607 = vmul.f32 %v591, 100.0
        %vm608 = vcmp.gt.f32.partialorder %v592, 20.0
        %vm609 = vcmp.gt.f32.partialorder %v593, 20.0
        %vm610 = vcmp.gt.f32.partialorder %v594, 20.0
        %vm611 = vcmp.gt.f32.partialorder %v595, 20.0
        %vm612 = vcmp.gt.f32.partialorder %v596, 20.0
        %vm613 = vcmp.gt.f32.partialorder %v597, 20.0
        %vm614 = vcmp.gt.f32.partialorder %v598, 20.0
        %vm615 = vcmp.gt.f32.partialorder %v599, 20.0
        %vm616 = vcmp.gt.f32.partialorder %v600, 20.0
        %vm617 = vcmp.gt.f32.partialorder %v601, 20.0
        %vm618 = vcmp.gt.f32.partialorder %v602, 20.0
        %vm619 = vcmp.gt.f32.partialorder %v603, 20.0
        %vm620 = vcmp.gt.f32.partialorder %v604, 20.0
        %vm621 = vcmp.gt.f32.partialorder %v605, 20.0
        %vm622 = vcmp.gt.f32.partialorder %v606, 20.0
        %vm623 = vcmp.gt.f32.partialorder %v607, 20.0
        %v624 = vmin.f32 %v592, 20.0
        %v625 = vmin.f32 %v593, 20.0
        %v626 = vmin.f32 %v594, 20.0
        %v627 = vmin.f32 %v595, 20.0
        %v628 = vmin.f32 %v596, 20.0
        %v629 = vmin.f32 %v597, 20.0
        %v630 = vmin.f32 %v598, 20.0
        %v631 = vmin.f32 %v599, 20.0
        %v632 = vmin.f32 %v600, 20.0
        %v633 = vmin.f32 %v601, 20.0
        %v634 = vmin.f32 %v602, 20.0
        %v635 = vmin.f32 %v603, 20.0
        %v636 = vmin.f32 %v604, 20.0
        %v637 = vmin.f32 %v605, 20.0
        %v638 = vmin.f32 %v606, 20.0
        %v639 = vmin.f32 %v607, 20.0
        %v640 = vmul.f32 %v624, 1.442695
        %v641 = vpow.pop %v640
        %v642 = vmul.f32 %v625, 1.442695
        %v643 = vpow.pop %v642
        %v644 = vmul.f32 %v626, 1.442695
        %v645 = vpow.pop %v644
        %v646 = vmul.f32 %v627, 1.442695
        %v647 = vpow.pop %v646
        %v648 = vmul.f32 %v628, 1.442695
        %v649 = vpow.pop %v648
        %v650 = vmul.f32 %v629, 1.442695
        %v651 = vpow.pop %v650
        %v652 = vmul.f32 %v630, 1.442695
        %v653 = vpow.pop %v652
        %v654 = vmul.f32 %v631, 1.442695
        %v655 = vpow.pop %v654
        %v656 = vmul.f32 %v632, 1.442695
        %v657 = vpow.pop %v656
        %v658 = vmul.f32 %v633, 1.442695
        %v659 = vpow.pop %v658
        %v660 = vmul.f32 %v634, 1.442695
        %v661 = vpow.pop %v660
        %v662 = vmul.f32 %v635, 1.442695
        %v663 = vpow.pop %v662
        %v664 = vmul.f32 %v636, 1.442695
        %v665 = vpow.pop %v664
        %v666 = vmul.f32 %v637, 1.442695
        %v667 = vpow.pop %v666
        %v668 = vmul.f32 %v638, 1.442695
        %v669 = vpow.pop %v668
        %v670 = vmul.f32 %v639, 1.442695
        %v671 = vpow.pop %v670
        %v672 = vadd.f32 %v641, 1.0
        %v673 = vlog2.pop %v672
        %v674 = vmul.f32 %v673, 0.6931472
        %v675 = vmul.f32 -0.5, %v641
        %v676 = vadd.f32 %v675, 1.0
        %v677 = vmul.f32 %v676, %v641
        %v678 = vand.u32 2147483647, %v641
        %vm679 = vcmp.lt.f32.partialorder %v678, 0.0004427343
        %v680 = vsel %vm679, %v677, %v674
        %v681 = vadd.f32 %v643, 1.0
        %v682 = vlog2.pop %v681
        %v683 = vmul.f32 %v682, 0.6931472
        %v684 = vmul.f32 -0.5, %v643
        %v685 = vadd.f32 %v684, 1.0
        %v686 = vmul.f32 %v685, %v643
        %v687 = vand.u32 2147483647, %v643
        %vm688 = vcmp.lt.f32.partialorder %v687, 0.0004427343
        %v689 = vsel %vm688, %v686, %v683
        %v690 = vadd.f32 %v645, 1.0
        %v691 = vlog2.pop %v690
        %v692 = vmul.f32 %v691, 0.6931472
        %v693 = vmul.f32 -0.5, %v645
        %v694 = vadd.f32 %v693, 1.0
        %v695 = vmul.f32 %v694, %v645
        %v696 = vand.u32 2147483647, %v645
        %vm697 = vcmp.lt.f32.partialorder %v696, 0.0004427343
        %v698 = vsel %vm697, %v695, %v692
        %v699 = vadd.f32 %v647, 1.0
        %v700 = vlog2.pop %v699
        %v701 = vmul.f32 %v700, 0.6931472
        %v702 = vmul.f32 -0.5, %v647
        %v703 = vadd.f32 %v702, 1.0
        %v704 = vmul.f32 %v703, %v647
        %v705 = vand.u32 2147483647, %v647
        %vm706 = vcmp.lt.f32.partialorder %v705, 0.0004427343
        %v707 = vsel %vm706, %v704, %v701
        %v708 = vadd.f32 %v649, 1.0
        %v709 = vlog2.pop %v708
        %v710 = vmul.f32 %v709, 0.6931472
        %v711 = vmul.f32 -0.5, %v649
        %v712 = vadd.f32 %v711, 1.0
        %v713 = vmul.f32 %v712, %v649
        %v714 = vand.u32 2147483647, %v649
        %vm715 = vcmp.lt.f32.partialorder %v714, 0.0004427343
        %v716 = vsel %vm715, %v713, %v710
        %v717 = vadd.f32 %v651, 1.0
        %v718 = vlog2.pop %v717
        %v719 = vmul.f32 %v718, 0.6931472
        %v720 = vmul.f32 -0.5, %v651
        %v721 = vadd.f32 %v720, 1.0
        %v722 = vmul.f32 %v721, %v651
        %v723 = vand.u32 2147483647, %v651
        %vm724 = vcmp.lt.f32.partialorder %v723, 0.0004427343
        %v725 = vsel %vm724, %v722, %v719
        %v726 = vadd.f32 %v653, 1.0
        %v727 = vlog2.pop %v726
        %v728 = vmul.f32 %v727, 0.6931472
        %v729 = vmul.f32 -0.5, %v653
        %v730 = vadd.f32 %v729, 1.0
        %v731 = vmul.f32 %v730, %v653
        %v732 = vand.u32 2147483647, %v653
        %vm733 = vcmp.lt.f32.partialorder %v732, 0.0004427343
        %v734 = vsel %vm733, %v731, %v728
        %v735 = vadd.f32 %v655, 1.0
        %v736 = vlog2.pop %v735
        %v737 = vmul.f32 %v736, 0.6931472
        %v738 = vmul.f32 -0.5, %v655
        %v739 = vadd.f32 %v738, 1.0
        %v740 = vmul.f32 %v739, %v655
        %v741 = vand.u32 2147483647, %v655
        %vm742 = vcmp.lt.f32.partialorder %v741, 0.0004427343
        %v743 = vsel %vm742, %v740, %v737
        %v744 = vadd.f32 %v657, 1.0
        %v745 = vlog2.pop %v744
        %v746 = vmul.f32 %v745, 0.6931472
        %v747 = vmul.f32 -0.5, %v657
        %v748 = vadd.f32 %v747, 1.0
        %v749 = vmul.f32 %v748, %v657
        %v750 = vand.u32 2147483647, %v657
        %vm751 = vcmp.lt.f32.partialorder %v750, 0.0004427343
        %v752 = vsel %vm751, %v749, %v746
        %v753 = vadd.f32 %v659, 1.0
        %v754 = vlog2.pop %v753
        %v755 = vmul.f32 %v754, 0.6931472
        %v756 = vmul.f32 -0.5, %v659
        %v757 = vadd.f32 %v756, 1.0
        %v758 = vmul.f32 %v757, %v659
        %v759 = vand.u32 2147483647, %v659
        %vm760 = vcmp.lt.f32.partialorder %v759, 0.0004427343
        %v761 = vsel %vm760, %v758, %v755
        %v762 = vadd.f32 %v661, 1.0
        %v763 = vlog2.pop %v762
        %v764 = vmul.f32 %v763, 0.6931472
        %v765 = vmul.f32 -0.5, %v661
        %v766 = vadd.f32 %v765, 1.0
        %v767 = vmul.f32 %v766, %v661
        %v768 = vand.u32 2147483647, %v661
        %vm769 = vcmp.lt.f32.partialorder %v768, 0.0004427343
        %v770 = vsel %vm769, %v767, %v764
        %v771 = vadd.f32 %v663, 1.0
        %v772 = vlog2.pop %v771
        %v773 = vmul.f32 %v772, 0.6931472
        %v774 = vmul.f32 -0.5, %v663
        %v775 = vadd.f32 %v774, 1.0
        %v776 = vmul.f32 %v775, %v663
        %v777 = vand.u32 2147483647, %v663
        %vm778 = vcmp.lt.f32.partialorder %v777, 0.0004427343
        %v779 = vsel %vm778, %v776, %v773
        %v780 = vadd.f32 %v665, 1.0
        %v781 = vlog2.pop %v780
        %v782 = vmul.f32 %v781, 0.6931472
        %v783 = vmul.f32 -0.5, %v665
        %v784 = vadd.f32 %v783, 1.0
        %v785 = vmul.f32 %v784, %v665
        %v786 = vand.u32 2147483647, %v665
        %vm787 = vcmp.lt.f32.partialorder %v786, 0.0004427343
        %v788 = vsel %vm787, %v785, %v782
        %v789 = vadd.f32 %v667, 1.0
        %v790 = vlog2.pop %v789
        %v791 = vmul.f32 %v790, 0.6931472
        %v792 = vmul.f32 -0.5, %v667
        %v793 = vadd.f32 %v792, 1.0
        %v794 = vmul.f32 %v793, %v667
        %v795 = vand.u32 2147483647, %v667
        %vm796 = vcmp.lt.f32.partialorder %v795, 0.0004427343
        %v797 = vsel %vm796, %v794, %v791
        %v798 = vadd.f32 %v669, 1.0
        %v799 = vlog2.pop %v798
        %v800 = vmul.f32 %v799, 0.6931472
        %v801 = vmul.f32 -0.5, %v669
        %v802 = vadd.f32 %v801, 1.0
        %v803 = vmul.f32 %v802, %v669
        %v804 = vand.u32 2147483647, %v669
        %vm805 = vcmp.lt.f32.partialorder %v804, 0.0004427343
        %v806 = vsel %vm805, %v803, %v800
        %v807 = vadd.f32 %v671, 1.0
        %v808 = vlog2.pop %v807
        %v809 = vmul.f32 %v808, 0.6931472
        %v810 = vmul.f32 -0.5, %v671
        %v811 = vadd.f32 %v810, 1.0
        %v812 = vmul.f32 %v811, %v671
        %v813 = vand.u32 2147483647, %v671
        %vm814 = vcmp.lt.f32.partialorder %v813, 0.0004427343
        %v815 = vsel %vm814, %v812, %v809
        %v816 = vrcp.pop 100.0
        %v817 = vmul.f32 %v680, %v816
        %v818 = vmul.f32 %v689, %v816
        %v819 = vmul.f32 %v698, %v816
        %v820 = vmul.f32 %v707, %v816
        %v821 = vmul.f32 %v716, %v816
        %v822 = vmul.f32 %v725, %v816
        %v823 = vmul.f32 %v734, %v816
        %v824 = vmul.f32 %v743, %v816
        %v825 = vmul.f32 %v752, %v816
        %v826 = vmul.f32 %v761, %v816
        %v827 = vmul.f32 %v770, %v816
        %v828 = vmul.f32 %v779, %v816
        %v829 = vmul.f32 %v788, %v816
        %v830 = vmul.f32 %v797, %v816
        %v831 = vmul.f32 %v806, %v816
        %v832 = vmul.f32 %v815, %v816
        %v833 = vsel %vm608, %v576, %v817
        %v834 = vsel %vm609, %v577, %v818
        %v835 = vsel %vm610, %v578, %v819
        %v836 = vsel %vm611, %v579, %v820
        %v837 = vsel %vm612, %v580, %v821
        %v838 = vsel %vm613, %v581, %v822
        %v839 = vsel %vm614, %v582, %v823
        %v840 = vsel %vm615, %v583, %v824
        %v841 = vsel %vm616, %v584, %v825
        %v842 = vsel %vm617, %v585, %v826
        %v843 = vsel %vm618, %v586, %v827
        %v844 = vsel %vm619, %v587, %v828
        %v845 = vsel %vm620, %v588, %v829
        %v846 = vsel %vm621, %v589, %v830
        %v847 = vsel %vm622, %v590, %v831
        %v848 = vsel %vm623, %v591, %v832
        %v849 = vld [vmem:[#allocation2] sm:$0xff]
        %v850 = vld [vmem:[#allocation2 + $0x8] sm:$0xff]
        %v851 = vld [vmem:[#allocation2 + $0x10] sm:$0xff]
        %v852 = vld [vmem:[#allocation2 + $0x18] sm:$0xff]
        %v853 = vld [vmem:[#allocation2 + $0x20] sm:$0xff]
        %v854 = vld [vmem:[#allocation2 + $0x28] sm:$0xff]
        %v855 = vld [vmem:[#allocation2 + $0x30] sm:$0xff]
        %v856 = vld [vmem:[#allocation2 + $0x38] sm:$0xff]
        %v857 = vld [vmem:[#allocation2 + $0x40] sm:$0xff]
        %v858 = vld [vmem:[#allocation2 + $0x48] sm:$0xff]
        %v859 = vld [vmem:[#allocation2 + $0x50] sm:$0xff]
        %v860 = vld [vmem:[#allocation2 + $0x58] sm:$0xff]
        %v861 = vld [vmem:[#allocation2 + $0x60] sm:$0xff]
        %v862 = vld [vmem:[#allocation2 + $0x68] sm:$0xff]
        %v863 = vld [vmem:[#allocation2 + $0x70] sm:$0xff]
        %v864 = vld [vmem:[#allocation2 + $0x78] sm:$0xff]
        %v865 = vld [vmem:[%s4 + $0x1] sm:$0x1]
        %v866 = vlaneseq
        %v867 = vshrl.u32 %v866, 7
        %v868 = vsub.s32 0, %v867
        %v869 = vrot.slane %v865, %v868
        %870 = vmatprep.subr.mxu0 0.0
        %871 = vmatpush1.msra.mxu0 %v849
        %872 = vmatprep.subr.mxu0 0.0
        %873 = vmatpush1.msra.mxu0 %v850
        %874 = vmatprep.subr.mxu0 0.0
        %875 = vmatpush1.msra.mxu0 %v851
        %876 = vmatprep.subr.mxu0 0.0
        %877 = vmatpush1.msra.mxu0 %v852
        %878 = vmatprep.subr.mxu0 0.0
        %879 = vmatpush1.msra.mxu0 %v853
        %880 = vmatprep.subr.mxu0 0.0
        %881 = vmatpush1.msra.mxu0 %v854
        %882 = vmatprep.subr.mxu0 0.0
        %883 = vmatpush1.msra.mxu0 %v855
        %884 = vmatprep.subr.mxu0 0.0
        %885 = vmatpush1.msra.mxu0 %v856
        %886 = vmatprep.subr.mxu0 0.0
        %887 = vmatpush1.msra.mxu0 %v857
        %888 = vmatprep.subr.mxu0 0.0
        %889 = vmatpush1.msra.mxu0 %v858
        %890 = vmatprep.subr.mxu0 0.0
        %891 = vmatpush1.msra.mxu0 %v859
        %892 = vmatprep.subr.mxu0 0.0
        %893 = vmatpush1.msra.mxu0 %v860
        %894 = vmatprep.subr.mxu0 0.0
        %895 = vmatpush1.msra.mxu0 %v861
        %896 = vmatprep.subr.mxu0 0.0
        %897 = vmatpush1.msra.mxu0 %v862
        %898 = vmatprep.subr.mxu0 0.0
        %899 = vmatpush1.msra.mxu0 %v863
        %900 = vmatprep.subr.mxu0 0.0
        %901 = vmatpush1.msra.mxu0 %v864
        %902 = vmatprep.subr.mxu0 0.0
        %903 = vmatpush1.msra.mxu0 0.0
        %904 = vmatprep.subr.mxu0 0.0
        %905 = vmatpush1.msra.mxu0 0.0
        %906 = vmatprep.subr.mxu0 0.0
        %907 = vmatpush1.msra.mxu0 0.0
        %908 = vmatprep.subr.mxu0 0.0
        %909 = vmatpush1.msra.mxu0 0.0
        %910 = vmatprep.subr.mxu0 0.0
        %911 = vmatpush1.msra.mxu0 0.0
        %912 = vmatprep.subr.mxu0 0.0
        %913 = vmatpush1.msra.mxu0 0.0
        %914 = vmatprep.subr.mxu0 0.0
        %915 = vmatpush1.msra.mxu0 0.0
        %916 = vmatprep.subr.mxu0 0.0
        %917 = vmatpush1.msra.mxu0 0.0
        %918 = vmatprep.subr.mxu0 0.0
        %919 = vmatpush1.msra.mxu0 0.0
        %920 = vmatprep.subr.mxu0 0.0
        %921 = vmatpush1.msra.mxu0 0.0
        %922 = vmatprep.subr.mxu0 0.0
        %923 = vmatpush1.msra.mxu0 0.0
        %924 = vmatprep.subr.mxu0 0.0
        %925 = vmatpush1.msra.mxu0 0.0
        %926 = vmatprep.subr.mxu0 0.0
        %927 = vmatpush1.msra.mxu0 0.0
        %928 = vmatprep.subr.mxu0 0.0
        %929 = vmatpush1.msra.mxu0 0.0
        %930 = vmatprep.subr.mxu0 0.0
        %931 = vmatpush1.msra.mxu0 0.0
        %932 = vmatprep.subr.mxu0 0.0
        %933 = vmatpush1.msra.mxu0 0.0
        %934 = vmatprep.mubr.f32.mxu0 0.0
        %935 = vmatmul.mubr.f32.gmra.mrb[0].mxu0 %v833
        %v936 = vpop.f32.mrb[0].mxu0
        %v937 = vadd.f32 %v869, %v936
        %v938 = vpop.f32.mrb[0].mxu0
        %939 = vmatprep.mubr.f32.mxu0 0.0
        %940 = vmatmul.mubr.f32.gmra.mrb[0].mxu0 %v834
        %v941 = vpop.f32.mrb[0].mxu0
        %v942 = vadd.f32 %v869, %v941
        %v943 = vpop.f32.mrb[0].mxu0
        %944 = vmatprep.mubr.f32.mxu0 0.0
        %945 = vmatmul.mubr.f32.gmra.mrb[0].mxu0 %v835
        %v946 = vpop.f32.mrb[0].mxu0
        %v947 = vadd.f32 %v869, %v946
        %v948 = vpop.f32.mrb[0].mxu0
        %949 = vmatprep.mubr.f32.mxu0 0.0
        %950 = vmatmul.mubr.f32.gmra.mrb[0].mxu0 %v836
        %v951 = vpop.f32.mrb[0].mxu0
        %v952 = vadd.f32 %v869, %v951
        %v953 = vpop.f32.mrb[0].mxu0
        %954 = vmatprep.mubr.f32.mxu0 0.0
        %955 = vmatmul.mubr.f32.gmra.mrb[0].mxu0 %v837
        %v956 = vpop.f32.mrb[0].mxu0
        %v957 = vadd.f32 %v869, %v956
        %v958 = vpop.f32.mrb[0].mxu0
        %959 = vmatprep.mubr.f32.mxu0 0.0
        %960 = vmatmul.mubr.f32.gmra.mrb[0].mxu0 %v838
        %v961 = vpop.f32.mrb[0].mxu0
        %v962 = vadd.f32 %v869, %v961
        %v963 = vpop.f32.mrb[0].mxu0
        %964 = vmatprep.mubr.f32.mxu0 0.0
        %965 = vmatmul.mubr.f32.gmra.mrb[0].mxu0 %v839
        %v966 = vpop.f32.mrb[0].mxu0
        %v967 = vadd.f32 %v869, %v966
        %v968 = vpop.f32.mrb[0].mxu0
        %969 = vmatprep.mubr.f32.mxu0 0.0
        %970 = vmatmul.mubr.f32.gmra.mrb[0].mxu0 %v840
        %v971 = vpop.f32.mrb[0].mxu0
        %v972 = vadd.f32 %v869, %v971
        %v973 = vpop.f32.mrb[0].mxu0
        %974 = vmatprep.mubr.f32.mxu0 0.0
        %975 = vmatmul.mubr.f32.gmra.mrb[0].mxu0 %v841
        %v976 = vpop.f32.mrb[0].mxu0
        %v977 = vadd.f32 %v869, %v976
        %v978 = vpop.f32.mrb[0].mxu0
        %979 = vmatprep.mubr.f32.mxu0 0.0
        %980 = vmatmul.mubr.f32.gmra.mrb[0].mxu0 %v842
        %v981 = vpop.f32.mrb[0].mxu0
        %v982 = vadd.f32 %v869, %v981
        %v983 = vpop.f32.mrb[0].mxu0
        %984 = vmatprep.mubr.f32.mxu0 0.0
        %985 = vmatmul.mubr.f32.gmra.mrb[0].mxu0 %v843
        %v986 = vpop.f32.mrb[0].mxu0
        %v987 = vadd.f32 %v869, %v986
        %v988 = vpop.f32.mrb[0].mxu0
        %989 = vmatprep.mubr.f32.mxu0 0.0
        %990 = vmatmul.mubr.f32.gmra.mrb[0].mxu0 %v844
        %v991 = vpop.f32.mrb[0].mxu0
        %v992 = vadd.f32 %v869, %v991
        %v993 = vpop.f32.mrb[0].mxu0
        %994 = vmatprep.mubr.f32.mxu0 0.0
        %995 = vmatmul.mubr.f32.gmra.mrb[0].mxu0 %v845
        %v996 = vpop.f32.mrb[0].mxu0
        %v997 = vadd.f32 %v869, %v996
        %v998 = vpop.f32.mrb[0].mxu0
        %999 = vmatprep.mubr.f32.mxu0 0.0
        %1000 = vmatmul.mubr.f32.gmra.mrb[0].mxu0 %v846
        %v1001 = vpop.f32.mrb[0].mxu0
        %v1002 = vadd.f32 %v869, %v1001
        %v1003 = vpop.f32.mrb[0].mxu0
        %1004 = vmatprep.mubr.f32.mxu0 0.0
        %1005 = vmatmul.mubr.f32.gmra.mrb[0].mxu0 %v847
        %v1006 = vpop.f32.mrb[0].mxu0
        %v1007 = vadd.f32 %v869, %v1006
        %v1008 = vpop.f32.mrb[0].mxu0
        %1009 = vmatprep.mubr.f32.mxu0 0.0
        %1010 = vmatmul.mubr.f32.gmra.mrb[0].mxu0 %v848
        %v1011 = vpop.f32.mrb[0].mxu0
        %v1012 = vadd.f32 %v869, %v1011
        %v1013 = vpop.f32.mrb[0].mxu0
        %1014 = vdwg.mxu0
        %v1015 = vmul.f32 %v937, 100.0
        %v1016 = vmul.f32 %v942, 100.0
        %v1017 = vmul.f32 %v947, 100.0
        %v1018 = vmul.f32 %v952, 100.0
        %v1019 = vmul.f32 %v957, 100.0
        %v1020 = vmul.f32 %v962, 100.0
        %v1021 = vmul.f32 %v967, 100.0
        %v1022 = vmul.f32 %v972, 100.0
        %v1023 = vmul.f32 %v977, 100.0
        %v1024 = vmul.f32 %v982, 100.0
        %v1025 = vmul.f32 %v987, 100.0
        %v1026 = vmul.f32 %v992, 100.0
        %v1027 = vmul.f32 %v997, 100.0
        %v1028 = vmul.f32 %v1002, 100.0
        %v1029 = vmul.f32 %v1007, 100.0
        %v1030 = vmul.f32 %v1012, 100.0
        %vm1031 = vcmp.gt.f32.partialorder %v1015, 20.0
        %vm1032 = vcmp.gt.f32.partialorder %v1016, 20.0
        %vm1033 = vcmp.gt.f32.partialorder %v1017, 20.0
        %vm1034 = vcmp.gt.f32.partialorder %v1018, 20.0
        %vm1035 = vcmp.gt.f32.partialorder %v1019, 20.0
        %vm1036 = vcmp.gt.f32.partialorder %v1020, 20.0
        %vm1037 = vcmp.gt.f32.partialorder %v1021, 20.0
        %vm1038 = vcmp.gt.f32.partialorder %v1022, 20.0
        %vm1039 = vcmp.gt.f32.partialorder %v1023, 20.0
        %vm1040 = vcmp.gt.f32.partialorder %v1024, 20.0
        %vm1041 = vcmp.gt.f32.partialorder %v1025, 20.0
        %vm1042 = vcmp.gt.f32.partialorder %v1026, 20.0
        %vm1043 = vcmp.gt.f32.partialorder %v1027, 20.0
        %vm1044 = vcmp.gt.f32.partialorder %v1028, 20.0
        %vm1045 = vcmp.gt.f32.partialorder %v1029, 20.0
        %vm1046 = vcmp.gt.f32.partialorder %v1030, 20.0
        %v1047 = vmin.f32 %v1015, 20.0
        %v1048 = vmin.f32 %v1016, 20.0
        %v1049 = vmin.f32 %v1017, 20.0
        %v1050 = vmin.f32 %v1018, 20.0
        %v1051 = vmin.f32 %v1019, 20.0
        %v1052 = vmin.f32 %v1020, 20.0
        %v1053 = vmin.f32 %v1021, 20.0
        %v1054 = vmin.f32 %v1022, 20.0
        %v1055 = vmin.f32 %v1023, 20.0
        %v1056 = vmin.f32 %v1024, 20.0
        %v1057 = vmin.f32 %v1025, 20.0
        %v1058 = vmin.f32 %v1026, 20.0
        %v1059 = vmin.f32 %v1027, 20.0
        %v1060 = vmin.f32 %v1028, 20.0
        %v1061 = vmin.f32 %v1029, 20.0
        %v1062 = vmin.f32 %v1030, 20.0
        %v1063 = vmul.f32 %v1047, 1.442695
        %v1064 = vpow.pop %v1063
        %v1065 = vmul.f32 %v1048, 1.442695
        %v1066 = vpow.pop %v1065
        %v1067 = vmul.f32 %v1049, 1.442695
        %v1068 = vpow.pop %v1067
        %v1069 = vmul.f32 %v1050, 1.442695
        %v1070 = vpow.pop %v1069
        %v1071 = vmul.f32 %v1051, 1.442695
        %v1072 = vpow.pop %v1071
        %v1073 = vmul.f32 %v1052, 1.442695
        %v1074 = vpow.pop %v1073
        %v1075 = vmul.f32 %v1053, 1.442695
        %v1076 = vpow.pop %v1075
        %v1077 = vmul.f32 %v1054, 1.442695
        %v1078 = vpow.pop %v1077
        %v1079 = vmul.f32 %v1055, 1.442695
        %v1080 = vpow.pop %v1079
        %v1081 = vmul.f32 %v1056, 1.442695
        %v1082 = vpow.pop %v1081
        %v1083 = vmul.f32 %v1057, 1.442695
        %v1084 = vpow.pop %v1083
        %v1085 = vmul.f32 %v1058, 1.442695
        %v1086 = vpow.pop %v1085
        %v1087 = vmul.f32 %v1059, 1.442695
        %v1088 = vpow.pop %v1087
        %v1089 = vmul.f32 %v1060, 1.442695
        %v1090 = vpow.pop %v1089
        %v1091 = vmul.f32 %v1061, 1.442695
        %v1092 = vpow.pop %v1091
        %v1093 = vmul.f32 %v1062, 1.442695
        %v1094 = vpow.pop %v1093
        %v1095 = vadd.f32 %v1064, 1.0
        %v1096 = vlog2.pop %v1095
        %v1097 = vmul.f32 %v1096, 0.6931472
        %v1098 = vmul.f32 -0.5, %v1064
        %v1099 = vadd.f32 %v1098, 1.0
        %v1100 = vmul.f32 %v1099, %v1064
        %v1101 = vand.u32 2147483647, %v1064
        %vm1102 = vcmp.lt.f32.partialorder %v1101, 0.0004427343
        %v1103 = vsel %vm1102, %v1100, %v1097
        %v1104 = vadd.f32 %v1066, 1.0
        %v1105 = vlog2.pop %v1104
        %v1106 = vmul.f32 %v1105, 0.6931472
        %v1107 = vmul.f32 -0.5, %v1066
        %v1108 = vadd.f32 %v1107, 1.0
        %v1109 = vmul.f32 %v1108, %v1066
        %v1110 = vand.u32 2147483647, %v1066
        %vm1111 = vcmp.lt.f32.partialorder %v1110, 0.0004427343
        %v1112 = vsel %vm1111, %v1109, %v1106
        %v1113 = vadd.f32 %v1068, 1.0
        %v1114 = vlog2.pop %v1113
        %v1115 = vmul.f32 %v1114, 0.6931472
        %v1116 = vmul.f32 -0.5, %v1068
        %v1117 = vadd.f32 %v1116, 1.0
        %v1118 = vmul.f32 %v1117, %v1068
        %v1119 = vand.u32 2147483647, %v1068
        %vm1120 = vcmp.lt.f32.partialorder %v1119, 0.0004427343
        %v1121 = vsel %vm1120, %v1118, %v1115
        %v1122 = vadd.f32 %v1070, 1.0
        %v1123 = vlog2.pop %v1122
        %v1124 = vmul.f32 %v1123, 0.6931472
        %v1125 = vmul.f32 -0.5, %v1070
        %v1126 = vadd.f32 %v1125, 1.0
        %v1127 = vmul.f32 %v1126, %v1070
        %v1128 = vand.u32 2147483647, %v1070
        %vm1129 = vcmp.lt.f32.partialorder %v1128, 0.0004427343
        %v1130 = vsel %vm1129, %v1127, %v1124
        %v1131 = vadd.f32 %v1072, 1.0
        %v1132 = vlog2.pop %v1131
        %v1133 = vmul.f32 %v1132, 0.6931472
        %v1134 = vmul.f32 -0.5, %v1072
        %v1135 = vadd.f32 %v1134, 1.0
        %v1136 = vmul.f32 %v1135, %v1072
        %v1137 = vand.u32 2147483647, %v1072
        %vm1138 = vcmp.lt.f32.partialorder %v1137, 0.0004427343
        %v1139 = vsel %vm1138, %v1136, %v1133
        %v1140 = vadd.f32 %v1074, 1.0
        %v1141 = vlog2.pop %v1140
        %v1142 = vmul.f32 %v1141, 0.6931472
        %v1143 = vmul.f32 -0.5, %v1074
        %v1144 = vadd.f32 %v1143, 1.0
        %v1145 = vmul.f32 %v1144, %v1074
        %v1146 = vand.u32 2147483647, %v1074
        %vm1147 = vcmp.lt.f32.partialorder %v1146, 0.0004427343
        %v1148 = vsel %vm1147, %v1145, %v1142
        %v1149 = vadd.f32 %v1076, 1.0
        %v1150 = vlog2.pop %v1149
        %v1151 = vmul.f32 %v1150, 0.6931472
        %v1152 = vmul.f32 -0.5, %v1076
        %v1153 = vadd.f32 %v1152, 1.0
        %v1154 = vmul.f32 %v1153, %v1076
        %v1155 = vand.u32 2147483647, %v1076
        %vm1156 = vcmp.lt.f32.partialorder %v1155, 0.0004427343
        %v1157 = vsel %vm1156, %v1154, %v1151
        %v1158 = vadd.f32 %v1078, 1.0
        %v1159 = vlog2.pop %v1158
        %v1160 = vmul.f32 %v1159, 0.6931472
        %v1161 = vmul.f32 -0.5, %v1078
        %v1162 = vadd.f32 %v1161, 1.0
        %v1163 = vmul.f32 %v1162, %v1078
        %v1164 = vand.u32 2147483647, %v1078
        %vm1165 = vcmp.lt.f32.partialorder %v1164, 0.0004427343
        %v1166 = vsel %vm1165, %v1163, %v1160
        %v1167 = vadd.f32 %v1080, 1.0
        %v1168 = vlog2.pop %v1167
        %v1169 = vmul.f32 %v1168, 0.6931472
        %v1170 = vmul.f32 -0.5, %v1080
        %v1171 = vadd.f32 %v1170, 1.0
        %v1172 = vmul.f32 %v1171, %v1080
        %v1173 = vand.u32 2147483647, %v1080
        %vm1174 = vcmp.lt.f32.partialorder %v1173, 0.0004427343
        %v1175 = vsel %vm1174, %v1172, %v1169
        %v1176 = vadd.f32 %v1082, 1.0
        %v1177 = vlog2.pop %v1176
        %v1178 = vmul.f32 %v1177, 0.6931472
        %v1179 = vmul.f32 -0.5, %v1082
        %v1180 = vadd.f32 %v1179, 1.0
        %v1181 = vmul.f32 %v1180, %v1082
        %v1182 = vand.u32 2147483647, %v1082
        %vm1183 = vcmp.lt.f32.partialorder %v1182, 0.0004427343
        %v1184 = vsel %vm1183, %v1181, %v1178
        %v1185 = vadd.f32 %v1084, 1.0
        %v1186 = vlog2.pop %v1185
        %v1187 = vmul.f32 %v1186, 0.6931472
        %v1188 = vmul.f32 -0.5, %v1084
        %v1189 = vadd.f32 %v1188, 1.0
        %v1190 = vmul.f32 %v1189, %v1084
        %v1191 = vand.u32 2147483647, %v1084
        %vm1192 = vcmp.lt.f32.partialorder %v1191, 0.0004427343
        %v1193 = vsel %vm1192, %v1190, %v1187
        %v1194 = vadd.f32 %v1086, 1.0
        %v1195 = vlog2.pop %v1194
        %v1196 = vmul.f32 %v1195, 0.6931472
        %v1197 = vmul.f32 -0.5, %v1086
        %v1198 = vadd.f32 %v1197, 1.0
        %v1199 = vmul.f32 %v1198, %v1086
        %v1200 = vand.u32 2147483647, %v1086
        %vm1201 = vcmp.lt.f32.partialorder %v1200, 0.0004427343
        %v1202 = vsel %vm1201, %v1199, %v1196
        %v1203 = vadd.f32 %v1088, 1.0
        %v1204 = vlog2.pop %v1203
        %v1205 = vmul.f32 %v1204, 0.6931472
        %v1206 = vmul.f32 -0.5, %v1088
        %v1207 = vadd.f32 %v1206, 1.0
        %v1208 = vmul.f32 %v1207, %v1088
        %v1209 = vand.u32 2147483647, %v1088
        %vm1210 = vcmp.lt.f32.partialorder %v1209, 0.0004427343
        %v1211 = vsel %vm1210, %v1208, %v1205
        %v1212 = vadd.f32 %v1090, 1.0
        %v1213 = vlog2.pop %v1212
        %v1214 = vmul.f32 %v1213, 0.6931472
        %v1215 = vmul.f32 -0.5, %v1090
        %v1216 = vadd.f32 %v1215, 1.0
        %v1217 = vmul.f32 %v1216, %v1090
        %v1218 = vand.u32 2147483647, %v1090
        %vm1219 = vcmp.lt.f32.partialorder %v1218, 0.0004427343
        %v1220 = vsel %vm1219, %v1217, %v1214
        %v1221 = vadd.f32 %v1092, 1.0
        %v1222 = vlog2.pop %v1221
        %v1223 = vmul.f32 %v1222, 0.6931472
        %v1224 = vmul.f32 -0.5, %v1092
        %v1225 = vadd.f32 %v1224, 1.0
        %v1226 = vmul.f32 %v1225, %v1092
        %v1227 = vand.u32 2147483647, %v1092
        %vm1228 = vcmp.lt.f32.partialorder %v1227, 0.0004427343
        %v1229 = vsel %vm1228, %v1226, %v1223
        %v1230 = vadd.f32 %v1094, 1.0
        %v1231 = vlog2.pop %v1230
        %v1232 = vmul.f32 %v1231, 0.6931472
        %v1233 = vmul.f32 -0.5, %v1094
        %v1234 = vadd.f32 %v1233, 1.0
        %v1235 = vmul.f32 %v1234, %v1094
        %v1236 = vand.u32 2147483647, %v1094
        %vm1237 = vcmp.lt.f32.partialorder %v1236, 0.0004427343
        %v1238 = vsel %vm1237, %v1235, %v1232
        %v1239 = vmul.f32 %v1103, %v816
        %v1240 = vmul.f32 %v1112, %v816
        %v1241 = vmul.f32 %v1121, %v816
        %v1242 = vmul.f32 %v1130, %v816
        %v1243 = vmul.f32 %v1139, %v816
        %v1244 = vmul.f32 %v1148, %v816
        %v1245 = vmul.f32 %v1157, %v816
        %v1246 = vmul.f32 %v1166, %v816
        %v1247 = vmul.f32 %v1175, %v816
        %v1248 = vmul.f32 %v1184, %v816
        %v1249 = vmul.f32 %v1193, %v816
        %v1250 = vmul.f32 %v1202, %v816
        %v1251 = vmul.f32 %v1211, %v816
        %v1252 = vmul.f32 %v1220, %v816
        %v1253 = vmul.f32 %v1229, %v816
        %v1254 = vmul.f32 %v1238, %v816
        %v1255 = vsel %vm1031, %v937, %v1239
        %v1256 = vsel %vm1032, %v942, %v1240
        %v1257 = vsel %vm1033, %v947, %v1241
        %v1258 = vsel %vm1034, %v952, %v1242
        %v1259 = vsel %vm1035, %v957, %v1243
        %v1260 = vsel %vm1036, %v962, %v1244
        %v1261 = vsel %vm1037, %v967, %v1245
        %v1262 = vsel %vm1038, %v972, %v1246
        %v1263 = vsel %vm1039, %v977, %v1247
        %v1264 = vsel %vm1040, %v982, %v1248
        %v1265 = vsel %vm1041, %v987, %v1249
        %v1266 = vsel %vm1042, %v992, %v1250
        %v1267 = vsel %vm1043, %v997, %v1251
        %v1268 = vsel %vm1044, %v1002, %v1252
        %v1269 = vsel %vm1045, %v1007, %v1253
        %v1270 = vsel %vm1046, %v1012, %v1254
        %s1271 = scalar_lea.vmem [#allocation2], 128
        %v1272 = vld [vmem:[%s1271] sm:$0xff]
        %v1273 = vld [vmem:[%s1271 + $0x8] sm:$0xff]
        %v1274 = vld [vmem:[%s1271 + $0x10] sm:$0xff]
        %v1275 = vld [vmem:[%s1271 + $0x18] sm:$0xff]
        %v1276 = vld [vmem:[%s1271 + $0x20] sm:$0xff]
        %v1277 = vld [vmem:[%s1271 + $0x28] sm:$0xff]
        %v1278 = vld [vmem:[%s1271 + $0x30] sm:$0xff]
        %v1279 = vld [vmem:[%s1271 + $0x38] sm:$0xff]
        %v1280 = vld [vmem:[%s1271 + $0x40] sm:$0xff]
        %v1281 = vld [vmem:[%s1271 + $0x48] sm:$0xff]
        %v1282 = vld [vmem:[%s1271 + $0x50] sm:$0xff]
        %v1283 = vld [vmem:[%s1271 + $0x58] sm:$0xff]
        %v1284 = vld [vmem:[%s1271 + $0x60] sm:$0xff]
        %v1285 = vld [vmem:[%s1271 + $0x68] sm:$0xff]
        %v1286 = vld [vmem:[%s1271 + $0x70] sm:$0xff]
        %v1287 = vld [vmem:[%s1271 + $0x78] sm:$0xff]
        %v1288 = vld [vmem:[%s4 + $0x2] sm:$0x1]
        %v1289 = vlaneseq
        %v1290 = vshrl.u32 %v1289, 7
        %v1291 = vsub.s32 0, %v1290
        %v1292 = vrot.slane %v1288, %v1291
        %1293 = vmatprep.subr.mxu0 0.0
        %1294 = vmatpush1.msra.mxu0 %v1272
        %1295 = vmatprep.subr.mxu0 0.0
        %1296 = vmatpush1.msra.mxu0 %v1273
        %1297 = vmatprep.subr.mxu0 0.0
        %1298 = vmatpush1.msra.mxu0 %v1274
        %1299 = vmatprep.subr.mxu0 0.0
        %1300 = vmatpush1.msra.mxu0 %v1275
        %1301 = vmatprep.subr.mxu0 0.0
        %1302 = vmatpush1.msra.mxu0 %v1276
        %1303 = vmatprep.subr.mxu0 0.0
        %1304 = vmatpush1.msra.mxu0 %v1277
        %1305 = vmatprep.subr.mxu0 0.0
        %1306 = vmatpush1.msra.mxu0 %v1278
        %1307 = vmatprep.subr.mxu0 0.0
        %1308 = vmatpush1.msra.mxu0 %v1279
        %1309 = vmatprep.subr.mxu0 0.0
        %1310 = vmatpush1.msra.mxu0 %v1280
        %1311 = vmatprep.subr.mxu0 0.0
        %1312 = vmatpush1.msra.mxu0 %v1281
        %1313 = vmatprep.subr.mxu0 0.0
        %1314 = vmatpush1.msra.mxu0 %v1282
        %1315 = vmatprep.subr.mxu0 0.0
        %1316 = vmatpush1.msra.mxu0 %v1283
        %1317 = vmatprep.subr.mxu0 0.0
        %1318 = vmatpush1.msra.mxu0 %v1284
        %1319 = vmatprep.subr.mxu0 0.0
        %1320 = vmatpush1.msra.mxu0 %v1285
        %1321 = vmatprep.subr.mxu0 0.0
        %1322 = vmatpush1.msra.mxu0 %v1286
        %1323 = vmatprep.subr.mxu0 0.0
        %1324 = vmatpush1.msra.mxu0 %v1287
        %1325 = vmatprep.subr.mxu0 0.0
        %1326 = vmatpush1.msra.mxu0 0.0
        %1327 = vmatprep.subr.mxu0 0.0
        %1328 = vmatpush1.msra.mxu0 0.0
        %1329 = vmatprep.subr.mxu0 0.0
        %1330 = vmatpush1.msra.mxu0 0.0
        %1331 = vmatprep.subr.mxu0 0.0
        %1332 = vmatpush1.msra.mxu0 0.0
        %1333 = vmatprep.subr.mxu0 0.0
        %1334 = vmatpush1.msra.mxu0 0.0
        %1335 = vmatprep.subr.mxu0 0.0
        %1336 = vmatpush1.msra.mxu0 0.0
        %1337 = vmatprep.subr.mxu0 0.0
        %1338 = vmatpush1.msra.mxu0 0.0
        %1339 = vmatprep.subr.mxu0 0.0
        %1340 = vmatpush1.msra.mxu0 0.0
        %1341 = vmatprep.subr.mxu0 0.0
        %1342 = vmatpush1.msra.mxu0 0.0
        %1343 = vmatprep.subr.mxu0 0.0
        %1344 = vmatpush1.msra.mxu0 0.0
        %1345 = vmatprep.subr.mxu0 0.0
        %1346 = vmatpush1.msra.mxu0 0.0
        %1347 = vmatprep.subr.mxu0 0.0
        %1348 = vmatpush1.msra.mxu0 0.0
        %1349 = vmatprep.subr.mxu0 0.0
        %1350 = vmatpush1.msra.mxu0 0.0
        %1351 = vmatprep.subr.mxu0 0.0
        %1352 = vmatpush1.msra.mxu0 0.0
        %1353 = vmatprep.subr.mxu0 0.0
        %1354 = vmatpush1.msra.mxu0 0.0
        %1355 = vmatprep.subr.mxu0 0.0
        %1356 = vmatpush1.msra.mxu0 0.0
        %1357 = vmatprep.mubr.f32.mxu0 0.0
        %1358 = vmatmul.mubr.f32.gmra.mrb[0].mxu0 %v1255
        %v1359 = vpop.f32.mrb[0].mxu0
        %v1360 = vadd.f32 %v1292, %v1359
        %v1361 = vpop.f32.mrb[0].mxu0
        %1362 = vmatprep.mubr.f32.mxu0 0.0
        %1363 = vmatmul.mubr.f32.gmra.mrb[0].mxu0 %v1256
        %v1364 = vpop.f32.mrb[0].mxu0
        %v1365 = vadd.f32 %v1292, %v1364
        %v1366 = vpop.f32.mrb[0].mxu0
        %1367 = vmatprep.mubr.f32.mxu0 0.0
        %1368 = vmatmul.mubr.f32.gmra.mrb[0].mxu0 %v1257
        %v1369 = vpop.f32.mrb[0].mxu0
        %v1370 = vadd.f32 %v1292, %v1369
        %v1371 = vpop.f32.mrb[0].mxu0
        %1372 = vmatprep.mubr.f32.mxu0 0.0
        %1373 = vmatmul.mubr.f32.gmra.mrb[0].mxu0 %v1258
        %v1374 = vpop.f32.mrb[0].mxu0
        %v1375 = vadd.f32 %v1292, %v1374
        %v1376 = vpop.f32.mrb[0].mxu0
        %1377 = vmatprep.mubr.f32.mxu0 0.0
        %1378 = vmatmul.mubr.f32.gmra.mrb[0].mxu0 %v1259
        %v1379 = vpop.f32.mrb[0].mxu0
        %v1380 = vadd.f32 %v1292, %v1379
        %v1381 = vpop.f32.mrb[0].mxu0
        %1382 = vmatprep.mubr.f32.mxu0 0.0
        %1383 = vmatmul.mubr.f32.gmra.mrb[0].mxu0 %v1260
        %v1384 = vpop.f32.mrb[0].mxu0
        %v1385 = vadd.f32 %v1292, %v1384
        %v1386 = vpop.f32.mrb[0].mxu0
        %1387 = vmatprep.mubr.f32.mxu0 0.0
        %1388 = vmatmul.mubr.f32.gmra.mrb[0].mxu0 %v1261
        %v1389 = vpop.f32.mrb[0].mxu0
        %v1390 = vadd.f32 %v1292, %v1389
        %v1391 = vpop.f32.mrb[0].mxu0
        %1392 = vmatprep.mubr.f32.mxu0 0.0
        %1393 = vmatmul.mubr.f32.gmra.mrb[0].mxu0 %v1262
        %v1394 = vpop.f32.mrb[0].mxu0
        %v1395 = vadd.f32 %v1292, %v1394
        %v1396 = vpop.f32.mrb[0].mxu0
        %1397 = vmatprep.mubr.f32.mxu0 0.0
        %1398 = vmatmul.mubr.f32.gmra.mrb[0].mxu0 %v1263
        %v1399 = vpop.f32.mrb[0].mxu0
        %v1400 = vadd.f32 %v1292, %v1399
        %v1401 = vpop.f32.mrb[0].mxu0
        %1402 = vmatprep.mubr.f32.mxu0 0.0
        %1403 = vmatmul.mubr.f32.gmra.mrb[0].mxu0 %v1264
        %v1404 = vpop.f32.mrb[0].mxu0
        %v1405 = vadd.f32 %v1292, %v1404
        %v1406 = vpop.f32.mrb[0].mxu0
        %1407 = vmatprep.mubr.f32.mxu0 0.0
        %1408 = vmatmul.mubr.f32.gmra.mrb[0].mxu0 %v1265
        %v1409 = vpop.f32.mrb[0].mxu0
        %v1410 = vadd.f32 %v1292, %v1409
        %v1411 = vpop.f32.mrb[0].mxu0
        %1412 = vmatprep.mubr.f32.mxu0 0.0
        %1413 = vmatmul.mubr.f32.gmra.mrb[0].mxu0 %v1266
        %v1414 = vpop.f32.mrb[0].mxu0
        %v1415 = vadd.f32 %v1292, %v1414
        %v1416 = vpop.f32.mrb[0].mxu0
        %1417 = vmatprep.mubr.f32.mxu0 0.0
        %1418 = vmatmul.mubr.f32.gmra.mrb[0].mxu0 %v1267
        %v1419 = vpop.f32.mrb[0].mxu0
        %v1420 = vadd.f32 %v1292, %v1419
        %v1421 = vpop.f32.mrb[0].mxu0
        %1422 = vmatprep.mubr.f32.mxu0 0.0
        %1423 = vmatmul.mubr.f32.gmra.mrb[0].mxu0 %v1268
        %v1424 = vpop.f32.mrb[0].mxu0
        %v1425 = vadd.f32 %v1292, %v1424
        %v1426 = vpop.f32.mrb[0].mxu0
        %1427 = vmatprep.mubr.f32.mxu0 0.0
        %1428 = vmatmul.mubr.f32.gmra.mrb[0].mxu0 %v1269
        %v1429 = vpop.f32.mrb[0].mxu0
        %v1430 = vadd.f32 %v1292, %v1429
        %v1431 = vpop.f32.mrb[0].mxu0
        %1432 = vmatprep.mubr.f32.mxu0 0.0
        %1433 = vmatmul.mubr.f32.gmra.mrb[0].mxu0 %v1270
        %v1434 = vpop.f32.mrb[0].mxu0
        %v1435 = vadd.f32 %v1292, %v1434
        %v1436 = vpop.f32.mrb[0].mxu0
        %1437 = vdwg.mxu0
        %v1438 = vmul.f32 %v1360, 100.0
        %v1439 = vmul.f32 %v1365, 100.0
        %v1440 = vmul.f32 %v1370, 100.0
        %v1441 = vmul.f32 %v1375, 100.0
        %v1442 = vmul.f32 %v1380, 100.0
        %v1443 = vmul.f32 %v1385, 100.0
        %v1444 = vmul.f32 %v1390, 100.0
        %v1445 = vmul.f32 %v1395, 100.0
        %v1446 = vmul.f32 %v1400, 100.0
        %v1447 = vmul.f32 %v1405, 100.0
        %v1448 = vmul.f32 %v1410, 100.0
        %v1449 = vmul.f32 %v1415, 100.0
        %v1450 = vmul.f32 %v1420, 100.0
        %v1451 = vmul.f32 %v1425, 100.0
        %v1452 = vmul.f32 %v1430, 100.0
        %v1453 = vmul.f32 %v1435, 100.0
        %vm1454 = vcmp.gt.f32.partialorder %v1438, 20.0
        %vm1455 = vcmp.gt.f32.partialorder %v1439, 20.0
        %vm1456 = vcmp.gt.f32.partialorder %v1440, 20.0
        %vm1457 = vcmp.gt.f32.partialorder %v1441, 20.0
        %vm1458 = vcmp.gt.f32.partialorder %v1442, 20.0
        %vm1459 = vcmp.gt.f32.partialorder %v1443, 20.0
        %vm1460 = vcmp.gt.f32.partialorder %v1444, 20.0
        %vm1461 = vcmp.gt.f32.partialorder %v1445, 20.0
        %vm1462 = vcmp.gt.f32.partialorder %v1446, 20.0
        %vm1463 = vcmp.gt.f32.partialorder %v1447, 20.0
        %vm1464 = vcmp.gt.f32.partialorder %v1448, 20.0
        %vm1465 = vcmp.gt.f32.partialorder %v1449, 20.0
        %vm1466 = vcmp.gt.f32.partialorder %v1450, 20.0
        %vm1467 = vcmp.gt.f32.partialorder %v1451, 20.0
        %vm1468 = vcmp.gt.f32.partialorder %v1452, 20.0
        %vm1469 = vcmp.gt.f32.partialorder %v1453, 20.0
        %v1470 = vmin.f32 %v1438, 20.0
        %v1471 = vmin.f32 %v1439, 20.0
        %v1472 = vmin.f32 %v1440, 20.0
        %v1473 = vmin.f32 %v1441, 20.0
        %v1474 = vmin.f32 %v1442, 20.0
        %v1475 = vmin.f32 %v1443, 20.0
        %v1476 = vmin.f32 %v1444, 20.0
        %v1477 = vmin.f32 %v1445, 20.0
        %v1478 = vmin.f32 %v1446, 20.0
        %v1479 = vmin.f32 %v1447, 20.0
        %v1480 = vmin.f32 %v1448, 20.0
        %v1481 = vmin.f32 %v1449, 20.0
        %v1482 = vmin.f32 %v1450, 20.0
        %v1483 = vmin.f32 %v1451, 20.0
        %v1484 = vmin.f32 %v1452, 20.0
        %v1485 = vmin.f32 %v1453, 20.0
        %v1486 = vmul.f32 %v1470, 1.442695
        %v1487 = vpow.pop %v1486
        %v1488 = vmul.f32 %v1471, 1.442695
        %v1489 = vpow.pop %v1488
        %v1490 = vmul.f32 %v1472, 1.442695
        %v1491 = vpow.pop %v1490
        %v1492 = vmul.f32 %v1473, 1.442695
        %v1493 = vpow.pop %v1492
        %v1494 = vmul.f32 %v1474, 1.442695
        %v1495 = vpow.pop %v1494
        %v1496 = vmul.f32 %v1475, 1.442695
        %v1497 = vpow.pop %v1496
        %v1498 = vmul.f32 %v1476, 1.442695
        %v1499 = vpow.pop %v1498
        %v1500 = vmul.f32 %v1477, 1.442695
        %v1501 = vpow.pop %v1500
        %v1502 = vmul.f32 %v1478, 1.442695
        %v1503 = vpow.pop %v1502
        %v1504 = vmul.f32 %v1479, 1.442695
        %v1505 = vpow.pop %v1504
        %v1506 = vmul.f32 %v1480, 1.442695
        %v1507 = vpow.pop %v1506
        %v1508 = vmul.f32 %v1481, 1.442695
        %v1509 = vpow.pop %v1508
        %v1510 = vmul.f32 %v1482, 1.442695
        %v1511 = vpow.pop %v1510
        %v1512 = vmul.f32 %v1483, 1.442695
        %v1513 = vpow.pop %v1512
        %v1514 = vmul.f32 %v1484, 1.442695
        %v1515 = vpow.pop %v1514
        %v1516 = vmul.f32 %v1485, 1.442695
        %v1517 = vpow.pop %v1516
        %v1518 = vadd.f32 %v1487, 1.0
        %v1519 = vlog2.pop %v1518
        %v1520 = vmul.f32 %v1519, 0.6931472
        %v1521 = vmul.f32 -0.5, %v1487
        %v1522 = vadd.f32 %v1521, 1.0
        %v1523 = vmul.f32 %v1522, %v1487
        %v1524 = vand.u32 2147483647, %v1487
        %vm1525 = vcmp.lt.f32.partialorder %v1524, 0.0004427343
        %v1526 = vsel %vm1525, %v1523, %v1520
        %v1527 = vadd.f32 %v1489, 1.0
        %v1528 = vlog2.pop %v1527
        %v1529 = vmul.f32 %v1528, 0.6931472
        %v1530 = vmul.f32 -0.5, %v1489
        %v1531 = vadd.f32 %v1530, 1.0
        %v1532 = vmul.f32 %v1531, %v1489
        %v1533 = vand.u32 2147483647, %v1489
        %vm1534 = vcmp.lt.f32.partialorder %v1533, 0.0004427343
        %v1535 = vsel %vm1534, %v1532, %v1529
        %v1536 = vadd.f32 %v1491, 1.0
        %v1537 = vlog2.pop %v1536
        %v1538 = vmul.f32 %v1537, 0.6931472
        %v1539 = vmul.f32 -0.5, %v1491
        %v1540 = vadd.f32 %v1539, 1.0
        %v1541 = vmul.f32 %v1540, %v1491
        %v1542 = vand.u32 2147483647, %v1491
        %vm1543 = vcmp.lt.f32.partialorder %v1542, 0.0004427343
        %v1544 = vsel %vm1543, %v1541, %v1538
        %v1545 = vadd.f32 %v1493, 1.0
        %v1546 = vlog2.pop %v1545
        %v1547 = vmul.f32 %v1546, 0.6931472
        %v1548 = vmul.f32 -0.5, %v1493
        %v1549 = vadd.f32 %v1548, 1.0
        %v1550 = vmul.f32 %v1549, %v1493
        %v1551 = vand.u32 2147483647, %v1493
        %vm1552 = vcmp.lt.f32.partialorder %v1551, 0.0004427343
        %v1553 = vsel %vm1552, %v1550, %v1547
        %v1554 = vadd.f32 %v1495, 1.0
        %v1555 = vlog2.pop %v1554
        %v1556 = vmul.f32 %v1555, 0.6931472
        %v1557 = vmul.f32 -0.5, %v1495
        %v1558 = vadd.f32 %v1557, 1.0
        %v1559 = vmul.f32 %v1558, %v1495
        %v1560 = vand.u32 2147483647, %v1495
        %vm1561 = vcmp.lt.f32.partialorder %v1560, 0.0004427343
        %v1562 = vsel %vm1561, %v1559, %v1556
        %v1563 = vadd.f32 %v1497, 1.0
        %v1564 = vlog2.pop %v1563
        %v1565 = vmul.f32 %v1564, 0.6931472
        %v1566 = vmul.f32 -0.5, %v1497
        %v1567 = vadd.f32 %v1566, 1.0
        %v1568 = vmul.f32 %v1567, %v1497
        %v1569 = vand.u32 2147483647, %v1497
        %vm1570 = vcmp.lt.f32.partialorder %v1569, 0.0004427343
        %v1571 = vsel %vm1570, %v1568, %v1565
        %v1572 = vadd.f32 %v1499, 1.0
        %v1573 = vlog2.pop %v1572
        %v1574 = vmul.f32 %v1573, 0.6931472
        %v1575 = vmul.f32 -0.5, %v1499
        %v1576 = vadd.f32 %v1575, 1.0
        %v1577 = vmul.f32 %v1576, %v1499
        %v1578 = vand.u32 2147483647, %v1499
        %vm1579 = vcmp.lt.f32.partialorder %v1578, 0.0004427343
        %v1580 = vsel %vm1579, %v1577, %v1574
        %v1581 = vadd.f32 %v1501, 1.0
        %v1582 = vlog2.pop %v1581
        %v1583 = vmul.f32 %v1582, 0.6931472
        %v1584 = vmul.f32 -0.5, %v1501
        %v1585 = vadd.f32 %v1584, 1.0
        %v1586 = vmul.f32 %v1585, %v1501
        %v1587 = vand.u32 2147483647, %v1501
        %vm1588 = vcmp.lt.f32.partialorder %v1587, 0.0004427343
        %v1589 = vsel %vm1588, %v1586, %v1583
        %v1590 = vadd.f32 %v1503, 1.0
        %v1591 = vlog2.pop %v1590
        %v1592 = vmul.f32 %v1591, 0.6931472
        %v1593 = vmul.f32 -0.5, %v1503
        %v1594 = vadd.f32 %v1593, 1.0
        %v1595 = vmul.f32 %v1594, %v1503
        %v1596 = vand.u32 2147483647, %v1503
        %vm1597 = vcmp.lt.f32.partialorder %v1596, 0.0004427343
        %v1598 = vsel %vm1597, %v1595, %v1592
        %v1599 = vadd.f32 %v1505, 1.0
        %v1600 = vlog2.pop %v1599
        %v1601 = vmul.f32 %v1600, 0.6931472
        %v1602 = vmul.f32 -0.5, %v1505
        %v1603 = vadd.f32 %v1602, 1.0
        %v1604 = vmul.f32 %v1603, %v1505
        %v1605 = vand.u32 2147483647, %v1505
        %vm1606 = vcmp.lt.f32.partialorder %v1605, 0.0004427343
        %v1607 = vsel %vm1606, %v1604, %v1601
        %v1608 = vadd.f32 %v1507, 1.0
        %v1609 = vlog2.pop %v1608
        %v1610 = vmul.f32 %v1609, 0.6931472
        %v1611 = vmul.f32 -0.5, %v1507
        %v1612 = vadd.f32 %v1611, 1.0
        %v1613 = vmul.f32 %v1612, %v1507
        %v1614 = vand.u32 2147483647, %v1507
        %vm1615 = vcmp.lt.f32.partialorder %v1614, 0.0004427343
        %v1616 = vsel %vm1615, %v1613, %v1610
        %v1617 = vadd.f32 %v1509, 1.0
        %v1618 = vlog2.pop %v1617
        %v1619 = vmul.f32 %v1618, 0.6931472
        %v1620 = vmul.f32 -0.5, %v1509
        %v1621 = vadd.f32 %v1620, 1.0
        %v1622 = vmul.f32 %v1621, %v1509
        %v1623 = vand.u32 2147483647, %v1509
        %vm1624 = vcmp.lt.f32.partialorder %v1623, 0.0004427343
        %v1625 = vsel %vm1624, %v1622, %v1619
        %v1626 = vadd.f32 %v1511, 1.0
        %v1627 = vlog2.pop %v1626
        %v1628 = vmul.f32 %v1627, 0.6931472
        %v1629 = vmul.f32 -0.5, %v1511
        %v1630 = vadd.f32 %v1629, 1.0
        %v1631 = vmul.f32 %v1630, %v1511
        %v1632 = vand.u32 2147483647, %v1511
        %vm1633 = vcmp.lt.f32.partialorder %v1632, 0.0004427343
        %v1634 = vsel %vm1633, %v1631, %v1628
        %v1635 = vadd.f32 %v1513, 1.0
        %v1636 = vlog2.pop %v1635
        %v1637 = vmul.f32 %v1636, 0.6931472
        %v1638 = vmul.f32 -0.5, %v1513
        %v1639 = vadd.f32 %v1638, 1.0
        %v1640 = vmul.f32 %v1639, %v1513
        %v1641 = vand.u32 2147483647, %v1513
        %vm1642 = vcmp.lt.f32.partialorder %v1641, 0.0004427343
        %v1643 = vsel %vm1642, %v1640, %v1637
        %v1644 = vadd.f32 %v1515, 1.0
        %v1645 = vlog2.pop %v1644
        %v1646 = vmul.f32 %v1645, 0.6931472
        %v1647 = vmul.f32 -0.5, %v1515
        %v1648 = vadd.f32 %v1647, 1.0
        %v1649 = vmul.f32 %v1648, %v1515
        %v1650 = vand.u32 2147483647, %v1515
        %vm1651 = vcmp.lt.f32.partialorder %v1650, 0.0004427343
        %v1652 = vsel %vm1651, %v1649, %v1646
        %v1653 = vadd.f32 %v1517, 1.0
        %v1654 = vlog2.pop %v1653
        %v1655 = vmul.f32 %v1654, 0.6931472
        %v1656 = vmul.f32 -0.5, %v1517
        %v1657 = vadd.f32 %v1656, 1.0
        %v1658 = vmul.f32 %v1657, %v1517
        %v1659 = vand.u32 2147483647, %v1517
        %vm1660 = vcmp.lt.f32.partialorder %v1659, 0.0004427343
        %v1661 = vsel %vm1660, %v1658, %v1655
        %v1662 = vmul.f32 %v1526, %v816
        %v1663 = vmul.f32 %v1535, %v816
        %v1664 = vmul.f32 %v1544, %v816
        %v1665 = vmul.f32 %v1553, %v816
        %v1666 = vmul.f32 %v1562, %v816
        %v1667 = vmul.f32 %v1571, %v816
        %v1668 = vmul.f32 %v1580, %v816
        %v1669 = vmul.f32 %v1589, %v816
        %v1670 = vmul.f32 %v1598, %v816
        %v1671 = vmul.f32 %v1607, %v816
        %v1672 = vmul.f32 %v1616, %v816
        %v1673 = vmul.f32 %v1625, %v816
        %v1674 = vmul.f32 %v1634, %v816
        %v1675 = vmul.f32 %v1643, %v816
        %v1676 = vmul.f32 %v1652, %v816
        %v1677 = vmul.f32 %v1661, %v816
        %v1678 = vsel %vm1454, %v1360, %v1662
        %v1679 = vsel %vm1455, %v1365, %v1663
        %v1680 = vsel %vm1456, %v1370, %v1664
        %v1681 = vsel %vm1457, %v1375, %v1665
        %v1682 = vsel %vm1458, %v1380, %v1666
        %v1683 = vsel %vm1459, %v1385, %v1667
        %v1684 = vsel %vm1460, %v1390, %v1668
        %v1685 = vsel %vm1461, %v1395, %v1669
        %v1686 = vsel %vm1462, %v1400, %v1670
        %v1687 = vsel %vm1463, %v1405, %v1671
        %v1688 = vsel %vm1464, %v1410, %v1672
        %v1689 = vsel %vm1465, %v1415, %v1673
        %v1690 = vsel %vm1466, %v1420, %v1674
        %v1691 = vsel %vm1467, %v1425, %v1675
        %v1692 = vsel %vm1468, %v1430, %v1676
        %v1693 = vsel %vm1469, %v1435, %v1677
        %s1694 = scalar_lea.vmem [#allocation2], 256
        %v1695 = vld [vmem:[%s1694] sm:$0xff]
        %v1696 = vld [vmem:[%s1694 + $0x8] sm:$0xff]
        %v1697 = vld [vmem:[%s1694 + $0x10] sm:$0xff]
        %v1698 = vld [vmem:[%s1694 + $0x18] sm:$0xff]
        %v1699 = vld [vmem:[%s1694 + $0x20] sm:$0xff]
        %v1700 = vld [vmem:[%s1694 + $0x28] sm:$0xff]
        %v1701 = vld [vmem:[%s1694 + $0x30] sm:$0xff]
        %v1702 = vld [vmem:[%s1694 + $0x38] sm:$0xff]
        %v1703 = vld [vmem:[%s1694 + $0x40] sm:$0xff]
        %v1704 = vld [vmem:[%s1694 + $0x48] sm:$0xff]
        %v1705 = vld [vmem:[%s1694 + $0x50] sm:$0xff]
        %v1706 = vld [vmem:[%s1694 + $0x58] sm:$0xff]
        %v1707 = vld [vmem:[%s1694 + $0x60] sm:$0xff]
        %v1708 = vld [vmem:[%s1694 + $0x68] sm:$0xff]
        %v1709 = vld [vmem:[%s1694 + $0x70] sm:$0xff]
        %v1710 = vld [vmem:[%s1694 + $0x78] sm:$0xff]
        %v1711 = vld [vmem:[%s4 + $0x3] sm:$0x1]
        %v1712 = vlaneseq
        %v1713 = vshrl.u32 %v1712, 7
        %v1714 = vsub.s32 0, %v1713
        %v1715 = vrot.slane %v1711, %v1714
        %1716 = vmatprep.subr.mxu0 0.0
        %1717 = vmatpush1.msra.mxu0 %v1695
        %1718 = vmatprep.subr.mxu0 0.0
        %1719 = vmatpush1.msra.mxu0 %v1696
        %1720 = vmatprep.subr.mxu0 0.0
        %1721 = vmatpush1.msra.mxu0 %v1697
        %1722 = vmatprep.subr.mxu0 0.0
        %1723 = vmatpush1.msra.mxu0 %v1698
        %1724 = vmatprep.subr.mxu0 0.0
        %1725 = vmatpush1.msra.mxu0 %v1699
        %1726 = vmatprep.subr.mxu0 0.0
        %1727 = vmatpush1.msra.mxu0 %v1700
        %1728 = vmatprep.subr.mxu0 0.0
        %1729 = vmatpush1.msra.mxu0 %v1701
        %1730 = vmatprep.subr.mxu0 0.0
        %1731 = vmatpush1.msra.mxu0 %v1702
        %1732 = vmatprep.subr.mxu0 0.0
        %1733 = vmatpush1.msra.mxu0 %v1703
        %1734 = vmatprep.subr.mxu0 0.0
        %1735 = vmatpush1.msra.mxu0 %v1704
        %1736 = vmatprep.subr.mxu0 0.0
        %1737 = vmatpush1.msra.mxu0 %v1705
        %1738 = vmatprep.subr.mxu0 0.0
        %1739 = vmatpush1.msra.mxu0 %v1706
        %1740 = vmatprep.subr.mxu0 0.0
        %1741 = vmatpush1.msra.mxu0 %v1707
        %1742 = vmatprep.subr.mxu0 0.0
        %1743 = vmatpush1.msra.mxu0 %v1708
        %1744 = vmatprep.subr.mxu0 0.0
        %1745 = vmatpush1.msra.mxu0 %v1709
        %1746 = vmatprep.subr.mxu0 0.0
        %1747 = vmatpush1.msra.mxu0 %v1710
        %1748 = vmatprep.subr.mxu0 0.0
        %1749 = vmatpush1.msra.mxu0 0.0
        %1750 = vmatprep.subr.mxu0 0.0
        %1751 = vmatpush1.msra.mxu0 0.0
        %1752 = vmatprep.subr.mxu0 0.0
        %1753 = vmatpush1.msra.mxu0 0.0
        %1754 = vmatprep.subr.mxu0 0.0
        %1755 = vmatpush1.msra.mxu0 0.0
        %1756 = vmatprep.subr.mxu0 0.0
        %1757 = vmatpush1.msra.mxu0 0.0
        %1758 = vmatprep.subr.mxu0 0.0
        %1759 = vmatpush1.msra.mxu0 0.0
        %1760 = vmatprep.subr.mxu0 0.0
        %1761 = vmatpush1.msra.mxu0 0.0
        %1762 = vmatprep.subr.mxu0 0.0
        %1763 = vmatpush1.msra.mxu0 0.0
        %1764 = vmatprep.subr.mxu0 0.0
        %1765 = vmatpush1.msra.mxu0 0.0
        %1766 = vmatprep.subr.mxu0 0.0
        %1767 = vmatpush1.msra.mxu0 0.0
        %1768 = vmatprep.subr.mxu0 0.0
        %1769 = vmatpush1.msra.mxu0 0.0
        %1770 = vmatprep.subr.mxu0 0.0
        %1771 = vmatpush1.msra.mxu0 0.0
        %1772 = vmatprep.subr.mxu0 0.0
        %1773 = vmatpush1.msra.mxu0 0.0
        %1774 = vmatprep.subr.mxu0 0.0
        %1775 = vmatpush1.msra.mxu0 0.0
        %1776 = vmatprep.subr.mxu0 0.0
        %1777 = vmatpush1.msra.mxu0 0.0
        %1778 = vmatprep.subr.mxu0 0.0
        %1779 = vmatpush1.msra.mxu0 0.0
        %1780 = vmatprep.mubr.f32.mxu0 0.0
        %1781 = vmatmul.mubr.f32.gmra.mrb[0].mxu0 %v1678
        %v1782 = vpop.f32.mrb[0].mxu0
        %v1783 = vadd.f32 %v1715, %v1782
        %v1784 = vpop.f32.mrb[0].mxu0
        %1785 = vmatprep.mubr.f32.mxu0 0.0
        %1786 = vmatmul.mubr.f32.gmra.mrb[0].mxu0 %v1679
        %v1787 = vpop.f32.mrb[0].mxu0
        %v1788 = vadd.f32 %v1715, %v1787
        %v1789 = vpop.f32.mrb[0].mxu0
        %1790 = vmatprep.mubr.f32.mxu0 0.0
        %1791 = vmatmul.mubr.f32.gmra.mrb[0].mxu0 %v1680
        %v1792 = vpop.f32.mrb[0].mxu0
        %v1793 = vadd.f32 %v1715, %v1792
        %v1794 = vpop.f32.mrb[0].mxu0
        %1795 = vmatprep.mubr.f32.mxu0 0.0
        %1796 = vmatmul.mubr.f32.gmra.mrb[0].mxu0 %v1681
        %v1797 = vpop.f32.mrb[0].mxu0
        %v1798 = vadd.f32 %v1715, %v1797
        %v1799 = vpop.f32.mrb[0].mxu0
        %1800 = vmatprep.mubr.f32.mxu0 0.0
        %1801 = vmatmul.mubr.f32.gmra.mrb[0].mxu0 %v1682
        %v1802 = vpop.f32.mrb[0].mxu0
        %v1803 = vadd.f32 %v1715, %v1802
        %v1804 = vpop.f32.mrb[0].mxu0
        %1805 = vmatprep.mubr.f32.mxu0 0.0
        %1806 = vmatmul.mubr.f32.gmra.mrb[0].mxu0 %v1683
        %v1807 = vpop.f32.mrb[0].mxu0
        %v1808 = vadd.f32 %v1715, %v1807
        %v1809 = vpop.f32.mrb[0].mxu0
        %1810 = vmatprep.mubr.f32.mxu0 0.0
        %1811 = vmatmul.mubr.f32.gmra.mrb[0].mxu0 %v1684
        %v1812 = vpop.f32.mrb[0].mxu0
        %v1813 = vadd.f32 %v1715, %v1812
        %v1814 = vpop.f32.mrb[0].mxu0
        %1815 = vmatprep.mubr.f32.mxu0 0.0
        %1816 = vmatmul.mubr.f32.gmra.mrb[0].mxu0 %v1685
        %v1817 = vpop.f32.mrb[0].mxu0
        %v1818 = vadd.f32 %v1715, %v1817
        %v1819 = vpop.f32.mrb[0].mxu0
        %1820 = vmatprep.mubr.f32.mxu0 0.0
        %1821 = vmatmul.mubr.f32.gmra.mrb[0].mxu0 %v1686
        %v1822 = vpop.f32.mrb[0].mxu0
        %v1823 = vadd.f32 %v1715, %v1822
        %v1824 = vpop.f32.mrb[0].mxu0
        %1825 = vmatprep.mubr.f32.mxu0 0.0
        %1826 = vmatmul.mubr.f32.gmra.mrb[0].mxu0 %v1687
        %v1827 = vpop.f32.mrb[0].mxu0
        %v1828 = vadd.f32 %v1715, %v1827
        %v1829 = vpop.f32.mrb[0].mxu0
        %1830 = vmatprep.mubr.f32.mxu0 0.0
        %1831 = vmatmul.mubr.f32.gmra.mrb[0].mxu0 %v1688
        %v1832 = vpop.f32.mrb[0].mxu0
        %v1833 = vadd.f32 %v1715, %v1832
        %v1834 = vpop.f32.mrb[0].mxu0
        %1835 = vmatprep.mubr.f32.mxu0 0.0
        %1836 = vmatmul.mubr.f32.gmra.mrb[0].mxu0 %v1689
        %v1837 = vpop.f32.mrb[0].mxu0
        %v1838 = vadd.f32 %v1715, %v1837
        %v1839 = vpop.f32.mrb[0].mxu0
        %1840 = vmatprep.mubr.f32.mxu0 0.0
        %1841 = vmatmul.mubr.f32.gmra.mrb[0].mxu0 %v1690
        %v1842 = vpop.f32.mrb[0].mxu0
        %v1843 = vadd.f32 %v1715, %v1842
        %v1844 = vpop.f32.mrb[0].mxu0
        %1845 = vmatprep.mubr.f32.mxu0 0.0
        %1846 = vmatmul.mubr.f32.gmra.mrb[0].mxu0 %v1691
        %v1847 = vpop.f32.mrb[0].mxu0
        %v1848 = vadd.f32 %v1715, %v1847
        %v1849 = vpop.f32.mrb[0].mxu0
        %1850 = vmatprep.mubr.f32.mxu0 0.0
        %1851 = vmatmul.mubr.f32.gmra.mrb[0].mxu0 %v1692
        %v1852 = vpop.f32.mrb[0].mxu0
        %v1853 = vadd.f32 %v1715, %v1852
        %v1854 = vpop.f32.mrb[0].mxu0
        %1855 = vmatprep.mubr.f32.mxu0 0.0
        %1856 = vmatmul.mubr.f32.gmra.mrb[0].mxu0 %v1693
        %v1857 = vpop.f32.mrb[0].mxu0
        %v1858 = vadd.f32 %v1715, %v1857
        %v1859 = vpop.f32.mrb[0].mxu0
        %1860 = vdwg.mxu0
        %v1861 = vmul.f32 %v1783, 100.0
        %v1862 = vmul.f32 %v1788, 100.0
        %v1863 = vmul.f32 %v1793, 100.0
        %v1864 = vmul.f32 %v1798, 100.0
        %v1865 = vmul.f32 %v1803, 100.0
        %v1866 = vmul.f32 %v1808, 100.0
        %v1867 = vmul.f32 %v1813, 100.0
        %v1868 = vmul.f32 %v1818, 100.0
        %v1869 = vmul.f32 %v1823, 100.0
        %v1870 = vmul.f32 %v1828, 100.0
        %v1871 = vmul.f32 %v1833, 100.0
        %v1872 = vmul.f32 %v1838, 100.0
        %v1873 = vmul.f32 %v1843, 100.0
        %v1874 = vmul.f32 %v1848, 100.0
        %v1875 = vmul.f32 %v1853, 100.0
        %v1876 = vmul.f32 %v1858, 100.0
        %vm1877 = vcmp.gt.f32.partialorder %v1861, 20.0
        %vm1878 = vcmp.gt.f32.partialorder %v1862, 20.0
        %vm1879 = vcmp.gt.f32.partialorder %v1863, 20.0
        %vm1880 = vcmp.gt.f32.partialorder %v1864, 20.0
        %vm1881 = vcmp.gt.f32.partialorder %v1865, 20.0
        %vm1882 = vcmp.gt.f32.partialorder %v1866, 20.0
        %vm1883 = vcmp.gt.f32.partialorder %v1867, 20.0
        %vm1884 = vcmp.gt.f32.partialorder %v1868, 20.0
        %vm1885 = vcmp.gt.f32.partialorder %v1869, 20.0
        %vm1886 = vcmp.gt.f32.partialorder %v1870, 20.0
        %vm1887 = vcmp.gt.f32.partialorder %v1871, 20.0
        %vm1888 = vcmp.gt.f32.partialorder %v1872, 20.0
        %vm1889 = vcmp.gt.f32.partialorder %v1873, 20.0
        %vm1890 = vcmp.gt.f32.partialorder %v1874, 20.0
        %vm1891 = vcmp.gt.f32.partialorder %v1875, 20.0
        %vm1892 = vcmp.gt.f32.partialorder %v1876, 20.0
        %v1893 = vmin.f32 %v1861, 20.0
        %v1894 = vmin.f32 %v1862, 20.0
        %v1895 = vmin.f32 %v1863, 20.0
        %v1896 = vmin.f32 %v1864, 20.0
        %v1897 = vmin.f32 %v1865, 20.0
        %v1898 = vmin.f32 %v1866, 20.0
        %v1899 = vmin.f32 %v1867, 20.0
        %v1900 = vmin.f32 %v1868, 20.0
        %v1901 = vmin.f32 %v1869, 20.0
        %v1902 = vmin.f32 %v1870, 20.0
        %v1903 = vmin.f32 %v1871, 20.0
        %v1904 = vmin.f32 %v1872, 20.0
        %v1905 = vmin.f32 %v1873, 20.0
        %v1906 = vmin.f32 %v1874, 20.0
        %v1907 = vmin.f32 %v1875, 20.0
        %v1908 = vmin.f32 %v1876, 20.0
        %v1909 = vmul.f32 %v1893, 1.442695
        %v1910 = vpow.pop %v1909
        %v1911 = vmul.f32 %v1894, 1.442695
        %v1912 = vpow.pop %v1911
        %v1913 = vmul.f32 %v1895, 1.442695
        %v1914 = vpow.pop %v1913
        %v1915 = vmul.f32 %v1896, 1.442695
        %v1916 = vpow.pop %v1915
        %v1917 = vmul.f32 %v1897, 1.442695
        %v1918 = vpow.pop %v1917
        %v1919 = vmul.f32 %v1898, 1.442695
        %v1920 = vpow.pop %v1919
        %v1921 = vmul.f32 %v1899, 1.442695
        %v1922 = vpow.pop %v1921
        %v1923 = vmul.f32 %v1900, 1.442695
        %v1924 = vpow.pop %v1923
        %v1925 = vmul.f32 %v1901, 1.442695
        %v1926 = vpow.pop %v1925
        %v1927 = vmul.f32 %v1902, 1.442695
        %v1928 = vpow.pop %v1927
        %v1929 = vmul.f32 %v1903, 1.442695
        %v1930 = vpow.pop %v1929
        %v1931 = vmul.f32 %v1904, 1.442695
        %v1932 = vpow.pop %v1931
        %v1933 = vmul.f32 %v1905, 1.442695
        %v1934 = vpow.pop %v1933
        %v1935 = vmul.f32 %v1906, 1.442695
        %v1936 = vpow.pop %v1935
        %v1937 = vmul.f32 %v1907, 1.442695
        %v1938 = vpow.pop %v1937
        %v1939 = vmul.f32 %v1908, 1.442695
        %v1940 = vpow.pop %v1939
        %v1941 = vadd.f32 %v1910, 1.0
        %v1942 = vlog2.pop %v1941
        %v1943 = vmul.f32 %v1942, 0.6931472
        %v1944 = vmul.f32 -0.5, %v1910
        %v1945 = vadd.f32 %v1944, 1.0
        %v1946 = vmul.f32 %v1945, %v1910
        %v1947 = vand.u32 2147483647, %v1910
        %vm1948 = vcmp.lt.f32.partialorder %v1947, 0.0004427343
        %v1949 = vsel %vm1948, %v1946, %v1943
        %v1950 = vadd.f32 %v1912, 1.0
        %v1951 = vlog2.pop %v1950
        %v1952 = vmul.f32 %v1951, 0.6931472
        %v1953 = vmul.f32 -0.5, %v1912
        %v1954 = vadd.f32 %v1953, 1.0
        %v1955 = vmul.f32 %v1954, %v1912
        %v1956 = vand.u32 2147483647, %v1912
        %vm1957 = vcmp.lt.f32.partialorder %v1956, 0.0004427343
        %v1958 = vsel %vm1957, %v1955, %v1952
        %v1959 = vadd.f32 %v1914, 1.0
        %v1960 = vlog2.pop %v1959
        %v1961 = vmul.f32 %v1960, 0.6931472
        %v1962 = vmul.f32 -0.5, %v1914
        %v1963 = vadd.f32 %v1962, 1.0
        %v1964 = vmul.f32 %v1963, %v1914
        %v1965 = vand.u32 2147483647, %v1914
        %vm1966 = vcmp.lt.f32.partialorder %v1965, 0.0004427343
        %v1967 = vsel %vm1966, %v1964, %v1961
        %v1968 = vadd.f32 %v1916, 1.0
        %v1969 = vlog2.pop %v1968
        %v1970 = vmul.f32 %v1969, 0.6931472
        %v1971 = vmul.f32 -0.5, %v1916
        %v1972 = vadd.f32 %v1971, 1.0
        %v1973 = vmul.f32 %v1972, %v1916
        %v1974 = vand.u32 2147483647, %v1916
        %vm1975 = vcmp.lt.f32.partialorder %v1974, 0.0004427343
        %v1976 = vsel %vm1975, %v1973, %v1970
        %v1977 = vadd.f32 %v1918, 1.0
        %v1978 = vlog2.pop %v1977
        %v1979 = vmul.f32 %v1978, 0.6931472
        %v1980 = vmul.f32 -0.5, %v1918
        %v1981 = vadd.f32 %v1980, 1.0
        %v1982 = vmul.f32 %v1981, %v1918
        %v1983 = vand.u32 2147483647, %v1918
        %vm1984 = vcmp.lt.f32.partialorder %v1983, 0.0004427343
        %v1985 = vsel %vm1984, %v1982, %v1979
        %v1986 = vadd.f32 %v1920, 1.0
        %v1987 = vlog2.pop %v1986
        %v1988 = vmul.f32 %v1987, 0.6931472
        %v1989 = vmul.f32 -0.5, %v1920
        %v1990 = vadd.f32 %v1989, 1.0
        %v1991 = vmul.f32 %v1990, %v1920
        %v1992 = vand.u32 2147483647, %v1920
        %vm1993 = vcmp.lt.f32.partialorder %v1992, 0.0004427343
        %v1994 = vsel %vm1993, %v1991, %v1988
        %v1995 = vadd.f32 %v1922, 1.0
        %v1996 = vlog2.pop %v1995
        %v1997 = vmul.f32 %v1996, 0.6931472
        %v1998 = vmul.f32 -0.5, %v1922
        %v1999 = vadd.f32 %v1998, 1.0
        %v2000 = vmul.f32 %v1999, %v1922
        %v2001 = vand.u32 2147483647, %v1922
        %vm2002 = vcmp.lt.f32.partialorder %v2001, 0.0004427343
        %v2003 = vsel %vm2002, %v2000, %v1997
        %v2004 = vadd.f32 %v1924, 1.0
        %v2005 = vlog2.pop %v2004
        %v2006 = vmul.f32 %v2005, 0.6931472
        %v2007 = vmul.f32 -0.5, %v1924
        %v2008 = vadd.f32 %v2007, 1.0
        %v2009 = vmul.f32 %v2008, %v1924
        %v2010 = vand.u32 2147483647, %v1924
        %vm2011 = vcmp.lt.f32.partialorder %v2010, 0.0004427343
        %v2012 = vsel %vm2011, %v2009, %v2006
        %v2013 = vadd.f32 %v1926, 1.0
        %v2014 = vlog2.pop %v2013
        %v2015 = vmul.f32 %v2014, 0.6931472
        %v2016 = vmul.f32 -0.5, %v1926
        %v2017 = vadd.f32 %v2016, 1.0
        %v2018 = vmul.f32 %v2017, %v1926
        %v2019 = vand.u32 2147483647, %v1926
        %vm2020 = vcmp.lt.f32.partialorder %v2019, 0.0004427343
        %v2021 = vsel %vm2020, %v2018, %v2015
        %v2022 = vadd.f32 %v1928, 1.0
        %v2023 = vlog2.pop %v2022
        %v2024 = vmul.f32 %v2023, 0.6931472
        %v2025 = vmul.f32 -0.5, %v1928
        %v2026 = vadd.f32 %v2025, 1.0
        %v2027 = vmul.f32 %v2026, %v1928
        %v2028 = vand.u32 2147483647, %v1928
        %vm2029 = vcmp.lt.f32.partialorder %v2028, 0.0004427343
        %v2030 = vsel %vm2029, %v2027, %v2024
        %v2031 = vadd.f32 %v1930, 1.0
        %v2032 = vlog2.pop %v2031
        %v2033 = vmul.f32 %v2032, 0.6931472
        %v2034 = vmul.f32 -0.5, %v1930
        %v2035 = vadd.f32 %v2034, 1.0
        %v2036 = vmul.f32 %v2035, %v1930
        %v2037 = vand.u32 2147483647, %v1930
        %vm2038 = vcmp.lt.f32.partialorder %v2037, 0.0004427343
        %v2039 = vsel %vm2038, %v2036, %v2033
        %v2040 = vadd.f32 %v1932, 1.0
        %v2041 = vlog2.pop %v2040
        %v2042 = vmul.f32 %v2041, 0.6931472
        %v2043 = vmul.f32 -0.5, %v1932
        %v2044 = vadd.f32 %v2043, 1.0
        %v2045 = vmul.f32 %v2044, %v1932
        %v2046 = vand.u32 2147483647, %v1932
        %vm2047 = vcmp.lt.f32.partialorder %v2046, 0.0004427343
        %v2048 = vsel %vm2047, %v2045, %v2042
        %v2049 = vadd.f32 %v1934, 1.0
        %v2050 = vlog2.pop %v2049
        %v2051 = vmul.f32 %v2050, 0.6931472
        %v2052 = vmul.f32 -0.5, %v1934
        %v2053 = vadd.f32 %v2052, 1.0
        %v2054 = vmul.f32 %v2053, %v1934
        %v2055 = vand.u32 2147483647, %v1934
        %vm2056 = vcmp.lt.f32.partialorder %v2055, 0.0004427343
        %v2057 = vsel %vm2056, %v2054, %v2051
        %v2058 = vadd.f32 %v1936, 1.0
        %v2059 = vlog2.pop %v2058
        %v2060 = vmul.f32 %v2059, 0.6931472
        %v2061 = vmul.f32 -0.5, %v1936
        %v2062 = vadd.f32 %v2061, 1.0
        %v2063 = vmul.f32 %v2062, %v1936
        %v2064 = vand.u32 2147483647, %v1936
        %vm2065 = vcmp.lt.f32.partialorder %v2064, 0.0004427343
        %v2066 = vsel %vm2065, %v2063, %v2060
        %v2067 = vadd.f32 %v1938, 1.0
        %v2068 = vlog2.pop %v2067
        %v2069 = vmul.f32 %v2068, 0.6931472
        %v2070 = vmul.f32 -0.5, %v1938
        %v2071 = vadd.f32 %v2070, 1.0
        %v2072 = vmul.f32 %v2071, %v1938
        %v2073 = vand.u32 2147483647, %v1938
        %vm2074 = vcmp.lt.f32.partialorder %v2073, 0.0004427343
        %v2075 = vsel %vm2074, %v2072, %v2069
        %v2076 = vadd.f32 %v1940, 1.0
        %v2077 = vlog2.pop %v2076
        %v2078 = vmul.f32 %v2077, 0.6931472
        %v2079 = vmul.f32 -0.5, %v1940
        %v2080 = vadd.f32 %v2079, 1.0
        %v2081 = vmul.f32 %v2080, %v1940
        %v2082 = vand.u32 2147483647, %v1940
        %vm2083 = vcmp.lt.f32.partialorder %v2082, 0.0004427343
        %v2084 = vsel %vm2083, %v2081, %v2078
        %v2085 = vmul.f32 %v1949, %v816
        %v2086 = vmul.f32 %v1958, %v816
        %v2087 = vmul.f32 %v1967, %v816
        %v2088 = vmul.f32 %v1976, %v816
        %v2089 = vmul.f32 %v1985, %v816
        %v2090 = vmul.f32 %v1994, %v816
        %v2091 = vmul.f32 %v2003, %v816
        %v2092 = vmul.f32 %v2012, %v816
        %v2093 = vmul.f32 %v2021, %v816
        %v2094 = vmul.f32 %v2030, %v816
        %v2095 = vmul.f32 %v2039, %v816
        %v2096 = vmul.f32 %v2048, %v816
        %v2097 = vmul.f32 %v2057, %v816
        %v2098 = vmul.f32 %v2066, %v816
        %v2099 = vmul.f32 %v2075, %v816
        %v2100 = vmul.f32 %v2084, %v816
        %v2101 = vsel %vm1877, %v1783, %v2085
        %v2102 = vsel %vm1878, %v1788, %v2086
        %v2103 = vsel %vm1879, %v1793, %v2087
        %v2104 = vsel %vm1880, %v1798, %v2088
        %v2105 = vsel %vm1881, %v1803, %v2089
        %v2106 = vsel %vm1882, %v1808, %v2090
        %v2107 = vsel %vm1883, %v1813, %v2091
        %v2108 = vsel %vm1884, %v1818, %v2092
        %v2109 = vsel %vm1885, %v1823, %v2093
        %v2110 = vsel %vm1886, %v1828, %v2094
        %v2111 = vsel %vm1887, %v1833, %v2095
        %v2112 = vsel %vm1888, %v1838, %v2096
        %v2113 = vsel %vm1889, %v1843, %v2097
        %v2114 = vsel %vm1890, %v1848, %v2098
        %v2115 = vsel %vm1891, %v1853, %v2099
        %v2116 = vsel %vm1892, %v1858, %v2100
        %s2117 = scalar_lea.vmem [#allocation2], 384
        %v2118 = vld [vmem:[%s2117] sm:$0xff]
        %v2119 = vld [vmem:[%s2117 + $0x8] sm:$0xff]
        %v2120 = vld [vmem:[%s2117 + $0x10] sm:$0xff]
        %v2121 = vld [vmem:[%s2117 + $0x18] sm:$0xff]
        %v2122 = vld [vmem:[%s2117 + $0x20] sm:$0xff]
        %v2123 = vld [vmem:[%s2117 + $0x28] sm:$0xff]
        %v2124 = vld [vmem:[%s2117 + $0x30] sm:$0xff]
        %v2125 = vld [vmem:[%s2117 + $0x38] sm:$0xff]
        %v2126 = vld [vmem:[%s2117 + $0x40] sm:$0xff]
        %v2127 = vld [vmem:[%s2117 + $0x48] sm:$0xff]
        %v2128 = vld [vmem:[%s2117 + $0x50] sm:$0xff]
        %v2129 = vld [vmem:[%s2117 + $0x58] sm:$0xff]
        %v2130 = vld [vmem:[%s2117 + $0x60] sm:$0xff]
        %v2131 = vld [vmem:[%s2117 + $0x68] sm:$0xff]
        %v2132 = vld [vmem:[%s2117 + $0x70] sm:$0xff]
        %v2133 = vld [vmem:[%s2117 + $0x78] sm:$0xff]
        %s2134 = scalar_lea.vmem %s2, 16
        %v2135 = vld [vmem:[%s2134] sm:$0xff]
        %v2136 = vld [vmem:[%s2134 + $0x8] sm:$0xf]
        %v2138 = vsel %vm422, %v2136, 0
        %2140 = vmatprep.subr.mxu0 0.0
        %2141 = vmatpush1.msra.mxu0 %v2135
        %2142 = vmatprep.subr.mxu0 0.0
        %2143 = vmatpush1.msra.mxu0 %v2138
        %2144 = vmatprep.subr.mxu0 0.0
        %2145 = vmatpush1.msra.mxu0 0.0
        %2146 = vmatprep.subr.mxu0 0.0
        %2147 = vmatpush1.msra.mxu0 0.0
        %2148 = vmatprep.subr.mxu0 0.0
        %2149 = vmatpush1.msra.mxu0 0.0
        %2150 = vmatprep.subr.mxu0 0.0
        %2151 = vmatpush1.msra.mxu0 0.0
        %2152 = vmatprep.subr.mxu0 0.0
        %2153 = vmatpush1.msra.mxu0 0.0
        %2154 = vmatprep.subr.mxu0 0.0
        %2155 = vmatpush1.msra.mxu0 0.0
        %2156 = vmatprep.subr.mxu0 0.0
        %2157 = vmatpush1.msra.mxu0 0.0
        %2158 = vmatprep.subr.mxu0 0.0
        %2159 = vmatpush1.msra.mxu0 0.0
        %2160 = vmatprep.subr.mxu0 0.0
        %2161 = vmatpush1.msra.mxu0 0.0
        %2162 = vmatprep.subr.mxu0 0.0
        %2163 = vmatpush1.msra.mxu0 0.0
        %2164 = vmatprep.subr.mxu0 0.0
        %2165 = vmatpush1.msra.mxu0 0.0
        %2166 = vmatprep.subr.mxu0 0.0
        %2167 = vmatpush1.msra.mxu0 0.0
        %2168 = vmatprep.subr.mxu0 0.0
        %2169 = vmatpush1.msra.mxu0 0.0
        %2170 = vmatprep.subr.mxu0 0.0
        %2171 = vmatpush1.msra.mxu0 0.0
        %2172 = vmatprep.subr.mxu0 0.0
        %2173 = vmatpush1.msra.mxu0 0.0
        %2174 = vmatprep.subr.mxu0 0.0
        %2175 = vmatpush1.msra.mxu0 0.0
        %2176 = vmatprep.subr.mxu0 0.0
        %2177 = vmatpush1.msra.mxu0 0.0
        %2178 = vmatprep.subr.mxu0 0.0
        %2179 = vmatpush1.msra.mxu0 0.0
        %2180 = vmatprep.subr.mxu0 0.0
        %2181 = vmatpush1.msra.mxu0 0.0
        %2182 = vmatprep.subr.mxu0 0.0
        %2183 = vmatpush1.msra.mxu0 0.0
        %2184 = vmatprep.subr.mxu0 0.0
        %2185 = vmatpush1.msra.mxu0 0.0
        %2186 = vmatprep.subr.mxu0 0.0
        %2187 = vmatpush1.msra.mxu0 0.0
        %2188 = vmatprep.subr.mxu0 0.0
        %2189 = vmatpush1.msra.mxu0 0.0
        %2190 = vmatprep.subr.mxu0 0.0
        %2191 = vmatpush1.msra.mxu0 0.0
        %2192 = vmatprep.subr.mxu0 0.0
        %2193 = vmatpush1.msra.mxu0 0.0
        %2194 = vmatprep.subr.mxu0 0.0
        %2195 = vmatpush1.msra.mxu0 0.0
        %2196 = vmatprep.subr.mxu0 0.0
        %2197 = vmatpush1.msra.mxu0 0.0
        %2198 = vmatprep.subr.mxu0 0.0
        %2199 = vmatpush1.msra.mxu0 0.0
        %2200 = vmatprep.subr.mxu0 0.0
        %2201 = vmatpush1.msra.mxu0 0.0
        %2202 = vmatprep.subr.mxu0 0.0
        %2203 = vmatpush1.msra.mxu0 0.0
        %2204 = vmatprep.mubr.f32.mxu0 0.0
        %2205 = vmatmul.mubr.f32.gmra.mrb[0].mxu0 %v375
        %v2206 = vpop.f32.mrb[0].mxu0
        %v2207 = vadd.f32 0.0, %v2206
        %v2208 = vpop.f32.mrb[0].mxu0
        %2209 = vmatprep.mubr.f32.mxu0 0.0
        %2210 = vmatmul.mubr.f32.gmra.mrb[0].mxu0 %v378
        %v2211 = vpop.f32.mrb[0].mxu0
        %v2212 = vadd.f32 0.0, %v2211
        %v2213 = vpop.f32.mrb[0].mxu0
        %2214 = vmatprep.mubr.f32.mxu0 0.0
        %2215 = vmatmul.mubr.f32.gmra.mrb[0].mxu0 %v381
        %v2216 = vpop.f32.mrb[0].mxu0
        %v2217 = vadd.f32 0.0, %v2216
        %v2218 = vpop.f32.mrb[0].mxu0
        %2219 = vmatprep.mubr.f32.mxu0 0.0
        %2220 = vmatmul.mubr.f32.gmra.mrb[0].mxu0 %v384
        %v2221 = vpop.f32.mrb[0].mxu0
        %v2222 = vadd.f32 0.0, %v2221
        %v2223 = vpop.f32.mrb[0].mxu0
        %2224 = vmatprep.mubr.f32.mxu0 0.0
        %2225 = vmatmul.mubr.f32.gmra.mrb[0].mxu0 %v387
        %v2226 = vpop.f32.mrb[0].mxu0
        %v2227 = vadd.f32 0.0, %v2226
        %v2228 = vpop.f32.mrb[0].mxu0
        %2229 = vmatprep.mubr.f32.mxu0 0.0
        %2230 = vmatmul.mubr.f32.gmra.mrb[0].mxu0 %v390
        %v2231 = vpop.f32.mrb[0].mxu0
        %v2232 = vadd.f32 0.0, %v2231
        %v2233 = vpop.f32.mrb[0].mxu0
        %2234 = vmatprep.mubr.f32.mxu0 0.0
        %2235 = vmatmul.mubr.f32.gmra.mrb[0].mxu0 %v393
        %v2236 = vpop.f32.mrb[0].mxu0
        %v2237 = vadd.f32 0.0, %v2236
        %v2238 = vpop.f32.mrb[0].mxu0
        %2239 = vmatprep.mubr.f32.mxu0 0.0
        %2240 = vmatmul.mubr.f32.gmra.mrb[0].mxu0 %v396
        %v2241 = vpop.f32.mrb[0].mxu0
        %v2242 = vadd.f32 0.0, %v2241
        %v2243 = vpop.f32.mrb[0].mxu0
        %2244 = vmatprep.mubr.f32.mxu0 0.0
        %2245 = vmatmul.mubr.f32.gmra.mrb[0].mxu0 %v399
        %v2246 = vpop.f32.mrb[0].mxu0
        %v2247 = vadd.f32 0.0, %v2246
        %v2248 = vpop.f32.mrb[0].mxu0
        %2249 = vmatprep.mubr.f32.mxu0 0.0
        %2250 = vmatmul.mubr.f32.gmra.mrb[0].mxu0 %v402
        %v2251 = vpop.f32.mrb[0].mxu0
        %v2252 = vadd.f32 0.0, %v2251
        %v2253 = vpop.f32.mrb[0].mxu0
        %2254 = vmatprep.mubr.f32.mxu0 0.0
        %2255 = vmatmul.mubr.f32.gmra.mrb[0].mxu0 %v405
        %v2256 = vpop.f32.mrb[0].mxu0
        %v2257 = vadd.f32 0.0, %v2256
        %v2258 = vpop.f32.mrb[0].mxu0
        %2259 = vmatprep.mubr.f32.mxu0 0.0
        %2260 = vmatmul.mubr.f32.gmra.mrb[0].mxu0 %v408
        %v2261 = vpop.f32.mrb[0].mxu0
        %v2262 = vadd.f32 0.0, %v2261
        %v2263 = vpop.f32.mrb[0].mxu0
        %2264 = vmatprep.mubr.f32.mxu0 0.0
        %2265 = vmatmul.mubr.f32.gmra.mrb[0].mxu0 %v411
        %v2266 = vpop.f32.mrb[0].mxu0
        %v2267 = vadd.f32 0.0, %v2266
        %v2268 = vpop.f32.mrb[0].mxu0
        %2269 = vmatprep.mubr.f32.mxu0 0.0
        %2270 = vmatmul.mubr.f32.gmra.mrb[0].mxu0 %v414
        %v2271 = vpop.f32.mrb[0].mxu0
        %v2272 = vadd.f32 0.0, %v2271
        %v2273 = vpop.f32.mrb[0].mxu0
        %2274 = vmatprep.mubr.f32.mxu0 0.0
        %2275 = vmatmul.mubr.f32.gmra.mrb[0].mxu0 %v417
        %v2276 = vpop.f32.mrb[0].mxu0
        %v2277 = vadd.f32 0.0, %v2276
        %v2278 = vpop.f32.mrb[0].mxu0
        %2279 = vmatprep.mubr.f32.mxu0 0.0
        %2280 = vmatmul.mubr.f32.gmra.mrb[0].mxu0 %v420
        %v2281 = vpop.f32.mrb[0].mxu0
        %v2282 = vadd.f32 0.0, %v2281
        %v2283 = vpop.f32.mrb[0].mxu0
        %2284 = vdwg.mxu0
        %2285 = vmatprep.subr.mxu0 0.0
        %2286 = vmatpush1.msra.mxu0 %v2118
        %2287 = vmatprep.subr.mxu0 0.0
        %2288 = vmatpush1.msra.mxu0 %v2119
        %2289 = vmatprep.subr.mxu0 0.0
        %2290 = vmatpush1.msra.mxu0 %v2120
        %2291 = vmatprep.subr.mxu0 0.0
        %2292 = vmatpush1.msra.mxu0 %v2121
        %2293 = vmatprep.subr.mxu0 0.0
        %2294 = vmatpush1.msra.mxu0 %v2122
        %2295 = vmatprep.subr.mxu0 0.0
        %2296 = vmatpush1.msra.mxu0 %v2123
        %2297 = vmatprep.subr.mxu0 0.0
        %2298 = vmatpush1.msra.mxu0 %v2124
        %2299 = vmatprep.subr.mxu0 0.0
        %2300 = vmatpush1.msra.mxu0 %v2125
        %2301 = vmatprep.subr.mxu0 0.0
        %2302 = vmatpush1.msra.mxu0 %v2126
        %2303 = vmatprep.subr.mxu0 0.0
        %2304 = vmatpush1.msra.mxu0 %v2127
        %2305 = vmatprep.subr.mxu0 0.0
        %2306 = vmatpush1.msra.mxu0 %v2128
        %2307 = vmatprep.subr.mxu0 0.0
        %2308 = vmatpush1.msra.mxu0 %v2129
        %2309 = vmatprep.subr.mxu0 0.0
        %2310 = vmatpush1.msra.mxu0 %v2130
        %2311 = vmatprep.subr.mxu0 0.0
        %2312 = vmatpush1.msra.mxu0 %v2131
        %2313 = vmatprep.subr.mxu0 0.0
        %2314 = vmatpush1.msra.mxu0 %v2132
        %2315 = vmatprep.subr.mxu0 0.0
        %2316 = vmatpush1.msra.mxu0 %v2133
        %2317 = vmatprep.subr.mxu0 0.0
        %2318 = vmatpush1.msra.mxu0 0.0
        %2319 = vmatprep.subr.mxu0 0.0
        %2320 = vmatpush1.msra.mxu0 0.0
        %2321 = vmatprep.subr.mxu0 0.0
        %2322 = vmatpush1.msra.mxu0 0.0
        %2323 = vmatprep.subr.mxu0 0.0
        %2324 = vmatpush1.msra.mxu0 0.0
        %2325 = vmatprep.subr.mxu0 0.0
        %2326 = vmatpush1.msra.mxu0 0.0
        %2327 = vmatprep.subr.mxu0 0.0
        %2328 = vmatpush1.msra.mxu0 0.0
        %2329 = vmatprep.subr.mxu0 0.0
        %2330 = vmatpush1.msra.mxu0 0.0
        %2331 = vmatprep.subr.mxu0 0.0
        %2332 = vmatpush1.msra.mxu0 0.0
        %2333 = vmatprep.subr.mxu0 0.0
        %2334 = vmatpush1.msra.mxu0 0.0
        %2335 = vmatprep.subr.mxu0 0.0
        %2336 = vmatpush1.msra.mxu0 0.0
        %2337 = vmatprep.subr.mxu0 0.0
        %2338 = vmatpush1.msra.mxu0 0.0
        %2339 = vmatprep.subr.mxu0 0.0
        %2340 = vmatpush1.msra.mxu0 0.0
        %2341 = vmatprep.subr.mxu0 0.0
        %2342 = vmatpush1.msra.mxu0 0.0
        %2343 = vmatprep.subr.mxu0 0.0
        %2344 = vmatpush1.msra.mxu0 0.0
        %2345 = vmatprep.subr.mxu0 0.0
        %2346 = vmatpush1.msra.mxu0 0.0
        %2347 = vmatprep.subr.mxu0 0.0
        %2348 = vmatpush1.msra.mxu0 0.0
        %2349 = vmatprep.mubr.f32.mxu0 0.0
        %2350 = vmatmul.mubr.f32.gmra.mrb[0].mxu0 %v2101
        %v2351 = vpop.f32.mrb[0].mxu0
        %v2352 = vadd.f32 %v2207, %v2351
        %v2353 = vpop.f32.mrb[0].mxu0
        %2354 = vmatprep.mubr.f32.mxu0 0.0
        %2355 = vmatmul.mubr.f32.gmra.mrb[0].mxu0 %v2102
        %v2356 = vpop.f32.mrb[0].mxu0
        %v2357 = vadd.f32 %v2212, %v2356
        %v2358 = vpop.f32.mrb[0].mxu0
        %2359 = vmatprep.mubr.f32.mxu0 0.0
        %2360 = vmatmul.mubr.f32.gmra.mrb[0].mxu0 %v2103
        %v2361 = vpop.f32.mrb[0].mxu0
        %v2362 = vadd.f32 %v2217, %v2361
        %v2363 = vpop.f32.mrb[0].mxu0
        %2364 = vmatprep.mubr.f32.mxu0 0.0
        %2365 = vmatmul.mubr.f32.gmra.mrb[0].mxu0 %v2104
        %v2366 = vpop.f32.mrb[0].mxu0
        %v2367 = vadd.f32 %v2222, %v2366
        %v2368 = vpop.f32.mrb[0].mxu0
        %2369 = vmatprep.mubr.f32.mxu0 0.0
        %2370 = vmatmul.mubr.f32.gmra.mrb[0].mxu0 %v2105
        %v2371 = vpop.f32.mrb[0].mxu0
        %v2372 = vadd.f32 %v2227, %v2371
        %v2373 = vpop.f32.mrb[0].mxu0
        %2374 = vmatprep.mubr.f32.mxu0 0.0
        %2375 = vmatmul.mubr.f32.gmra.mrb[0].mxu0 %v2106
        %v2376 = vpop.f32.mrb[0].mxu0
        %v2377 = vadd.f32 %v2232, %v2376
        %v2378 = vpop.f32.mrb[0].mxu0
        %2379 = vmatprep.mubr.f32.mxu0 0.0
        %2380 = vmatmul.mubr.f32.gmra.mrb[0].mxu0 %v2107
        %v2381 = vpop.f32.mrb[0].mxu0
        %v2382 = vadd.f32 %v2237, %v2381
        %v2383 = vpop.f32.mrb[0].mxu0
        %2384 = vmatprep.mubr.f32.mxu0 0.0
        %2385 = vmatmul.mubr.f32.gmra.mrb[0].mxu0 %v2108
        %v2386 = vpop.f32.mrb[0].mxu0
        %v2387 = vadd.f32 %v2242, %v2386
        %v2388 = vpop.f32.mrb[0].mxu0
        %2389 = vmatprep.mubr.f32.mxu0 0.0
        %2390 = vmatmul.mubr.f32.gmra.mrb[0].mxu0 %v2109
        %v2391 = vpop.f32.mrb[0].mxu0
        %v2392 = vadd.f32 %v2247, %v2391
        %v2393 = vpop.f32.mrb[0].mxu0
        %2394 = vmatprep.mubr.f32.mxu0 0.0
        %2395 = vmatmul.mubr.f32.gmra.mrb[0].mxu0 %v2110
        %v2396 = vpop.f32.mrb[0].mxu0
        %v2397 = vadd.f32 %v2252, %v2396
        %v2398 = vpop.f32.mrb[0].mxu0
        %2399 = vmatprep.mubr.f32.mxu0 0.0
        %2400 = vmatmul.mubr.f32.gmra.mrb[0].mxu0 %v2111
        %v2401 = vpop.f32.mrb[0].mxu0
        %v2402 = vadd.f32 %v2257, %v2401
        %v2403 = vpop.f32.mrb[0].mxu0
        %2404 = vmatprep.mubr.f32.mxu0 0.0
        %2405 = vmatmul.mubr.f32.gmra.mrb[0].mxu0 %v2112
        %v2406 = vpop.f32.mrb[0].mxu0
        %v2407 = vadd.f32 %v2262, %v2406
        %v2408 = vpop.f32.mrb[0].mxu0
        %2409 = vmatprep.mubr.f32.mxu0 0.0
        %2410 = vmatmul.mubr.f32.gmra.mrb[0].mxu0 %v2113
        %v2411 = vpop.f32.mrb[0].mxu0
        %v2412 = vadd.f32 %v2267, %v2411
        %v2413 = vpop.f32.mrb[0].mxu0
        %2414 = vmatprep.mubr.f32.mxu0 0.0
        %2415 = vmatmul.mubr.f32.gmra.mrb[0].mxu0 %v2114
        %v2416 = vpop.f32.mrb[0].mxu0
        %v2417 = vadd.f32 %v2272, %v2416
        %v2418 = vpop.f32.mrb[0].mxu0
        %2419 = vmatprep.mubr.f32.mxu0 0.0
        %2420 = vmatmul.mubr.f32.gmra.mrb[0].mxu0 %v2115
        %v2421 = vpop.f32.mrb[0].mxu0
        %v2422 = vadd.f32 %v2277, %v2421
        %v2423 = vpop.f32.mrb[0].mxu0
        %2424 = vmatprep.mubr.f32.mxu0 0.0
        %2425 = vmatmul.mubr.f32.gmra.mrb[0].mxu0 %v2116
        %v2426 = vpop.f32.mrb[0].mxu0
        %v2427 = vadd.f32 %v2282, %v2426
        %v2428 = vpop.f32.mrb[0].mxu0
        %2429 = vdwg.mxu0
        %v2430 = vlaneseq
        %v2431 = vshrl.u32 %v2430, 7
        %v2432 = vsub.s32 1, %v2431
        %v2433 = vrot.slane %v366, %v2432
        %v2434 = vadd.f32 %v2352, %v2433
        %v2435 = vadd.f32 %v2357, %v2433
        %v2436 = vadd.f32 %v2362, %v2433
        %v2437 = vadd.f32 %v2367, %v2433
        %v2438 = vadd.f32 %v2372, %v2433
        %v2439 = vadd.f32 %v2377, %v2433
        %v2440 = vadd.f32 %v2382, %v2433
        %v2441 = vadd.f32 %v2387, %v2433
        %v2442 = vadd.f32 %v2392, %v2433
        %v2443 = vadd.f32 %v2397, %v2433
        %v2444 = vadd.f32 %v2402, %v2433
        %v2445 = vadd.f32 %v2407, %v2433
        %v2446 = vadd.f32 %v2412, %v2433
        %v2447 = vadd.f32 %v2417, %v2433
        %v2448 = vadd.f32 %v2422, %v2433
        %v2449 = vadd.f32 %v2427, %v2433
        %v2450 = vld [vmem:[%s4 + $0x4] sm:$0x1]
        %v2451 = vlaneseq
        %v2452 = vshrl.u32 %v2451, 7
        %v2453 = vsub.s32 0, %v2452
        %v2454 = vrot.slane %v2450, %v2453
        %v2455 = vadd.f32 %v2434, %v2454
        %v2456 = vadd.f32 %v2435, %v2454
        %v2457 = vadd.f32 %v2436, %v2454
        %v2458 = vadd.f32 %v2437, %v2454
        %v2459 = vadd.f32 %v2438, %v2454
        %v2460 = vadd.f32 %v2439, %v2454
        %v2461 = vadd.f32 %v2440, %v2454
        %v2462 = vadd.f32 %v2441, %v2454
        %v2463 = vadd.f32 %v2442, %v2454
        %v2464 = vadd.f32 %v2443, %v2454
        %v2465 = vadd.f32 %v2444, %v2454
        %v2466 = vadd.f32 %v2445, %v2454
        %v2467 = vadd.f32 %v2446, %v2454
        %v2468 = vadd.f32 %v2447, %v2454
        %v2469 = vadd.f32 %v2448, %v2454
        %v2470 = vadd.f32 %v2449, %v2454
        %v2471 = vmul.f32 %v2455, 100.0
        %v2472 = vmul.f32 %v2456, 100.0
        %v2473 = vmul.f32 %v2457, 100.0
        %v2474 = vmul.f32 %v2458, 100.0
        %v2475 = vmul.f32 %v2459, 100.0
        %v2476 = vmul.f32 %v2460, 100.0
        %v2477 = vmul.f32 %v2461, 100.0
        %v2478 = vmul.f32 %v2462, 100.0
        %v2479 = vmul.f32 %v2463, 100.0
        %v2480 = vmul.f32 %v2464, 100.0
        %v2481 = vmul.f32 %v2465, 100.0
        %v2482 = vmul.f32 %v2466, 100.0
        %v2483 = vmul.f32 %v2467, 100.0
        %v2484 = vmul.f32 %v2468, 100.0
        %v2485 = vmul.f32 %v2469, 100.0
        %v2486 = vmul.f32 %v2470, 100.0
        %vm2487 = vcmp.gt.f32.partialorder %v2471, 20.0
        %vm2488 = vcmp.gt.f32.partialorder %v2472, 20.0
        %vm2489 = vcmp.gt.f32.partialorder %v2473, 20.0
        %vm2490 = vcmp.gt.f32.partialorder %v2474, 20.0
        %vm2491 = vcmp.gt.f32.partialorder %v2475, 20.0
        %vm2492 = vcmp.gt.f32.partialorder %v2476, 20.0
        %vm2493 = vcmp.gt.f32.partialorder %v2477, 20.0
        %vm2494 = vcmp.gt.f32.partialorder %v2478, 20.0
        %vm2495 = vcmp.gt.f32.partialorder %v2479, 20.0
        %vm2496 = vcmp.gt.f32.partialorder %v2480, 20.0
        %vm2497 = vcmp.gt.f32.partialorder %v2481, 20.0
        %vm2498 = vcmp.gt.f32.partialorder %v2482, 20.0
        %vm2499 = vcmp.gt.f32.partialorder %v2483, 20.0
        %vm2500 = vcmp.gt.f32.partialorder %v2484, 20.0
        %vm2501 = vcmp.gt.f32.partialorder %v2485, 20.0
        %vm2502 = vcmp.gt.f32.partialorder %v2486, 20.0
        %v2503 = vmin.f32 %v2471, 20.0
        %v2504 = vmin.f32 %v2472, 20.0
        %v2505 = vmin.f32 %v2473, 20.0
        %v2506 = vmin.f32 %v2474, 20.0
        %v2507 = vmin.f32 %v2475, 20.0
        %v2508 = vmin.f32 %v2476, 20.0
        %v2509 = vmin.f32 %v2477, 20.0
        %v2510 = vmin.f32 %v2478, 20.0
        %v2511 = vmin.f32 %v2479, 20.0
        %v2512 = vmin.f32 %v2480, 20.0
        %v2513 = vmin.f32 %v2481, 20.0
        %v2514 = vmin.f32 %v2482, 20.0
        %v2515 = vmin.f32 %v2483, 20.0
        %v2516 = vmin.f32 %v2484, 20.0
        %v2517 = vmin.f32 %v2485, 20.0
        %v2518 = vmin.f32 %v2486, 20.0
        %v2519 = vmul.f32 %v2503, 1.442695
        %v2520 = vpow.pop %v2519
        %v2521 = vmul.f32 %v2504, 1.442695
        %v2522 = vpow.pop %v2521
        %v2523 = vmul.f32 %v2505, 1.442695
        %v2524 = vpow.pop %v2523
        %v2525 = vmul.f32 %v2506, 1.442695
        %v2526 = vpow.pop %v2525
        %v2527 = vmul.f32 %v2507, 1.442695
        %v2528 = vpow.pop %v2527
        %v2529 = vmul.f32 %v2508, 1.442695
        %v2530 = vpow.pop %v2529
        %v2531 = vmul.f32 %v2509, 1.442695
        %v2532 = vpow.pop %v2531
        %v2533 = vmul.f32 %v2510, 1.442695
        %v2534 = vpow.pop %v2533
        %v2535 = vmul.f32 %v2511, 1.442695
        %v2536 = vpow.pop %v2535
        %v2537 = vmul.f32 %v2512, 1.442695
        %v2538 = vpow.pop %v2537
        %v2539 = vmul.f32 %v2513, 1.442695
        %v2540 = vpow.pop %v2539
        %v2541 = vmul.f32 %v2514, 1.442695
        %v2542 = vpow.pop %v2541
        %v2543 = vmul.f32 %v2515, 1.442695
        %v2544 = vpow.pop %v2543
        %v2545 = vmul.f32 %v2516, 1.442695
        %v2546 = vpow.pop %v2545
        %v2547 = vmul.f32 %v2517, 1.442695
        %v2548 = vpow.pop %v2547
        %v2549 = vmul.f32 %v2518, 1.442695
        %v2550 = vpow.pop %v2549
        %v2551 = vadd.f32 %v2520, 1.0
        %v2552 = vlog2.pop %v2551
        %v2553 = vmul.f32 %v2552, 0.6931472
        %v2554 = vmul.f32 -0.5, %v2520
        %v2555 = vadd.f32 %v2554, 1.0
        %v2556 = vmul.f32 %v2555, %v2520
        %v2557 = vand.u32 2147483647, %v2520
        %vm2558 = vcmp.lt.f32.partialorder %v2557, 0.0004427343
        %v2559 = vsel %vm2558, %v2556, %v2553
        %v2560 = vadd.f32 %v2522, 1.0
        %v2561 = vlog2.pop %v2560
        %v2562 = vmul.f32 %v2561, 0.6931472
        %v2563 = vmul.f32 -0.5, %v2522
        %v2564 = vadd.f32 %v2563, 1.0
        %v2565 = vmul.f32 %v2564, %v2522
        %v2566 = vand.u32 2147483647, %v2522
        %vm2567 = vcmp.lt.f32.partialorder %v2566, 0.0004427343
        %v2568 = vsel %vm2567, %v2565, %v2562
        %v2569 = vadd.f32 %v2524, 1.0
        %v2570 = vlog2.pop %v2569
        %v2571 = vmul.f32 %v2570, 0.6931472
        %v2572 = vmul.f32 -0.5, %v2524
        %v2573 = vadd.f32 %v2572, 1.0
        %v2574 = vmul.f32 %v2573, %v2524
        %v2575 = vand.u32 2147483647, %v2524
        %vm2576 = vcmp.lt.f32.partialorder %v2575, 0.0004427343
        %v2577 = vsel %vm2576, %v2574, %v2571
        %v2578 = vadd.f32 %v2526, 1.0
        %v2579 = vlog2.pop %v2578
        %v2580 = vmul.f32 %v2579, 0.6931472
        %v2581 = vmul.f32 -0.5, %v2526
        %v2582 = vadd.f32 %v2581, 1.0
        %v2583 = vmul.f32 %v2582, %v2526
        %v2584 = vand.u32 2147483647, %v2526
        %vm2585 = vcmp.lt.f32.partialorder %v2584, 0.0004427343
        %v2586 = vsel %vm2585, %v2583, %v2580
        %v2587 = vadd.f32 %v2528, 1.0
        %v2588 = vlog2.pop %v2587
        %v2589 = vmul.f32 %v2588, 0.6931472
        %v2590 = vmul.f32 -0.5, %v2528
        %v2591 = vadd.f32 %v2590, 1.0
        %v2592 = vmul.f32 %v2591, %v2528
        %v2593 = vand.u32 2147483647, %v2528
        %vm2594 = vcmp.lt.f32.partialorder %v2593, 0.0004427343
        %v2595 = vsel %vm2594, %v2592, %v2589
        %v2596 = vadd.f32 %v2530, 1.0
        %v2597 = vlog2.pop %v2596
        %v2598 = vmul.f32 %v2597, 0.6931472
        %v2599 = vmul.f32 -0.5, %v2530
        %v2600 = vadd.f32 %v2599, 1.0
        %v2601 = vmul.f32 %v2600, %v2530
        %v2602 = vand.u32 2147483647, %v2530
        %vm2603 = vcmp.lt.f32.partialorder %v2602, 0.0004427343
        %v2604 = vsel %vm2603, %v2601, %v2598
        %v2605 = vadd.f32 %v2532, 1.0
        %v2606 = vlog2.pop %v2605
        %v2607 = vmul.f32 %v2606, 0.6931472
        %v2608 = vmul.f32 -0.5, %v2532
        %v2609 = vadd.f32 %v2608, 1.0
        %v2610 = vmul.f32 %v2609, %v2532
        %v2611 = vand.u32 2147483647, %v2532
        %vm2612 = vcmp.lt.f32.partialorder %v2611, 0.0004427343
        %v2613 = vsel %vm2612, %v2610, %v2607
        %v2614 = vadd.f32 %v2534, 1.0
        %v2615 = vlog2.pop %v2614
        %v2616 = vmul.f32 %v2615, 0.6931472
        %v2617 = vmul.f32 -0.5, %v2534
        %v2618 = vadd.f32 %v2617, 1.0
        %v2619 = vmul.f32 %v2618, %v2534
        %v2620 = vand.u32 2147483647, %v2534
        %vm2621 = vcmp.lt.f32.partialorder %v2620, 0.0004427343
        %v2622 = vsel %vm2621, %v2619, %v2616
        %v2623 = vadd.f32 %v2536, 1.0
        %v2624 = vlog2.pop %v2623
        %v2625 = vmul.f32 %v2624, 0.6931472
        %v2626 = vmul.f32 -0.5, %v2536
        %v2627 = vadd.f32 %v2626, 1.0
        %v2628 = vmul.f32 %v2627, %v2536
        %v2629 = vand.u32 2147483647, %v2536
        %vm2630 = vcmp.lt.f32.partialorder %v2629, 0.0004427343
        %v2631 = vsel %vm2630, %v2628, %v2625
        %v2632 = vadd.f32 %v2538, 1.0
        %v2633 = vlog2.pop %v2632
        %v2634 = vmul.f32 %v2633, 0.6931472
        %v2635 = vmul.f32 -0.5, %v2538
        %v2636 = vadd.f32 %v2635, 1.0
        %v2637 = vmul.f32 %v2636, %v2538
        %v2638 = vand.u32 2147483647, %v2538
        %vm2639 = vcmp.lt.f32.partialorder %v2638, 0.0004427343
        %v2640 = vsel %vm2639, %v2637, %v2634
        %v2641 = vadd.f32 %v2540, 1.0
        %v2642 = vlog2.pop %v2641
        %v2643 = vmul.f32 %v2642, 0.6931472
        %v2644 = vmul.f32 -0.5, %v2540
        %v2645 = vadd.f32 %v2644, 1.0
        %v2646 = vmul.f32 %v2645, %v2540
        %v2647 = vand.u32 2147483647, %v2540
        %vm2648 = vcmp.lt.f32.partialorder %v2647, 0.0004427343
        %v2649 = vsel %vm2648, %v2646, %v2643
        %v2650 = vadd.f32 %v2542, 1.0
        %v2651 = vlog2.pop %v2650
        %v2652 = vmul.f32 %v2651, 0.6931472
        %v2653 = vmul.f32 -0.5, %v2542
        %v2654 = vadd.f32 %v2653, 1.0
        %v2655 = vmul.f32 %v2654, %v2542
        %v2656 = vand.u32 2147483647, %v2542
        %vm2657 = vcmp.lt.f32.partialorder %v2656, 0.0004427343
        %v2658 = vsel %vm2657, %v2655, %v2652
        %v2659 = vadd.f32 %v2544, 1.0
        %v2660 = vlog2.pop %v2659
        %v2661 = vmul.f32 %v2660, 0.6931472
        %v2662 = vmul.f32 -0.5, %v2544
        %v2663 = vadd.f32 %v2662, 1.0
        %v2664 = vmul.f32 %v2663, %v2544
        %v2665 = vand.u32 2147483647, %v2544
        %vm2666 = vcmp.lt.f32.partialorder %v2665, 0.0004427343
        %v2667 = vsel %vm2666, %v2664, %v2661
        %v2668 = vadd.f32 %v2546, 1.0
        %v2669 = vlog2.pop %v2668
        %v2670 = vmul.f32 %v2669, 0.6931472
        %v2671 = vmul.f32 -0.5, %v2546
        %v2672 = vadd.f32 %v2671, 1.0
        %v2673 = vmul.f32 %v2672, %v2546
        %v2674 = vand.u32 2147483647, %v2546
        %vm2675 = vcmp.lt.f32.partialorder %v2674, 0.0004427343
        %v2676 = vsel %vm2675, %v2673, %v2670
        %v2677 = vadd.f32 %v2548, 1.0
        %v2678 = vlog2.pop %v2677
        %v2679 = vmul.f32 %v2678, 0.6931472
        %v2680 = vmul.f32 -0.5, %v2548
        %v2681 = vadd.f32 %v2680, 1.0
        %v2682 = vmul.f32 %v2681, %v2548
        %v2683 = vand.u32 2147483647, %v2548
        %vm2684 = vcmp.lt.f32.partialorder %v2683, 0.0004427343
        %v2685 = vsel %vm2684, %v2682, %v2679
        %v2686 = vadd.f32 %v2550, 1.0
        %v2687 = vlog2.pop %v2686
        %v2688 = vmul.f32 %v2687, 0.6931472
        %v2689 = vmul.f32 -0.5, %v2550
        %v2690 = vadd.f32 %v2689, 1.0
        %v2691 = vmul.f32 %v2690, %v2550
        %v2692 = vand.u32 2147483647, %v2550
        %vm2693 = vcmp.lt.f32.partialorder %v2692, 0.0004427343
        %v2694 = vsel %vm2693, %v2691, %v2688
        %v2695 = vmul.f32 %v2559, %v816
        %v2696 = vmul.f32 %v2568, %v816
        %v2697 = vmul.f32 %v2577, %v816
        %v2698 = vmul.f32 %v2586, %v816
        %v2699 = vmul.f32 %v2595, %v816
        %v2700 = vmul.f32 %v2604, %v816
        %v2701 = vmul.f32 %v2613, %v816
        %v2702 = vmul.f32 %v2622, %v816
        %v2703 = vmul.f32 %v2631, %v816
        %v2704 = vmul.f32 %v2640, %v816
        %v2705 = vmul.f32 %v2649, %v816
        %v2706 = vmul.f32 %v2658, %v816
        %v2707 = vmul.f32 %v2667, %v816
        %v2708 = vmul.f32 %v2676, %v816
        %v2709 = vmul.f32 %v2685, %v816
        %v2710 = vmul.f32 %v2694, %v816
        %v2711 = vsel %vm2487, %v2455, %v2695
        %v2712 = vsel %vm2488, %v2456, %v2696
        %v2713 = vsel %vm2489, %v2457, %v2697
        %v2714 = vsel %vm2490, %v2458, %v2698
        %v2715 = vsel %vm2491, %v2459, %v2699
        %v2716 = vsel %vm2492, %v2460, %v2700
        %v2717 = vsel %vm2493, %v2461, %v2701
        %v2718 = vsel %vm2494, %v2462, %v2702
        %v2719 = vsel %vm2495, %v2463, %v2703
        %v2720 = vsel %vm2496, %v2464, %v2704
        %v2721 = vsel %vm2497, %v2465, %v2705
        %v2722 = vsel %vm2498, %v2466, %v2706
        %v2723 = vsel %vm2499, %v2467, %v2707
        %v2724 = vsel %vm2500, %v2468, %v2708
        %v2725 = vsel %vm2501, %v2469, %v2709
        %v2726 = vsel %vm2502, %v2470, %v2710
        %s2727 = scalar_lea.vmem [#allocation2], 512
        %v2728 = vld [vmem:[%s2727] sm:$0xff]
        %v2729 = vld [vmem:[%s2727 + $0x8] sm:$0xff]
        %v2730 = vld [vmem:[%s2727 + $0x10] sm:$0xff]
        %v2731 = vld [vmem:[%s2727 + $0x18] sm:$0xff]
        %v2732 = vld [vmem:[%s2727 + $0x20] sm:$0xff]
        %v2733 = vld [vmem:[%s2727 + $0x28] sm:$0xff]
        %v2734 = vld [vmem:[%s2727 + $0x30] sm:$0xff]
        %v2735 = vld [vmem:[%s2727 + $0x38] sm:$0xff]
        %v2736 = vld [vmem:[%s2727 + $0x40] sm:$0xff]
        %v2737 = vld [vmem:[%s2727 + $0x48] sm:$0xff]
        %v2738 = vld [vmem:[%s2727 + $0x50] sm:$0xff]
        %v2739 = vld [vmem:[%s2727 + $0x58] sm:$0xff]
        %v2740 = vld [vmem:[%s2727 + $0x60] sm:$0xff]
        %v2741 = vld [vmem:[%s2727 + $0x68] sm:$0xff]
        %v2742 = vld [vmem:[%s2727 + $0x70] sm:$0xff]
        %v2743 = vld [vmem:[%s2727 + $0x78] sm:$0xff]
        %v2744 = vld [vmem:[%s4 + $0x5] sm:$0x1]
        %v2745 = vlaneseq
        %v2746 = vshrl.u32 %v2745, 7
        %v2747 = vsub.s32 0, %v2746
        %v2748 = vrot.slane %v2744, %v2747
        %2749 = vmatprep.subr.mxu0 0.0
        %2750 = vmatpush1.msra.mxu0 %v2728
        %2751 = vmatprep.subr.mxu0 0.0
        %2752 = vmatpush1.msra.mxu0 %v2729
        %2753 = vmatprep.subr.mxu0 0.0
        %2754 = vmatpush1.msra.mxu0 %v2730
        %2755 = vmatprep.subr.mxu0 0.0
        %2756 = vmatpush1.msra.mxu0 %v2731
        %2757 = vmatprep.subr.mxu0 0.0
        %2758 = vmatpush1.msra.mxu0 %v2732
        %2759 = vmatprep.subr.mxu0 0.0
        %2760 = vmatpush1.msra.mxu0 %v2733
        %2761 = vmatprep.subr.mxu0 0.0
        %2762 = vmatpush1.msra.mxu0 %v2734
        %2763 = vmatprep.subr.mxu0 0.0
        %2764 = vmatpush1.msra.mxu0 %v2735
        %2765 = vmatprep.subr.mxu0 0.0
        %2766 = vmatpush1.msra.mxu0 %v2736
        %2767 = vmatprep.subr.mxu0 0.0
        %2768 = vmatpush1.msra.mxu0 %v2737
        %2769 = vmatprep.subr.mxu0 0.0
        %2770 = vmatpush1.msra.mxu0 %v2738
        %2771 = vmatprep.subr.mxu0 0.0
        %2772 = vmatpush1.msra.mxu0 %v2739
        %2773 = vmatprep.subr.mxu0 0.0
        %2774 = vmatpush1.msra.mxu0 %v2740
        %2775 = vmatprep.subr.mxu0 0.0
        %2776 = vmatpush1.msra.mxu0 %v2741
        %2777 = vmatprep.subr.mxu0 0.0
        %2778 = vmatpush1.msra.mxu0 %v2742
        %2779 = vmatprep.subr.mxu0 0.0
        %2780 = vmatpush1.msra.mxu0 %v2743
        %2781 = vmatprep.subr.mxu0 0.0
        %2782 = vmatpush1.msra.mxu0 0.0
        %2783 = vmatprep.subr.mxu0 0.0
        %2784 = vmatpush1.msra.mxu0 0.0
        %2785 = vmatprep.subr.mxu0 0.0
        %2786 = vmatpush1.msra.mxu0 0.0
        %2787 = vmatprep.subr.mxu0 0.0
        %2788 = vmatpush1.msra.mxu0 0.0
        %2789 = vmatprep.subr.mxu0 0.0
        %2790 = vmatpush1.msra.mxu0 0.0
        %2791 = vmatprep.subr.mxu0 0.0
        %2792 = vmatpush1.msra.mxu0 0.0
        %2793 = vmatprep.subr.mxu0 0.0
        %2794 = vmatpush1.msra.mxu0 0.0
        %2795 = vmatprep.subr.mxu0 0.0
        %2796 = vmatpush1.msra.mxu0 0.0
        %2797 = vmatprep.subr.mxu0 0.0
        %2798 = vmatpush1.msra.mxu0 0.0
        %2799 = vmatprep.subr.mxu0 0.0
        %2800 = vmatpush1.msra.mxu0 0.0
        %2801 = vmatprep.subr.mxu0 0.0
        %2802 = vmatpush1.msra.mxu0 0.0
        %2803 = vmatprep.subr.mxu0 0.0
        %2804 = vmatpush1.msra.mxu0 0.0
        %2805 = vmatprep.subr.mxu0 0.0
        %2806 = vmatpush1.msra.mxu0 0.0
        %2807 = vmatprep.subr.mxu0 0.0
        %2808 = vmatpush1.msra.mxu0 0.0
        %2809 = vmatprep.subr.mxu0 0.0
        %2810 = vmatpush1.msra.mxu0 0.0
        %2811 = vmatprep.subr.mxu0 0.0
        %2812 = vmatpush1.msra.mxu0 0.0
        %2813 = vmatprep.mubr.f32.mxu0 0.0
        %2814 = vmatmul.mubr.f32.gmra.mrb[0].mxu0 %v2711
        %v2815 = vpop.f32.mrb[0].mxu0
        %v2816 = vadd.f32 %v2748, %v2815
        %v2817 = vpop.f32.mrb[0].mxu0
        %2818 = vmatprep.mubr.f32.mxu0 0.0
        %2819 = vmatmul.mubr.f32.gmra.mrb[0].mxu0 %v2712
        %v2820 = vpop.f32.mrb[0].mxu0
        %v2821 = vadd.f32 %v2748, %v2820
        %v2822 = vpop.f32.mrb[0].mxu0
        %2823 = vmatprep.mubr.f32.mxu0 0.0
        %2824 = vmatmul.mubr.f32.gmra.mrb[0].mxu0 %v2713
        %v2825 = vpop.f32.mrb[0].mxu0
        %v2826 = vadd.f32 %v2748, %v2825
        %v2827 = vpop.f32.mrb[0].mxu0
        %2828 = vmatprep.mubr.f32.mxu0 0.0
        %2829 = vmatmul.mubr.f32.gmra.mrb[0].mxu0 %v2714
        %v2830 = vpop.f32.mrb[0].mxu0
        %v2831 = vadd.f32 %v2748, %v2830
        %v2832 = vpop.f32.mrb[0].mxu0
        %2833 = vmatprep.mubr.f32.mxu0 0.0
        %2834 = vmatmul.mubr.f32.gmra.mrb[0].mxu0 %v2715
        %v2835 = vpop.f32.mrb[0].mxu0
        %v2836 = vadd.f32 %v2748, %v2835
        %v2837 = vpop.f32.mrb[0].mxu0
        %2838 = vmatprep.mubr.f32.mxu0 0.0
        %2839 = vmatmul.mubr.f32.gmra.mrb[0].mxu0 %v2716
        %v2840 = vpop.f32.mrb[0].mxu0
        %v2841 = vadd.f32 %v2748, %v2840
        %v2842 = vpop.f32.mrb[0].mxu0
        %2843 = vmatprep.mubr.f32.mxu0 0.0
        %2844 = vmatmul.mubr.f32.gmra.mrb[0].mxu0 %v2717
        %v2845 = vpop.f32.mrb[0].mxu0
        %v2846 = vadd.f32 %v2748, %v2845
        %v2847 = vpop.f32.mrb[0].mxu0
        %2848 = vmatprep.mubr.f32.mxu0 0.0
        %2849 = vmatmul.mubr.f32.gmra.mrb[0].mxu0 %v2718
        %v2850 = vpop.f32.mrb[0].mxu0
        %v2851 = vadd.f32 %v2748, %v2850
        %v2852 = vpop.f32.mrb[0].mxu0
        %2853 = vmatprep.mubr.f32.mxu0 0.0
        %2854 = vmatmul.mubr.f32.gmra.mrb[0].mxu0 %v2719
        %v2855 = vpop.f32.mrb[0].mxu0
        %v2856 = vadd.f32 %v2748, %v2855
        %v2857 = vpop.f32.mrb[0].mxu0
        %2858 = vmatprep.mubr.f32.mxu0 0.0
        %2859 = vmatmul.mubr.f32.gmra.mrb[0].mxu0 %v2720
        %v2860 = vpop.f32.mrb[0].mxu0
        %v2861 = vadd.f32 %v2748, %v2860
        %v2862 = vpop.f32.mrb[0].mxu0
        %2863 = vmatprep.mubr.f32.mxu0 0.0
        %2864 = vmatmul.mubr.f32.gmra.mrb[0].mxu0 %v2721
        %v2865 = vpop.f32.mrb[0].mxu0
        %v2866 = vadd.f32 %v2748, %v2865
        %v2867 = vpop.f32.mrb[0].mxu0
        %2868 = vmatprep.mubr.f32.mxu0 0.0
        %2869 = vmatmul.mubr.f32.gmra.mrb[0].mxu0 %v2722
        %v2870 = vpop.f32.mrb[0].mxu0
        %v2871 = vadd.f32 %v2748, %v2870
        %v2872 = vpop.f32.mrb[0].mxu0
        %2873 = vmatprep.mubr.f32.mxu0 0.0
        %2874 = vmatmul.mubr.f32.gmra.mrb[0].mxu0 %v2723
        %v2875 = vpop.f32.mrb[0].mxu0
        %v2876 = vadd.f32 %v2748, %v2875
        %v2877 = vpop.f32.mrb[0].mxu0
        %2878 = vmatprep.mubr.f32.mxu0 0.0
        %2879 = vmatmul.mubr.f32.gmra.mrb[0].mxu0 %v2724
        %v2880 = vpop.f32.mrb[0].mxu0
        %v2881 = vadd.f32 %v2748, %v2880
        %v2882 = vpop.f32.mrb[0].mxu0
        %2883 = vmatprep.mubr.f32.mxu0 0.0
        %2884 = vmatmul.mubr.f32.gmra.mrb[0].mxu0 %v2725
        %v2885 = vpop.f32.mrb[0].mxu0
        %v2886 = vadd.f32 %v2748, %v2885
        %v2887 = vpop.f32.mrb[0].mxu0
        %2888 = vmatprep.mubr.f32.mxu0 0.0
        %2889 = vmatmul.mubr.f32.gmra.mrb[0].mxu0 %v2726
        %v2890 = vpop.f32.mrb[0].mxu0
        %v2891 = vadd.f32 %v2748, %v2890
        %v2892 = vpop.f32.mrb[0].mxu0
        %2893 = vdwg.mxu0
        %v2894 = vmul.f32 %v2816, 100.0
        %v2895 = vmul.f32 %v2821, 100.0
        %v2896 = vmul.f32 %v2826, 100.0
        %v2897 = vmul.f32 %v2831, 100.0
        %v2898 = vmul.f32 %v2836, 100.0
        %v2899 = vmul.f32 %v2841, 100.0
        %v2900 = vmul.f32 %v2846, 100.0
        %v2901 = vmul.f32 %v2851, 100.0
        %v2902 = vmul.f32 %v2856, 100.0
        %v2903 = vmul.f32 %v2861, 100.0
        %v2904 = vmul.f32 %v2866, 100.0
        %v2905 = vmul.f32 %v2871, 100.0
        %v2906 = vmul.f32 %v2876, 100.0
        %v2907 = vmul.f32 %v2881, 100.0
        %v2908 = vmul.f32 %v2886, 100.0
        %v2909 = vmul.f32 %v2891, 100.0
        %vm2910 = vcmp.gt.f32.partialorder %v2894, 20.0
        %vm2911 = vcmp.gt.f32.partialorder %v2895, 20.0
        %vm2912 = vcmp.gt.f32.partialorder %v2896, 20.0
        %vm2913 = vcmp.gt.f32.partialorder %v2897, 20.0
        %vm2914 = vcmp.gt.f32.partialorder %v2898, 20.0
        %vm2915 = vcmp.gt.f32.partialorder %v2899, 20.0
        %vm2916 = vcmp.gt.f32.partialorder %v2900, 20.0
        %vm2917 = vcmp.gt.f32.partialorder %v2901, 20.0
        %vm2918 = vcmp.gt.f32.partialorder %v2902, 20.0
        %vm2919 = vcmp.gt.f32.partialorder %v2903, 20.0
        %vm2920 = vcmp.gt.f32.partialorder %v2904, 20.0
        %vm2921 = vcmp.gt.f32.partialorder %v2905, 20.0
        %vm2922 = vcmp.gt.f32.partialorder %v2906, 20.0
        %vm2923 = vcmp.gt.f32.partialorder %v2907, 20.0
        %vm2924 = vcmp.gt.f32.partialorder %v2908, 20.0
        %vm2925 = vcmp.gt.f32.partialorder %v2909, 20.0
        %v2926 = vmin.f32 %v2894, 20.0
        %v2927 = vmin.f32 %v2895, 20.0
        %v2928 = vmin.f32 %v2896, 20.0
        %v2929 = vmin.f32 %v2897, 20.0
        %v2930 = vmin.f32 %v2898, 20.0
        %v2931 = vmin.f32 %v2899, 20.0
        %v2932 = vmin.f32 %v2900, 20.0
        %v2933 = vmin.f32 %v2901, 20.0
        %v2934 = vmin.f32 %v2902, 20.0
        %v2935 = vmin.f32 %v2903, 20.0
        %v2936 = vmin.f32 %v2904, 20.0
        %v2937 = vmin.f32 %v2905, 20.0
        %v2938 = vmin.f32 %v2906, 20.0
        %v2939 = vmin.f32 %v2907, 20.0
        %v2940 = vmin.f32 %v2908, 20.0
        %v2941 = vmin.f32 %v2909, 20.0
        %v2942 = vmul.f32 %v2926, 1.442695
        %v2943 = vpow.pop %v2942
        %v2944 = vmul.f32 %v2927, 1.442695
        %v2945 = vpow.pop %v2944
        %v2946 = vmul.f32 %v2928, 1.442695
        %v2947 = vpow.pop %v2946
        %v2948 = vmul.f32 %v2929, 1.442695
        %v2949 = vpow.pop %v2948
        %v2950 = vmul.f32 %v2930, 1.442695
        %v2951 = vpow.pop %v2950
        %v2952 = vmul.f32 %v2931, 1.442695
        %v2953 = vpow.pop %v2952
        %v2954 = vmul.f32 %v2932, 1.442695
        %v2955 = vpow.pop %v2954
        %v2956 = vmul.f32 %v2933, 1.442695
        %v2957 = vpow.pop %v2956
        %v2958 = vmul.f32 %v2934, 1.442695
        %v2959 = vpow.pop %v2958
        %v2960 = vmul.f32 %v2935, 1.442695
        %v2961 = vpow.pop %v2960
        %v2962 = vmul.f32 %v2936, 1.442695
        %v2963 = vpow.pop %v2962
        %v2964 = vmul.f32 %v2937, 1.442695
        %v2965 = vpow.pop %v2964
        %v2966 = vmul.f32 %v2938, 1.442695
        %v2967 = vpow.pop %v2966
        %v2968 = vmul.f32 %v2939, 1.442695
        %v2969 = vpow.pop %v2968
        %v2970 = vmul.f32 %v2940, 1.442695
        %v2971 = vpow.pop %v2970
        %v2972 = vmul.f32 %v2941, 1.442695
        %v2973 = vpow.pop %v2972
        %v2974 = vadd.f32 %v2943, 1.0
        %v2975 = vlog2.pop %v2974
        %v2976 = vmul.f32 %v2975, 0.6931472
        %v2977 = vmul.f32 -0.5, %v2943
        %v2978 = vadd.f32 %v2977, 1.0
        %v2979 = vmul.f32 %v2978, %v2943
        %v2980 = vand.u32 2147483647, %v2943
        %vm2981 = vcmp.lt.f32.partialorder %v2980, 0.0004427343
        %v2982 = vsel %vm2981, %v2979, %v2976
        %v2983 = vadd.f32 %v2945, 1.0
        %v2984 = vlog2.pop %v2983
        %v2985 = vmul.f32 %v2984, 0.6931472
        %v2986 = vmul.f32 -0.5, %v2945
        %v2987 = vadd.f32 %v2986, 1.0
        %v2988 = vmul.f32 %v2987, %v2945
        %v2989 = vand.u32 2147483647, %v2945
        %vm2990 = vcmp.lt.f32.partialorder %v2989, 0.0004427343
        %v2991 = vsel %vm2990, %v2988, %v2985
        %v2992 = vadd.f32 %v2947, 1.0
        %v2993 = vlog2.pop %v2992
        %v2994 = vmul.f32 %v2993, 0.6931472
        %v2995 = vmul.f32 -0.5, %v2947
        %v2996 = vadd.f32 %v2995, 1.0
        %v2997 = vmul.f32 %v2996, %v2947
        %v2998 = vand.u32 2147483647, %v2947
        %vm2999 = vcmp.lt.f32.partialorder %v2998, 0.0004427343
        %v3000 = vsel %vm2999, %v2997, %v2994
        %v3001 = vadd.f32 %v2949, 1.0
        %v3002 = vlog2.pop %v3001
        %v3003 = vmul.f32 %v3002, 0.6931472
        %v3004 = vmul.f32 -0.5, %v2949
        %v3005 = vadd.f32 %v3004, 1.0
        %v3006 = vmul.f32 %v3005, %v2949
        %v3007 = vand.u32 2147483647, %v2949
        %vm3008 = vcmp.lt.f32.partialorder %v3007, 0.0004427343
        %v3009 = vsel %vm3008, %v3006, %v3003
        %v3010 = vadd.f32 %v2951, 1.0
        %v3011 = vlog2.pop %v3010
        %v3012 = vmul.f32 %v3011, 0.6931472
        %v3013 = vmul.f32 -0.5, %v2951
        %v3014 = vadd.f32 %v3013, 1.0
        %v3015 = vmul.f32 %v3014, %v2951
        %v3016 = vand.u32 2147483647, %v2951
        %vm3017 = vcmp.lt.f32.partialorder %v3016, 0.0004427343
        %v3018 = vsel %vm3017, %v3015, %v3012
        %v3019 = vadd.f32 %v2953, 1.0
        %v3020 = vlog2.pop %v3019
        %v3021 = vmul.f32 %v3020, 0.6931472
        %v3022 = vmul.f32 -0.5, %v2953
        %v3023 = vadd.f32 %v3022, 1.0
        %v3024 = vmul.f32 %v3023, %v2953
        %v3025 = vand.u32 2147483647, %v2953
        %vm3026 = vcmp.lt.f32.partialorder %v3025, 0.0004427343
        %v3027 = vsel %vm3026, %v3024, %v3021
        %v3028 = vadd.f32 %v2955, 1.0
        %v3029 = vlog2.pop %v3028
        %v3030 = vmul.f32 %v3029, 0.6931472
        %v3031 = vmul.f32 -0.5, %v2955
        %v3032 = vadd.f32 %v3031, 1.0
        %v3033 = vmul.f32 %v3032, %v2955
        %v3034 = vand.u32 2147483647, %v2955
        %vm3035 = vcmp.lt.f32.partialorder %v3034, 0.0004427343
        %v3036 = vsel %vm3035, %v3033, %v3030
        %v3037 = vadd.f32 %v2957, 1.0
        %v3038 = vlog2.pop %v3037
        %v3039 = vmul.f32 %v3038, 0.6931472
        %v3040 = vmul.f32 -0.5, %v2957
        %v3041 = vadd.f32 %v3040, 1.0
        %v3042 = vmul.f32 %v3041, %v2957
        %v3043 = vand.u32 2147483647, %v2957
        %vm3044 = vcmp.lt.f32.partialorder %v3043, 0.0004427343
        %v3045 = vsel %vm3044, %v3042, %v3039
        %v3046 = vadd.f32 %v2959, 1.0
        %v3047 = vlog2.pop %v3046
        %v3048 = vmul.f32 %v3047, 0.6931472
        %v3049 = vmul.f32 -0.5, %v2959
        %v3050 = vadd.f32 %v3049, 1.0
        %v3051 = vmul.f32 %v3050, %v2959
        %v3052 = vand.u32 2147483647, %v2959
        %vm3053 = vcmp.lt.f32.partialorder %v3052, 0.0004427343
        %v3054 = vsel %vm3053, %v3051, %v3048
        %v3055 = vadd.f32 %v2961, 1.0
        %v3056 = vlog2.pop %v3055
        %v3057 = vmul.f32 %v3056, 0.6931472
        %v3058 = vmul.f32 -0.5, %v2961
        %v3059 = vadd.f32 %v3058, 1.0
        %v3060 = vmul.f32 %v3059, %v2961
        %v3061 = vand.u32 2147483647, %v2961
        %vm3062 = vcmp.lt.f32.partialorder %v3061, 0.0004427343
        %v3063 = vsel %vm3062, %v3060, %v3057
        %v3064 = vadd.f32 %v2963, 1.0
        %v3065 = vlog2.pop %v3064
        %v3066 = vmul.f32 %v3065, 0.6931472
        %v3067 = vmul.f32 -0.5, %v2963
        %v3068 = vadd.f32 %v3067, 1.0
        %v3069 = vmul.f32 %v3068, %v2963
        %v3070 = vand.u32 2147483647, %v2963
        %vm3071 = vcmp.lt.f32.partialorder %v3070, 0.0004427343
        %v3072 = vsel %vm3071, %v3069, %v3066
        %v3073 = vadd.f32 %v2965, 1.0
        %v3074 = vlog2.pop %v3073
        %v3075 = vmul.f32 %v3074, 0.6931472
        %v3076 = vmul.f32 -0.5, %v2965
        %v3077 = vadd.f32 %v3076, 1.0
        %v3078 = vmul.f32 %v3077, %v2965
        %v3079 = vand.u32 2147483647, %v2965
        %vm3080 = vcmp.lt.f32.partialorder %v3079, 0.0004427343
        %v3081 = vsel %vm3080, %v3078, %v3075
        %v3082 = vadd.f32 %v2967, 1.0
        %v3083 = vlog2.pop %v3082
        %v3084 = vmul.f32 %v3083, 0.6931472
        %v3085 = vmul.f32 -0.5, %v2967
        %v3086 = vadd.f32 %v3085, 1.0
        %v3087 = vmul.f32 %v3086, %v2967
        %v3088 = vand.u32 2147483647, %v2967
        %vm3089 = vcmp.lt.f32.partialorder %v3088, 0.0004427343
        %v3090 = vsel %vm3089, %v3087, %v3084
        %v3091 = vadd.f32 %v2969, 1.0
        %v3092 = vlog2.pop %v3091
        %v3093 = vmul.f32 %v3092, 0.6931472
        %v3094 = vmul.f32 -0.5, %v2969
        %v3095 = vadd.f32 %v3094, 1.0
        %v3096 = vmul.f32 %v3095, %v2969
        %v3097 = vand.u32 2147483647, %v2969
        %vm3098 = vcmp.lt.f32.partialorder %v3097, 0.0004427343
        %v3099 = vsel %vm3098, %v3096, %v3093
        %v3100 = vadd.f32 %v2971, 1.0
        %v3101 = vlog2.pop %v3100
        %v3102 = vmul.f32 %v3101, 0.6931472
        %v3103 = vmul.f32 -0.5, %v2971
        %v3104 = vadd.f32 %v3103, 1.0
        %v3105 = vmul.f32 %v3104, %v2971
        %v3106 = vand.u32 2147483647, %v2971
        %vm3107 = vcmp.lt.f32.partialorder %v3106, 0.0004427343
        %v3108 = vsel %vm3107, %v3105, %v3102
        %v3109 = vadd.f32 %v2973, 1.0
        %v3110 = vlog2.pop %v3109
        %v3111 = vmul.f32 %v3110, 0.6931472
        %v3112 = vmul.f32 -0.5, %v2973
        %v3113 = vadd.f32 %v3112, 1.0
        %v3114 = vmul.f32 %v3113, %v2973
        %v3115 = vand.u32 2147483647, %v2973
        %vm3116 = vcmp.lt.f32.partialorder %v3115, 0.0004427343
        %v3117 = vsel %vm3116, %v3114, %v3111
        %v3118 = vmul.f32 %v2982, %v816
        %v3119 = vmul.f32 %v2991, %v816
        %v3120 = vmul.f32 %v3000, %v816
        %v3121 = vmul.f32 %v3009, %v816
        %v3122 = vmul.f32 %v3018, %v816
        %v3123 = vmul.f32 %v3027, %v816
        %v3124 = vmul.f32 %v3036, %v816
        %v3125 = vmul.f32 %v3045, %v816
        %v3126 = vmul.f32 %v3054, %v816
        %v3127 = vmul.f32 %v3063, %v816
        %v3128 = vmul.f32 %v3072, %v816
        %v3129 = vmul.f32 %v3081, %v816
        %v3130 = vmul.f32 %v3090, %v816
        %v3131 = vmul.f32 %v3099, %v816
        %v3132 = vmul.f32 %v3108, %v816
        %v3133 = vmul.f32 %v3117, %v816
        %v3134 = vsel %vm2910, %v2816, %v3118
        %v3135 = vsel %vm2911, %v2821, %v3119
        %v3136 = vsel %vm2912, %v2826, %v3120
        %v3137 = vsel %vm2913, %v2831, %v3121
        %v3138 = vsel %vm2914, %v2836, %v3122
        %v3139 = vsel %vm2915, %v2841, %v3123
        %v3140 = vsel %vm2916, %v2846, %v3124
        %v3141 = vsel %vm2917, %v2851, %v3125
        %v3142 = vsel %vm2918, %v2856, %v3126
        %v3143 = vsel %vm2919, %v2861, %v3127
        %v3144 = vsel %vm2920, %v2866, %v3128
        %v3145 = vsel %vm2921, %v2871, %v3129
        %v3146 = vsel %vm2922, %v2876, %v3130
        %v3147 = vsel %vm2923, %v2881, %v3131
        %v3148 = vsel %vm2924, %v2886, %v3132
        %v3149 = vsel %vm2925, %v2891, %v3133
        %s3150 = scalar_lea.vmem [#allocation2], 640
        %v3151 = vld [vmem:[%s3150] sm:$0xff]
        %v3152 = vld [vmem:[%s3150 + $0x8] sm:$0xff]
        %v3153 = vld [vmem:[%s3150 + $0x10] sm:$0xff]
        %v3154 = vld [vmem:[%s3150 + $0x18] sm:$0xff]
        %v3155 = vld [vmem:[%s3150 + $0x20] sm:$0xff]
        %v3156 = vld [vmem:[%s3150 + $0x28] sm:$0xff]
        %v3157 = vld [vmem:[%s3150 + $0x30] sm:$0xff]
        %v3158 = vld [vmem:[%s3150 + $0x38] sm:$0xff]
        %v3159 = vld [vmem:[%s3150 + $0x40] sm:$0xff]
        %v3160 = vld [vmem:[%s3150 + $0x48] sm:$0xff]
        %v3161 = vld [vmem:[%s3150 + $0x50] sm:$0xff]
        %v3162 = vld [vmem:[%s3150 + $0x58] sm:$0xff]
        %v3163 = vld [vmem:[%s3150 + $0x60] sm:$0xff]
        %v3164 = vld [vmem:[%s3150 + $0x68] sm:$0xff]
        %v3165 = vld [vmem:[%s3150 + $0x70] sm:$0xff]
        %v3166 = vld [vmem:[%s3150 + $0x78] sm:$0xff]
        %v3167 = vld [vmem:[%s4 + $0x6] sm:$0x1]
        %v3168 = vlaneseq
        %v3169 = vshrl.u32 %v3168, 7
        %v3170 = vsub.s32 0, %v3169
        %v3171 = vrot.slane %v3167, %v3170
        %3172 = vmatprep.subr.mxu0 0.0
        %3173 = vmatpush1.msra.mxu0 %v3151
        %3174 = vmatprep.subr.mxu0 0.0
        %3175 = vmatpush1.msra.mxu0 %v3152
        %3176 = vmatprep.subr.mxu0 0.0
        %3177 = vmatpush1.msra.mxu0 %v3153
        %3178 = vmatprep.subr.mxu0 0.0
        %3179 = vmatpush1.msra.mxu0 %v3154
        %3180 = vmatprep.subr.mxu0 0.0
        %3181 = vmatpush1.msra.mxu0 %v3155
        %3182 = vmatprep.subr.mxu0 0.0
        %3183 = vmatpush1.msra.mxu0 %v3156
        %3184 = vmatprep.subr.mxu0 0.0
        %3185 = vmatpush1.msra.mxu0 %v3157
        %3186 = vmatprep.subr.mxu0 0.0
        %3187 = vmatpush1.msra.mxu0 %v3158
        %3188 = vmatprep.subr.mxu0 0.0
        %3189 = vmatpush1.msra.mxu0 %v3159
        %3190 = vmatprep.subr.mxu0 0.0
        %3191 = vmatpush1.msra.mxu0 %v3160
        %3192 = vmatprep.subr.mxu0 0.0
        %3193 = vmatpush1.msra.mxu0 %v3161
        %3194 = vmatprep.subr.mxu0 0.0
        %3195 = vmatpush1.msra.mxu0 %v3162
        %3196 = vmatprep.subr.mxu0 0.0
        %3197 = vmatpush1.msra.mxu0 %v3163
        %3198 = vmatprep.subr.mxu0 0.0
        %3199 = vmatpush1.msra.mxu0 %v3164
        %3200 = vmatprep.subr.mxu0 0.0
        %3201 = vmatpush1.msra.mxu0 %v3165
        %3202 = vmatprep.subr.mxu0 0.0
        %3203 = vmatpush1.msra.mxu0 %v3166
        %3204 = vmatprep.subr.mxu0 0.0
        %3205 = vmatpush1.msra.mxu0 0.0
        %3206 = vmatprep.subr.mxu0 0.0
        %3207 = vmatpush1.msra.mxu0 0.0
        %3208 = vmatprep.subr.mxu0 0.0
        %3209 = vmatpush1.msra.mxu0 0.0
        %3210 = vmatprep.subr.mxu0 0.0
        %3211 = vmatpush1.msra.mxu0 0.0
        %3212 = vmatprep.subr.mxu0 0.0
        %3213 = vmatpush1.msra.mxu0 0.0
        %3214 = vmatprep.subr.mxu0 0.0
        %3215 = vmatpush1.msra.mxu0 0.0
        %3216 = vmatprep.subr.mxu0 0.0
        %3217 = vmatpush1.msra.mxu0 0.0
        %3218 = vmatprep.subr.mxu0 0.0
        %3219 = vmatpush1.msra.mxu0 0.0
        %3220 = vmatprep.subr.mxu0 0.0
        %3221 = vmatpush1.msra.mxu0 0.0
        %3222 = vmatprep.subr.mxu0 0.0
        %3223 = vmatpush1.msra.mxu0 0.0
        %3224 = vmatprep.subr.mxu0 0.0
        %3225 = vmatpush1.msra.mxu0 0.0
        %3226 = vmatprep.subr.mxu0 0.0
        %3227 = vmatpush1.msra.mxu0 0.0
        %3228 = vmatprep.subr.mxu0 0.0
        %3229 = vmatpush1.msra.mxu0 0.0
        %3230 = vmatprep.subr.mxu0 0.0
        %3231 = vmatpush1.msra.mxu0 0.0
        %3232 = vmatprep.subr.mxu0 0.0
        %3233 = vmatpush1.msra.mxu0 0.0
        %3234 = vmatprep.subr.mxu0 0.0
        %3235 = vmatpush1.msra.mxu0 0.0
        %3236 = vmatprep.mubr.f32.mxu0 0.0
        %3237 = vmatmul.mubr.f32.gmra.mrb[0].mxu0 %v3134
        %v3238 = vpop.f32.mrb[0].mxu0
        %v3239 = vadd.f32 %v3171, %v3238
        %v3240 = vpop.f32.mrb[0].mxu0
        %3241 = vmatprep.mubr.f32.mxu0 0.0
        %3242 = vmatmul.mubr.f32.gmra.mrb[0].mxu0 %v3135
        %v3243 = vpop.f32.mrb[0].mxu0
        %v3244 = vadd.f32 %v3171, %v3243
        %v3245 = vpop.f32.mrb[0].mxu0
        %3246 = vmatprep.mubr.f32.mxu0 0.0
        %3247 = vmatmul.mubr.f32.gmra.mrb[0].mxu0 %v3136
        %v3248 = vpop.f32.mrb[0].mxu0
        %v3249 = vadd.f32 %v3171, %v3248
        %v3250 = vpop.f32.mrb[0].mxu0
        %3251 = vmatprep.mubr.f32.mxu0 0.0
        %3252 = vmatmul.mubr.f32.gmra.mrb[0].mxu0 %v3137
        %v3253 = vpop.f32.mrb[0].mxu0
        %v3254 = vadd.f32 %v3171, %v3253
        %v3255 = vpop.f32.mrb[0].mxu0
        %3256 = vmatprep.mubr.f32.mxu0 0.0
        %3257 = vmatmul.mubr.f32.gmra.mrb[0].mxu0 %v3138
        %v3258 = vpop.f32.mrb[0].mxu0
        %v3259 = vadd.f32 %v3171, %v3258
        %v3260 = vpop.f32.mrb[0].mxu0
        %3261 = vmatprep.mubr.f32.mxu0 0.0
        %3262 = vmatmul.mubr.f32.gmra.mrb[0].mxu0 %v3139
        %v3263 = vpop.f32.mrb[0].mxu0
        %v3264 = vadd.f32 %v3171, %v3263
        %v3265 = vpop.f32.mrb[0].mxu0
        %3266 = vmatprep.mubr.f32.mxu0 0.0
        %3267 = vmatmul.mubr.f32.gmra.mrb[0].mxu0 %v3140
        %v3268 = vpop.f32.mrb[0].mxu0
        %v3269 = vadd.f32 %v3171, %v3268
        %v3270 = vpop.f32.mrb[0].mxu0
        %3271 = vmatprep.mubr.f32.mxu0 0.0
        %3272 = vmatmul.mubr.f32.gmra.mrb[0].mxu0 %v3141
        %v3273 = vpop.f32.mrb[0].mxu0
        %v3274 = vadd.f32 %v3171, %v3273
        %v3275 = vpop.f32.mrb[0].mxu0
        %3276 = vmatprep.mubr.f32.mxu0 0.0
        %3277 = vmatmul.mubr.f32.gmra.mrb[0].mxu0 %v3142
        %v3278 = vpop.f32.mrb[0].mxu0
        %v3279 = vadd.f32 %v3171, %v3278
        %v3280 = vpop.f32.mrb[0].mxu0
        %3281 = vmatprep.mubr.f32.mxu0 0.0
        %3282 = vmatmul.mubr.f32.gmra.mrb[0].mxu0 %v3143
        %v3283 = vpop.f32.mrb[0].mxu0
        %v3284 = vadd.f32 %v3171, %v3283
        %v3285 = vpop.f32.mrb[0].mxu0
        %3286 = vmatprep.mubr.f32.mxu0 0.0
        %3287 = vmatmul.mubr.f32.gmra.mrb[0].mxu0 %v3144
        %v3288 = vpop.f32.mrb[0].mxu0
        %v3289 = vadd.f32 %v3171, %v3288
        %v3290 = vpop.f32.mrb[0].mxu0
        %3291 = vmatprep.mubr.f32.mxu0 0.0
        %3292 = vmatmul.mubr.f32.gmra.mrb[0].mxu0 %v3145
        %v3293 = vpop.f32.mrb[0].mxu0
        %v3294 = vadd.f32 %v3171, %v3293
        %v3295 = vpop.f32.mrb[0].mxu0
        %3296 = vmatprep.mubr.f32.mxu0 0.0
        %3297 = vmatmul.mubr.f32.gmra.mrb[0].mxu0 %v3146
        %v3298 = vpop.f32.mrb[0].mxu0
        %v3299 = vadd.f32 %v3171, %v3298
        %v3300 = vpop.f32.mrb[0].mxu0
        %3301 = vmatprep.mubr.f32.mxu0 0.0
        %3302 = vmatmul.mubr.f32.gmra.mrb[0].mxu0 %v3147
        %v3303 = vpop.f32.mrb[0].mxu0
        %v3304 = vadd.f32 %v3171, %v3303
        %v3305 = vpop.f32.mrb[0].mxu0
        %3306 = vmatprep.mubr.f32.mxu0 0.0
        %3307 = vmatmul.mubr.f32.gmra.mrb[0].mxu0 %v3148
        %v3308 = vpop.f32.mrb[0].mxu0
        %v3309 = vadd.f32 %v3171, %v3308
        %v3310 = vpop.f32.mrb[0].mxu0
        %3311 = vmatprep.mubr.f32.mxu0 0.0
        %3312 = vmatmul.mubr.f32.gmra.mrb[0].mxu0 %v3149
        %v3313 = vpop.f32.mrb[0].mxu0
        %v3314 = vadd.f32 %v3171, %v3313
        %v3315 = vpop.f32.mrb[0].mxu0
        %3316 = vdwg.mxu0
        %v3317 = vmul.f32 %v3239, 100.0
        %v3318 = vmul.f32 %v3244, 100.0
        %v3319 = vmul.f32 %v3249, 100.0
        %v3320 = vmul.f32 %v3254, 100.0
        %v3321 = vmul.f32 %v3259, 100.0
        %v3322 = vmul.f32 %v3264, 100.0
        %v3323 = vmul.f32 %v3269, 100.0
        %v3324 = vmul.f32 %v3274, 100.0
        %v3325 = vmul.f32 %v3279, 100.0
        %v3326 = vmul.f32 %v3284, 100.0
        %v3327 = vmul.f32 %v3289, 100.0
        %v3328 = vmul.f32 %v3294, 100.0
        %v3329 = vmul.f32 %v3299, 100.0
        %v3330 = vmul.f32 %v3304, 100.0
        %v3331 = vmul.f32 %v3309, 100.0
        %v3332 = vmul.f32 %v3314, 100.0
        %vm3333 = vcmp.gt.f32.partialorder %v3317, 20.0
        %vm3334 = vcmp.gt.f32.partialorder %v3318, 20.0
        %vm3335 = vcmp.gt.f32.partialorder %v3319, 20.0
        %vm3336 = vcmp.gt.f32.partialorder %v3320, 20.0
        %vm3337 = vcmp.gt.f32.partialorder %v3321, 20.0
        %vm3338 = vcmp.gt.f32.partialorder %v3322, 20.0
        %vm3339 = vcmp.gt.f32.partialorder %v3323, 20.0
        %vm3340 = vcmp.gt.f32.partialorder %v3324, 20.0
        %vm3341 = vcmp.gt.f32.partialorder %v3325, 20.0
        %vm3342 = vcmp.gt.f32.partialorder %v3326, 20.0
        %vm3343 = vcmp.gt.f32.partialorder %v3327, 20.0
        %vm3344 = vcmp.gt.f32.partialorder %v3328, 20.0
        %vm3345 = vcmp.gt.f32.partialorder %v3329, 20.0
        %vm3346 = vcmp.gt.f32.partialorder %v3330, 20.0
        %vm3347 = vcmp.gt.f32.partialorder %v3331, 20.0
        %vm3348 = vcmp.gt.f32.partialorder %v3332, 20.0
        %v3349 = vmin.f32 %v3317, 20.0
        %v3350 = vmin.f32 %v3318, 20.0
        %v3351 = vmin.f32 %v3319, 20.0
        %v3352 = vmin.f32 %v3320, 20.0
        %v3353 = vmin.f32 %v3321, 20.0
        %v3354 = vmin.f32 %v3322, 20.0
        %v3355 = vmin.f32 %v3323, 20.0
        %v3356 = vmin.f32 %v3324, 20.0
        %v3357 = vmin.f32 %v3325, 20.0
        %v3358 = vmin.f32 %v3326, 20.0
        %v3359 = vmin.f32 %v3327, 20.0
        %v3360 = vmin.f32 %v3328, 20.0
        %v3361 = vmin.f32 %v3329, 20.0
        %v3362 = vmin.f32 %v3330, 20.0
        %v3363 = vmin.f32 %v3331, 20.0
        %v3364 = vmin.f32 %v3332, 20.0
        %v3365 = vmul.f32 %v3349, 1.442695
        %v3366 = vpow.pop %v3365
        %v3367 = vmul.f32 %v3350, 1.442695
        %v3368 = vpow.pop %v3367
        %v3369 = vmul.f32 %v3351, 1.442695
        %v3370 = vpow.pop %v3369
        %v3371 = vmul.f32 %v3352, 1.442695
        %v3372 = vpow.pop %v3371
        %v3373 = vmul.f32 %v3353, 1.442695
        %v3374 = vpow.pop %v3373
        %v3375 = vmul.f32 %v3354, 1.442695
        %v3376 = vpow.pop %v3375
        %v3377 = vmul.f32 %v3355, 1.442695
        %v3378 = vpow.pop %v3377
        %v3379 = vmul.f32 %v3356, 1.442695
        %v3380 = vpow.pop %v3379
        %v3381 = vmul.f32 %v3357, 1.442695
        %v3382 = vpow.pop %v3381
        %v3383 = vmul.f32 %v3358, 1.442695
        %v3384 = vpow.pop %v3383
        %v3385 = vmul.f32 %v3359, 1.442695
        %v3386 = vpow.pop %v3385
        %v3387 = vmul.f32 %v3360, 1.442695
        %v3388 = vpow.pop %v3387
        %v3389 = vmul.f32 %v3361, 1.442695
        %v3390 = vpow.pop %v3389
        %v3391 = vmul.f32 %v3362, 1.442695
        %v3392 = vpow.pop %v3391
        %v3393 = vmul.f32 %v3363, 1.442695
        %v3394 = vpow.pop %v3393
        %v3395 = vmul.f32 %v3364, 1.442695
        %v3396 = vpow.pop %v3395
        %v3397 = vadd.f32 %v3366, 1.0
        %v3398 = vlog2.pop %v3397
        %v3399 = vmul.f32 %v3398, 0.6931472
        %v3400 = vmul.f32 -0.5, %v3366
        %v3401 = vadd.f32 %v3400, 1.0
        %v3402 = vmul.f32 %v3401, %v3366
        %v3403 = vand.u32 2147483647, %v3366
        %vm3404 = vcmp.lt.f32.partialorder %v3403, 0.0004427343
        %v3405 = vsel %vm3404, %v3402, %v3399
        %v3406 = vadd.f32 %v3368, 1.0
        %v3407 = vlog2.pop %v3406
        %v3408 = vmul.f32 %v3407, 0.6931472
        %v3409 = vmul.f32 -0.5, %v3368
        %v3410 = vadd.f32 %v3409, 1.0
        %v3411 = vmul.f32 %v3410, %v3368
        %v3412 = vand.u32 2147483647, %v3368
        %vm3413 = vcmp.lt.f32.partialorder %v3412, 0.0004427343
        %v3414 = vsel %vm3413, %v3411, %v3408
        %v3415 = vadd.f32 %v3370, 1.0
        %v3416 = vlog2.pop %v3415
        %v3417 = vmul.f32 %v3416, 0.6931472
        %v3418 = vmul.f32 -0.5, %v3370
        %v3419 = vadd.f32 %v3418, 1.0
        %v3420 = vmul.f32 %v3419, %v3370
        %v3421 = vand.u32 2147483647, %v3370
        %vm3422 = vcmp.lt.f32.partialorder %v3421, 0.0004427343
        %v3423 = vsel %vm3422, %v3420, %v3417
        %v3424 = vadd.f32 %v3372, 1.0
        %v3425 = vlog2.pop %v3424
        %v3426 = vmul.f32 %v3425, 0.6931472
        %v3427 = vmul.f32 -0.5, %v3372
        %v3428 = vadd.f32 %v3427, 1.0
        %v3429 = vmul.f32 %v3428, %v3372
        %v3430 = vand.u32 2147483647, %v3372
        %vm3431 = vcmp.lt.f32.partialorder %v3430, 0.0004427343
        %v3432 = vsel %vm3431, %v3429, %v3426
        %v3433 = vadd.f32 %v3374, 1.0
        %v3434 = vlog2.pop %v3433
        %v3435 = vmul.f32 %v3434, 0.6931472
        %v3436 = vmul.f32 -0.5, %v3374
        %v3437 = vadd.f32 %v3436, 1.0
        %v3438 = vmul.f32 %v3437, %v3374
        %v3439 = vand.u32 2147483647, %v3374
        %vm3440 = vcmp.lt.f32.partialorder %v3439, 0.0004427343
        %v3441 = vsel %vm3440, %v3438, %v3435
        %v3442 = vadd.f32 %v3376, 1.0
        %v3443 = vlog2.pop %v3442
        %v3444 = vmul.f32 %v3443, 0.6931472
        %v3445 = vmul.f32 -0.5, %v3376
        %v3446 = vadd.f32 %v3445, 1.0
        %v3447 = vmul.f32 %v3446, %v3376
        %v3448 = vand.u32 2147483647, %v3376
        %vm3449 = vcmp.lt.f32.partialorder %v3448, 0.0004427343
        %v3450 = vsel %vm3449, %v3447, %v3444
        %v3451 = vadd.f32 %v3378, 1.0
        %v3452 = vlog2.pop %v3451
        %v3453 = vmul.f32 %v3452, 0.6931472
        %v3454 = vmul.f32 -0.5, %v3378
        %v3455 = vadd.f32 %v3454, 1.0
        %v3456 = vmul.f32 %v3455, %v3378
        %v3457 = vand.u32 2147483647, %v3378
        %vm3458 = vcmp.lt.f32.partialorder %v3457, 0.0004427343
        %v3459 = vsel %vm3458, %v3456, %v3453
        %v3460 = vadd.f32 %v3380, 1.0
        %v3461 = vlog2.pop %v3460
        %v3462 = vmul.f32 %v3461, 0.6931472
        %v3463 = vmul.f32 -0.5, %v3380
        %v3464 = vadd.f32 %v3463, 1.0
        %v3465 = vmul.f32 %v3464, %v3380
        %v3466 = vand.u32 2147483647, %v3380
        %vm3467 = vcmp.lt.f32.partialorder %v3466, 0.0004427343
        %v3468 = vsel %vm3467, %v3465, %v3462
        %v3469 = vadd.f32 %v3382, 1.0
        %v3470 = vlog2.pop %v3469
        %v3471 = vmul.f32 %v3470, 0.6931472
        %v3472 = vmul.f32 -0.5, %v3382
        %v3473 = vadd.f32 %v3472, 1.0
        %v3474 = vmul.f32 %v3473, %v3382
        %v3475 = vand.u32 2147483647, %v3382
        %vm3476 = vcmp.lt.f32.partialorder %v3475, 0.0004427343
        %v3477 = vsel %vm3476, %v3474, %v3471
        %v3478 = vadd.f32 %v3384, 1.0
        %v3479 = vlog2.pop %v3478
        %v3480 = vmul.f32 %v3479, 0.6931472
        %v3481 = vmul.f32 -0.5, %v3384
        %v3482 = vadd.f32 %v3481, 1.0
        %v3483 = vmul.f32 %v3482, %v3384
        %v3484 = vand.u32 2147483647, %v3384
        %vm3485 = vcmp.lt.f32.partialorder %v3484, 0.0004427343
        %v3486 = vsel %vm3485, %v3483, %v3480
        %v3487 = vadd.f32 %v3386, 1.0
        %v3488 = vlog2.pop %v3487
        %v3489 = vmul.f32 %v3488, 0.6931472
        %v3490 = vmul.f32 -0.5, %v3386
        %v3491 = vadd.f32 %v3490, 1.0
        %v3492 = vmul.f32 %v3491, %v3386
        %v3493 = vand.u32 2147483647, %v3386
        %vm3494 = vcmp.lt.f32.partialorder %v3493, 0.0004427343
        %v3495 = vsel %vm3494, %v3492, %v3489
        %v3496 = vadd.f32 %v3388, 1.0
        %v3497 = vlog2.pop %v3496
        %v3498 = vmul.f32 %v3497, 0.6931472
        %v3499 = vmul.f32 -0.5, %v3388
        %v3500 = vadd.f32 %v3499, 1.0
        %v3501 = vmul.f32 %v3500, %v3388
        %v3502 = vand.u32 2147483647, %v3388
        %vm3503 = vcmp.lt.f32.partialorder %v3502, 0.0004427343
        %v3504 = vsel %vm3503, %v3501, %v3498
        %v3505 = vadd.f32 %v3390, 1.0
        %v3506 = vlog2.pop %v3505
        %v3507 = vmul.f32 %v3506, 0.6931472
        %v3508 = vmul.f32 -0.5, %v3390
        %v3509 = vadd.f32 %v3508, 1.0
        %v3510 = vmul.f32 %v3509, %v3390
        %v3511 = vand.u32 2147483647, %v3390
        %vm3512 = vcmp.lt.f32.partialorder %v3511, 0.0004427343
        %v3513 = vsel %vm3512, %v3510, %v3507
        %v3514 = vadd.f32 %v3392, 1.0
        %v3515 = vlog2.pop %v3514
        %v3516 = vmul.f32 %v3515, 0.6931472
        %v3517 = vmul.f32 -0.5, %v3392
        %v3518 = vadd.f32 %v3517, 1.0
        %v3519 = vmul.f32 %v3518, %v3392
        %v3520 = vand.u32 2147483647, %v3392
        %vm3521 = vcmp.lt.f32.partialorder %v3520, 0.0004427343
        %v3522 = vsel %vm3521, %v3519, %v3516
        %v3523 = vadd.f32 %v3394, 1.0
        %v3524 = vlog2.pop %v3523
        %v3525 = vmul.f32 %v3524, 0.6931472
        %v3526 = vmul.f32 -0.5, %v3394
        %v3527 = vadd.f32 %v3526, 1.0
        %v3528 = vmul.f32 %v3527, %v3394
        %v3529 = vand.u32 2147483647, %v3394
        %vm3530 = vcmp.lt.f32.partialorder %v3529, 0.0004427343
        %v3531 = vsel %vm3530, %v3528, %v3525
        %v3532 = vadd.f32 %v3396, 1.0
        %v3533 = vlog2.pop %v3532
        %v3534 = vmul.f32 %v3533, 0.6931472
        %v3535 = vmul.f32 -0.5, %v3396
        %v3536 = vadd.f32 %v3535, 1.0
        %v3537 = vmul.f32 %v3536, %v3396
        %v3538 = vand.u32 2147483647, %v3396
        %vm3539 = vcmp.lt.f32.partialorder %v3538, 0.0004427343
        %v3540 = vsel %vm3539, %v3537, %v3534
        %v3541 = vmul.f32 %v3405, %v816
        %v3542 = vmul.f32 %v3414, %v816
        %v3543 = vmul.f32 %v3423, %v816
        %v3544 = vmul.f32 %v3432, %v816
        %v3545 = vmul.f32 %v3441, %v816
        %v3546 = vmul.f32 %v3450, %v816
        %v3547 = vmul.f32 %v3459, %v816
        %v3548 = vmul.f32 %v3468, %v816
        %v3549 = vmul.f32 %v3477, %v816
        %v3550 = vmul.f32 %v3486, %v816
        %v3551 = vmul.f32 %v3495, %v816
        %v3552 = vmul.f32 %v3504, %v816
        %v3553 = vmul.f32 %v3513, %v816
        %v3554 = vmul.f32 %v3522, %v816
        %v3555 = vmul.f32 %v3531, %v816
        %v3556 = vmul.f32 %v3540, %v816
        %v3557 = vsel %vm3333, %v3239, %v3541
        %v3558 = vsel %vm3334, %v3244, %v3542
        %v3559 = vsel %vm3335, %v3249, %v3543
        %v3560 = vsel %vm3336, %v3254, %v3544
        %v3561 = vsel %vm3337, %v3259, %v3545
        %v3562 = vsel %vm3338, %v3264, %v3546
        %v3563 = vsel %vm3339, %v3269, %v3547
        %v3564 = vsel %vm3340, %v3274, %v3548
        %v3565 = vsel %vm3341, %v3279, %v3549
        %v3566 = vsel %vm3342, %v3284, %v3550
        %v3567 = vsel %vm3343, %v3289, %v3551
        %v3568 = vsel %vm3344, %v3294, %v3552
        %v3569 = vsel %vm3345, %v3299, %v3553
        %v3570 = vsel %vm3346, %v3304, %v3554
        %v3571 = vsel %vm3347, %v3309, %v3555
        %v3572 = vsel %vm3348, %v3314, %v3556
        %s3573 = scalar_lea.vmem [#allocation2], 768
        %v3574 = vld [vmem:[%s3573] sm:$0xff]
        %v3575 = vld [vmem:[%s3573 + $0x8] sm:$0xff]
        %v3576 = vld [vmem:[%s3573 + $0x10] sm:$0xff]
        %v3577 = vld [vmem:[%s3573 + $0x18] sm:$0xff]
        %v3578 = vld [vmem:[%s3573 + $0x20] sm:$0xff]
        %v3579 = vld [vmem:[%s3573 + $0x28] sm:$0xff]
        %v3580 = vld [vmem:[%s3573 + $0x30] sm:$0xff]
        %v3581 = vld [vmem:[%s3573 + $0x38] sm:$0xff]
        %v3582 = vld [vmem:[%s3573 + $0x40] sm:$0xff]
        %v3583 = vld [vmem:[%s3573 + $0x48] sm:$0xff]
        %v3584 = vld [vmem:[%s3573 + $0x50] sm:$0xff]
        %v3585 = vld [vmem:[%s3573 + $0x58] sm:$0xff]
        %v3586 = vld [vmem:[%s3573 + $0x60] sm:$0xff]
        %v3587 = vld [vmem:[%s3573 + $0x68] sm:$0xff]
        %v3588 = vld [vmem:[%s3573 + $0x70] sm:$0xff]
        %v3589 = vld [vmem:[%s3573 + $0x78] sm:$0xff]
        %v3590 = vld [vmem:[%s4 + $0x7] sm:$0x1]
        %v3591 = vlaneseq
        %v3592 = vshrl.u32 %v3591, 7
        %v3593 = vsub.s32 0, %v3592
        %v3594 = vrot.slane %v3590, %v3593
        %3595 = vmatprep.subr.mxu0 0.0
        %3596 = vmatpush1.msra.mxu0 %v3574
        %3597 = vmatprep.subr.mxu0 0.0
        %3598 = vmatpush1.msra.mxu0 %v3575
        %3599 = vmatprep.subr.mxu0 0.0
        %3600 = vmatpush1.msra.mxu0 %v3576
        %3601 = vmatprep.subr.mxu0 0.0
        %3602 = vmatpush1.msra.mxu0 %v3577
        %3603 = vmatprep.subr.mxu0 0.0
        %3604 = vmatpush1.msra.mxu0 %v3578
        %3605 = vmatprep.subr.mxu0 0.0
        %3606 = vmatpush1.msra.mxu0 %v3579
        %3607 = vmatprep.subr.mxu0 0.0
        %3608 = vmatpush1.msra.mxu0 %v3580
        %3609 = vmatprep.subr.mxu0 0.0
        %3610 = vmatpush1.msra.mxu0 %v3581
        %3611 = vmatprep.subr.mxu0 0.0
        %3612 = vmatpush1.msra.mxu0 %v3582
        %3613 = vmatprep.subr.mxu0 0.0
        %3614 = vmatpush1.msra.mxu0 %v3583
        %3615 = vmatprep.subr.mxu0 0.0
        %3616 = vmatpush1.msra.mxu0 %v3584
        %3617 = vmatprep.subr.mxu0 0.0
        %3618 = vmatpush1.msra.mxu0 %v3585
        %3619 = vmatprep.subr.mxu0 0.0
        %3620 = vmatpush1.msra.mxu0 %v3586
        %3621 = vmatprep.subr.mxu0 0.0
        %3622 = vmatpush1.msra.mxu0 %v3587
        %3623 = vmatprep.subr.mxu0 0.0
        %3624 = vmatpush1.msra.mxu0 %v3588
        %3625 = vmatprep.subr.mxu0 0.0
        %3626 = vmatpush1.msra.mxu0 %v3589
        %3627 = vmatprep.subr.mxu0 0.0
        %3628 = vmatpush1.msra.mxu0 0.0
        %3629 = vmatprep.subr.mxu0 0.0
        %3630 = vmatpush1.msra.mxu0 0.0
        %3631 = vmatprep.subr.mxu0 0.0
        %3632 = vmatpush1.msra.mxu0 0.0
        %3633 = vmatprep.subr.mxu0 0.0
        %3634 = vmatpush1.msra.mxu0 0.0
        %3635 = vmatprep.subr.mxu0 0.0
        %3636 = vmatpush1.msra.mxu0 0.0
        %3637 = vmatprep.subr.mxu0 0.0
        %3638 = vmatpush1.msra.mxu0 0.0
        %3639 = vmatprep.subr.mxu0 0.0
        %3640 = vmatpush1.msra.mxu0 0.0
        %3641 = vmatprep.subr.mxu0 0.0
        %3642 = vmatpush1.msra.mxu0 0.0
        %3643 = vmatprep.subr.mxu0 0.0
        %3644 = vmatpush1.msra.mxu0 0.0
        %3645 = vmatprep.subr.mxu0 0.0
        %3646 = vmatpush1.msra.mxu0 0.0
        %3647 = vmatprep.subr.mxu0 0.0
        %3648 = vmatpush1.msra.mxu0 0.0
        %3649 = vmatprep.subr.mxu0 0.0
        %3650 = vmatpush1.msra.mxu0 0.0
        %3651 = vmatprep.subr.mxu0 0.0
        %3652 = vmatpush1.msra.mxu0 0.0
        %3653 = vmatprep.subr.mxu0 0.0
        %3654 = vmatpush1.msra.mxu0 0.0
        %3655 = vmatprep.subr.mxu0 0.0
        %3656 = vmatpush1.msra.mxu0 0.0
        %3657 = vmatprep.subr.mxu0 0.0
        %3658 = vmatpush1.msra.mxu0 0.0
        %3659 = vmatprep.mubr.f32.mxu0 0.0
        %3660 = vmatmul.mubr.f32.gmra.mrb[0].mxu0 %v3557
        %v3661 = vpop.f32.mrb[0].mxu0
        %v3662 = vadd.f32 %v3594, %v3661
        %v3663 = vpop.f32.mrb[0].mxu0
        %3664 = vmatprep.mubr.f32.mxu0 0.0
        %3665 = vmatmul.mubr.f32.gmra.mrb[0].mxu0 %v3558
        %v3666 = vpop.f32.mrb[0].mxu0
        %v3667 = vadd.f32 %v3594, %v3666
        %v3668 = vpop.f32.mrb[0].mxu0
        %3669 = vmatprep.mubr.f32.mxu0 0.0
        %3670 = vmatmul.mubr.f32.gmra.mrb[0].mxu0 %v3559
        %v3671 = vpop.f32.mrb[0].mxu0
        %v3672 = vadd.f32 %v3594, %v3671
        %v3673 = vpop.f32.mrb[0].mxu0
        %3674 = vmatprep.mubr.f32.mxu0 0.0
        %3675 = vmatmul.mubr.f32.gmra.mrb[0].mxu0 %v3560
        %v3676 = vpop.f32.mrb[0].mxu0
        %v3677 = vadd.f32 %v3594, %v3676
        %v3678 = vpop.f32.mrb[0].mxu0
        %3679 = vmatprep.mubr.f32.mxu0 0.0
        %3680 = vmatmul.mubr.f32.gmra.mrb[0].mxu0 %v3561
        %v3681 = vpop.f32.mrb[0].mxu0
        %v3682 = vadd.f32 %v3594, %v3681
        %v3683 = vpop.f32.mrb[0].mxu0
        %3684 = vmatprep.mubr.f32.mxu0 0.0
        %3685 = vmatmul.mubr.f32.gmra.mrb[0].mxu0 %v3562
        %v3686 = vpop.f32.mrb[0].mxu0
        %v3687 = vadd.f32 %v3594, %v3686
        %v3688 = vpop.f32.mrb[0].mxu0
        %3689 = vmatprep.mubr.f32.mxu0 0.0
        %3690 = vmatmul.mubr.f32.gmra.mrb[0].mxu0 %v3563
        %v3691 = vpop.f32.mrb[0].mxu0
        %v3692 = vadd.f32 %v3594, %v3691
        %v3693 = vpop.f32.mrb[0].mxu0
        %3694 = vmatprep.mubr.f32.mxu0 0.0
        %3695 = vmatmul.mubr.f32.gmra.mrb[0].mxu0 %v3564
        %v3696 = vpop.f32.mrb[0].mxu0
        %v3697 = vadd.f32 %v3594, %v3696
        %v3698 = vpop.f32.mrb[0].mxu0
        %3699 = vmatprep.mubr.f32.mxu0 0.0
        %3700 = vmatmul.mubr.f32.gmra.mrb[0].mxu0 %v3565
        %v3701 = vpop.f32.mrb[0].mxu0
        %v3702 = vadd.f32 %v3594, %v3701
        %v3703 = vpop.f32.mrb[0].mxu0
        %3704 = vmatprep.mubr.f32.mxu0 0.0
        %3705 = vmatmul.mubr.f32.gmra.mrb[0].mxu0 %v3566
        %v3706 = vpop.f32.mrb[0].mxu0
        %v3707 = vadd.f32 %v3594, %v3706
        %v3708 = vpop.f32.mrb[0].mxu0
        %3709 = vmatprep.mubr.f32.mxu0 0.0
        %3710 = vmatmul.mubr.f32.gmra.mrb[0].mxu0 %v3567
        %v3711 = vpop.f32.mrb[0].mxu0
        %v3712 = vadd.f32 %v3594, %v3711
        %v3713 = vpop.f32.mrb[0].mxu0
        %3714 = vmatprep.mubr.f32.mxu0 0.0
        %3715 = vmatmul.mubr.f32.gmra.mrb[0].mxu0 %v3568
        %v3716 = vpop.f32.mrb[0].mxu0
        %v3717 = vadd.f32 %v3594, %v3716
        %v3718 = vpop.f32.mrb[0].mxu0
        %3719 = vmatprep.mubr.f32.mxu0 0.0
        %3720 = vmatmul.mubr.f32.gmra.mrb[0].mxu0 %v3569
        %v3721 = vpop.f32.mrb[0].mxu0
        %v3722 = vadd.f32 %v3594, %v3721
        %v3723 = vpop.f32.mrb[0].mxu0
        %3724 = vmatprep.mubr.f32.mxu0 0.0
        %3725 = vmatmul.mubr.f32.gmra.mrb[0].mxu0 %v3570
        %v3726 = vpop.f32.mrb[0].mxu0
        %v3727 = vadd.f32 %v3594, %v3726
        %v3728 = vpop.f32.mrb[0].mxu0
        %3729 = vmatprep.mubr.f32.mxu0 0.0
        %3730 = vmatmul.mubr.f32.gmra.mrb[0].mxu0 %v3571
        %v3731 = vpop.f32.mrb[0].mxu0
        %v3732 = vadd.f32 %v3594, %v3731
        %v3733 = vpop.f32.mrb[0].mxu0
        %3734 = vmatprep.mubr.f32.mxu0 0.0
        %3735 = vmatmul.mubr.f32.gmra.mrb[0].mxu0 %v3572
        %v3736 = vpop.f32.mrb[0].mxu0
        %v3737 = vadd.f32 %v3594, %v3736
        %v3738 = vpop.f32.mrb[0].mxu0
        %3739 = vdwg.mxu0
        %v3740 = vmul.f32 %v3662, 100.0
        %v3741 = vmul.f32 %v3667, 100.0
        %v3742 = vmul.f32 %v3672, 100.0
        %v3743 = vmul.f32 %v3677, 100.0
        %v3744 = vmul.f32 %v3682, 100.0
        %v3745 = vmul.f32 %v3687, 100.0
        %v3746 = vmul.f32 %v3692, 100.0
        %v3747 = vmul.f32 %v3697, 100.0
        %v3748 = vmul.f32 %v3702, 100.0
        %v3749 = vmul.f32 %v3707, 100.0
        %v3750 = vmul.f32 %v3712, 100.0
        %v3751 = vmul.f32 %v3717, 100.0
        %v3752 = vmul.f32 %v3722, 100.0
        %v3753 = vmul.f32 %v3727, 100.0
        %v3754 = vmul.f32 %v3732, 100.0
        %v3755 = vmul.f32 %v3737, 100.0
        %vm3756 = vcmp.gt.f32.partialorder %v3740, 20.0
        %vm3757 = vcmp.gt.f32.partialorder %v3741, 20.0
        %vm3758 = vcmp.gt.f32.partialorder %v3742, 20.0
        %vm3759 = vcmp.gt.f32.partialorder %v3743, 20.0
        %vm3760 = vcmp.gt.f32.partialorder %v3744, 20.0
        %vm3761 = vcmp.gt.f32.partialorder %v3745, 20.0
        %vm3762 = vcmp.gt.f32.partialorder %v3746, 20.0
        %vm3763 = vcmp.gt.f32.partialorder %v3747, 20.0
        %vm3764 = vcmp.gt.f32.partialorder %v3748, 20.0
        %vm3765 = vcmp.gt.f32.partialorder %v3749, 20.0
        %vm3766 = vcmp.gt.f32.partialorder %v3750, 20.0
        %vm3767 = vcmp.gt.f32.partialorder %v3751, 20.0
        %vm3768 = vcmp.gt.f32.partialorder %v3752, 20.0
        %vm3769 = vcmp.gt.f32.partialorder %v3753, 20.0
        %vm3770 = vcmp.gt.f32.partialorder %v3754, 20.0
        %vm3771 = vcmp.gt.f32.partialorder %v3755, 20.0
        %v3772 = vmin.f32 %v3740, 20.0
        %v3773 = vmin.f32 %v3741, 20.0
        %v3774 = vmin.f32 %v3742, 20.0
        %v3775 = vmin.f32 %v3743, 20.0
        %v3776 = vmin.f32 %v3744, 20.0
        %v3777 = vmin.f32 %v3745, 20.0
        %v3778 = vmin.f32 %v3746, 20.0
        %v3779 = vmin.f32 %v3747, 20.0
        %v3780 = vmin.f32 %v3748, 20.0
        %v3781 = vmin.f32 %v3749, 20.0
        %v3782 = vmin.f32 %v3750, 20.0
        %v3783 = vmin.f32 %v3751, 20.0
        %v3784 = vmin.f32 %v3752, 20.0
        %v3785 = vmin.f32 %v3753, 20.0
        %v3786 = vmin.f32 %v3754, 20.0
        %v3787 = vmin.f32 %v3755, 20.0
        %v3788 = vmul.f32 %v3772, 1.442695
        %v3789 = vpow.pop %v3788
        %v3790 = vmul.f32 %v3773, 1.442695
        %v3791 = vpow.pop %v3790
        %v3792 = vmul.f32 %v3774, 1.442695
        %v3793 = vpow.pop %v3792
        %v3794 = vmul.f32 %v3775, 1.442695
        %v3795 = vpow.pop %v3794
        %v3796 = vmul.f32 %v3776, 1.442695
        %v3797 = vpow.pop %v3796
        %v3798 = vmul.f32 %v3777, 1.442695
        %v3799 = vpow.pop %v3798
        %v3800 = vmul.f32 %v3778, 1.442695
        %v3801 = vpow.pop %v3800
        %v3802 = vmul.f32 %v3779, 1.442695
        %v3803 = vpow.pop %v3802
        %v3804 = vmul.f32 %v3780, 1.442695
        %v3805 = vpow.pop %v3804
        %v3806 = vmul.f32 %v3781, 1.442695
        %v3807 = vpow.pop %v3806
        %v3808 = vmul.f32 %v3782, 1.442695
        %v3809 = vpow.pop %v3808
        %v3810 = vmul.f32 %v3783, 1.442695
        %v3811 = vpow.pop %v3810
        %v3812 = vmul.f32 %v3784, 1.442695
        %v3813 = vpow.pop %v3812
        %v3814 = vmul.f32 %v3785, 1.442695
        %v3815 = vpow.pop %v3814
        %v3816 = vmul.f32 %v3786, 1.442695
        %v3817 = vpow.pop %v3816
        %v3818 = vmul.f32 %v3787, 1.442695
        %v3819 = vpow.pop %v3818
        %v3820 = vadd.f32 %v3789, 1.0
        %v3821 = vlog2.pop %v3820
        %v3822 = vmul.f32 %v3821, 0.6931472
        %v3823 = vmul.f32 -0.5, %v3789
        %v3824 = vadd.f32 %v3823, 1.0
        %v3825 = vmul.f32 %v3824, %v3789
        %v3826 = vand.u32 2147483647, %v3789
        %vm3827 = vcmp.lt.f32.partialorder %v3826, 0.0004427343
        %v3828 = vsel %vm3827, %v3825, %v3822
        %v3829 = vadd.f32 %v3791, 1.0
        %v3830 = vlog2.pop %v3829
        %v3831 = vmul.f32 %v3830, 0.6931472
        %v3832 = vmul.f32 -0.5, %v3791
        %v3833 = vadd.f32 %v3832, 1.0
        %v3834 = vmul.f32 %v3833, %v3791
        %v3835 = vand.u32 2147483647, %v3791
        %vm3836 = vcmp.lt.f32.partialorder %v3835, 0.0004427343
        %v3837 = vsel %vm3836, %v3834, %v3831
        %v3838 = vadd.f32 %v3793, 1.0
        %v3839 = vlog2.pop %v3838
        %v3840 = vmul.f32 %v3839, 0.6931472
        %v3841 = vmul.f32 -0.5, %v3793
        %v3842 = vadd.f32 %v3841, 1.0
        %v3843 = vmul.f32 %v3842, %v3793
        %v3844 = vand.u32 2147483647, %v3793
        %vm3845 = vcmp.lt.f32.partialorder %v3844, 0.0004427343
        %v3846 = vsel %vm3845, %v3843, %v3840
        %v3847 = vadd.f32 %v3795, 1.0
        %v3848 = vlog2.pop %v3847
        %v3849 = vmul.f32 %v3848, 0.6931472
        %v3850 = vmul.f32 -0.5, %v3795
        %v3851 = vadd.f32 %v3850, 1.0
        %v3852 = vmul.f32 %v3851, %v3795
        %v3853 = vand.u32 2147483647, %v3795
        %vm3854 = vcmp.lt.f32.partialorder %v3853, 0.0004427343
        %v3855 = vsel %vm3854, %v3852, %v3849
        %v3856 = vadd.f32 %v3797, 1.0
        %v3857 = vlog2.pop %v3856
        %v3858 = vmul.f32 %v3857, 0.6931472
        %v3859 = vmul.f32 -0.5, %v3797
        %v3860 = vadd.f32 %v3859, 1.0
        %v3861 = vmul.f32 %v3860, %v3797
        %v3862 = vand.u32 2147483647, %v3797
        %vm3863 = vcmp.lt.f32.partialorder %v3862, 0.0004427343
        %v3864 = vsel %vm3863, %v3861, %v3858
        %v3865 = vadd.f32 %v3799, 1.0
        %v3866 = vlog2.pop %v3865
        %v3867 = vmul.f32 %v3866, 0.6931472
        %v3868 = vmul.f32 -0.5, %v3799
        %v3869 = vadd.f32 %v3868, 1.0
        %v3870 = vmul.f32 %v3869, %v3799
        %v3871 = vand.u32 2147483647, %v3799
        %vm3872 = vcmp.lt.f32.partialorder %v3871, 0.0004427343
        %v3873 = vsel %vm3872, %v3870, %v3867
        %v3874 = vadd.f32 %v3801, 1.0
        %v3875 = vlog2.pop %v3874
        %v3876 = vmul.f32 %v3875, 0.6931472
        %v3877 = vmul.f32 -0.5, %v3801
        %v3878 = vadd.f32 %v3877, 1.0
        %v3879 = vmul.f32 %v3878, %v3801
        %v3880 = vand.u32 2147483647, %v3801
        %vm3881 = vcmp.lt.f32.partialorder %v3880, 0.0004427343
        %v3882 = vsel %vm3881, %v3879, %v3876
        %v3883 = vadd.f32 %v3803, 1.0
        %v3884 = vlog2.pop %v3883
        %v3885 = vmul.f32 %v3884, 0.6931472
        %v3886 = vmul.f32 -0.5, %v3803
        %v3887 = vadd.f32 %v3886, 1.0
        %v3888 = vmul.f32 %v3887, %v3803
        %v3889 = vand.u32 2147483647, %v3803
        %vm3890 = vcmp.lt.f32.partialorder %v3889, 0.0004427343
        %v3891 = vsel %vm3890, %v3888, %v3885
        %v3892 = vadd.f32 %v3805, 1.0
        %v3893 = vlog2.pop %v3892
        %v3894 = vmul.f32 %v3893, 0.6931472
        %v3895 = vmul.f32 -0.5, %v3805
        %v3896 = vadd.f32 %v3895, 1.0
        %v3897 = vmul.f32 %v3896, %v3805
        %v3898 = vand.u32 2147483647, %v3805
        %vm3899 = vcmp.lt.f32.partialorder %v3898, 0.0004427343
        %v3900 = vsel %vm3899, %v3897, %v3894
        %v3901 = vadd.f32 %v3807, 1.0
        %v3902 = vlog2.pop %v3901
        %v3903 = vmul.f32 %v3902, 0.6931472
        %v3904 = vmul.f32 -0.5, %v3807
        %v3905 = vadd.f32 %v3904, 1.0
        %v3906 = vmul.f32 %v3905, %v3807
        %v3907 = vand.u32 2147483647, %v3807
        %vm3908 = vcmp.lt.f32.partialorder %v3907, 0.0004427343
        %v3909 = vsel %vm3908, %v3906, %v3903
        %v3910 = vadd.f32 %v3809, 1.0
        %v3911 = vlog2.pop %v3910
        %v3912 = vmul.f32 %v3911, 0.6931472
        %v3913 = vmul.f32 -0.5, %v3809
        %v3914 = vadd.f32 %v3913, 1.0
        %v3915 = vmul.f32 %v3914, %v3809
        %v3916 = vand.u32 2147483647, %v3809
        %vm3917 = vcmp.lt.f32.partialorder %v3916, 0.0004427343
        %v3918 = vsel %vm3917, %v3915, %v3912
        %v3919 = vadd.f32 %v3811, 1.0
        %v3920 = vlog2.pop %v3919
        %v3921 = vmul.f32 %v3920, 0.6931472
        %v3922 = vmul.f32 -0.5, %v3811
        %v3923 = vadd.f32 %v3922, 1.0
        %v3924 = vmul.f32 %v3923, %v3811
        %v3925 = vand.u32 2147483647, %v3811
        %vm3926 = vcmp.lt.f32.partialorder %v3925, 0.0004427343
        %v3927 = vsel %vm3926, %v3924, %v3921
        %v3928 = vadd.f32 %v3813, 1.0
        %v3929 = vlog2.pop %v3928
        %v3930 = vmul.f32 %v3929, 0.6931472
        %v3931 = vmul.f32 -0.5, %v3813
        %v3932 = vadd.f32 %v3931, 1.0
        %v3933 = vmul.f32 %v3932, %v3813
        %v3934 = vand.u32 2147483647, %v3813
        %vm3935 = vcmp.lt.f32.partialorder %v3934, 0.0004427343
        %v3936 = vsel %vm3935, %v3933, %v3930
        %v3937 = vadd.f32 %v3815, 1.0
        %v3938 = vlog2.pop %v3937
        %v3939 = vmul.f32 %v3938, 0.6931472
        %v3940 = vmul.f32 -0.5, %v3815
        %v3941 = vadd.f32 %v3940, 1.0
        %v3942 = vmul.f32 %v3941, %v3815
        %v3943 = vand.u32 2147483647, %v3815
        %vm3944 = vcmp.lt.f32.partialorder %v3943, 0.0004427343
        %v3945 = vsel %vm3944, %v3942, %v3939
        %v3946 = vadd.f32 %v3817, 1.0
        %v3947 = vlog2.pop %v3946
        %v3948 = vmul.f32 %v3947, 0.6931472
        %v3949 = vmul.f32 -0.5, %v3817
        %v3950 = vadd.f32 %v3949, 1.0
        %v3951 = vmul.f32 %v3950, %v3817
        %v3952 = vand.u32 2147483647, %v3817
        %vm3953 = vcmp.lt.f32.partialorder %v3952, 0.0004427343
        %v3954 = vsel %vm3953, %v3951, %v3948
        %v3955 = vadd.f32 %v3819, 1.0
        %v3956 = vlog2.pop %v3955
        %v3957 = vmul.f32 %v3956, 0.6931472
        %v3958 = vmul.f32 -0.5, %v3819
        %v3959 = vadd.f32 %v3958, 1.0
        %v3960 = vmul.f32 %v3959, %v3819
        %v3961 = vand.u32 2147483647, %v3819
        %vm3962 = vcmp.lt.f32.partialorder %v3961, 0.0004427343
        %v3963 = vsel %vm3962, %v3960, %v3957
        %v3964 = vmul.f32 %v3828, %v816
        %v3965 = vmul.f32 %v3837, %v816
        %v3966 = vmul.f32 %v3846, %v816
        %v3967 = vmul.f32 %v3855, %v816
        %v3968 = vmul.f32 %v3864, %v816
        %v3969 = vmul.f32 %v3873, %v816
        %v3970 = vmul.f32 %v3882, %v816
        %v3971 = vmul.f32 %v3891, %v816
        %v3972 = vmul.f32 %v3900, %v816
        %v3973 = vmul.f32 %v3909, %v816
        %v3974 = vmul.f32 %v3918, %v816
        %v3975 = vmul.f32 %v3927, %v816
        %v3976 = vmul.f32 %v3936, %v816
        %v3977 = vmul.f32 %v3945, %v816
        %v3978 = vmul.f32 %v3954, %v816
        %v3979 = vmul.f32 %v3963, %v816
        %v3980 = vsel %vm3756, %v3662, %v3964
        %v3981 = vsel %vm3757, %v3667, %v3965
        %v3982 = vsel %vm3758, %v3672, %v3966
        %v3983 = vsel %vm3759, %v3677, %v3967
        %v3984 = vsel %vm3760, %v3682, %v3968
        %v3985 = vsel %vm3761, %v3687, %v3969
        %v3986 = vsel %vm3762, %v3692, %v3970
        %v3987 = vsel %vm3763, %v3697, %v3971
        %v3988 = vsel %vm3764, %v3702, %v3972
        %v3989 = vsel %vm3765, %v3707, %v3973
        %v3990 = vsel %vm3766, %v3712, %v3974
        %v3991 = vsel %vm3767, %v3717, %v3975
        %v3992 = vsel %vm3768, %v3722, %v3976
        %v3993 = vsel %vm3769, %v3727, %v3977
        %v3994 = vsel %vm3770, %v3732, %v3978
        %v3995 = vsel %vm3771, %v3737, %v3979
        %v3996 = vld [vmem:[%s5] sm:$0xff]
        %v3997 = vld [vmem:[%s5 + $0x8] sm:$0xff]
        %v3998 = vld [vmem:[%s5 + $0x10] sm:$0xff]
        %v3999 = vld [vmem:[%s5 + $0x18] sm:$0xff]
        %v4000 = vld [vmem:[%s5 + $0x20] sm:$0xff]
        %v4001 = vld [vmem:[%s5 + $0x28] sm:$0xff]
        %v4002 = vld [vmem:[%s5 + $0x30] sm:$0xff]
        %v4003 = vld [vmem:[%s5 + $0x38] sm:$0xff]
        %v4004 = vld [vmem:[%s5 + $0x40] sm:$0xff]
        %v4005 = vld [vmem:[%s5 + $0x48] sm:$0xff]
        %v4006 = vld [vmem:[%s5 + $0x50] sm:$0xff]
        %v4007 = vld [vmem:[%s5 + $0x58] sm:$0xff]
        %v4008 = vld [vmem:[%s5 + $0x60] sm:$0xff]
        %v4009 = vld [vmem:[%s5 + $0x68] sm:$0xff]
        %v4010 = vld [vmem:[%s5 + $0x70] sm:$0xff]
        %v4011 = vld [vmem:[%s5 + $0x78] sm:$0xff]
        %v4012 = vld [vmem:[%s6] sm:$0x1]
        %v4014 = vlaneseq
        %v4015 = vshrl.u32 %v4014, 7
        %v4016 = vsub.s32 0, %v4015
        %v4017 = vrot.slane %v4012, %v4016
        %4019 = vmatprep.subr.mxu0 0.0
        %4020 = vmatpush1.msra.mxu0 %v3996
        %4021 = vmatprep.subr.mxu0 0.0
        %4022 = vmatpush1.msra.mxu0 %v3997
        %4023 = vmatprep.subr.mxu0 0.0
        %4024 = vmatpush1.msra.mxu0 %v3998
        %4025 = vmatprep.subr.mxu0 0.0
        %4026 = vmatpush1.msra.mxu0 %v3999
        %4027 = vmatprep.subr.mxu0 0.0
        %4028 = vmatpush1.msra.mxu0 %v4000
        %4029 = vmatprep.subr.mxu0 0.0
        %4030 = vmatpush1.msra.mxu0 %v4001
        %4031 = vmatprep.subr.mxu0 0.0
        %4032 = vmatpush1.msra.mxu0 %v4002
        %4033 = vmatprep.subr.mxu0 0.0
        %4034 = vmatpush1.msra.mxu0 %v4003
        %4035 = vmatprep.subr.mxu0 0.0
        %4036 = vmatpush1.msra.mxu0 %v4004
        %4037 = vmatprep.subr.mxu0 0.0
        %4038 = vmatpush1.msra.mxu0 %v4005
        %4039 = vmatprep.subr.mxu0 0.0
        %4040 = vmatpush1.msra.mxu0 %v4006
        %4041 = vmatprep.subr.mxu0 0.0
        %4042 = vmatpush1.msra.mxu0 %v4007
        %4043 = vmatprep.subr.mxu0 0.0
        %4044 = vmatpush1.msra.mxu0 %v4008
        %4045 = vmatprep.subr.mxu0 0.0
        %4046 = vmatpush1.msra.mxu0 %v4009
        %4047 = vmatprep.subr.mxu0 0.0
        %4048 = vmatpush1.msra.mxu0 %v4010
        %4049 = vmatprep.subr.mxu0 0.0
        %4050 = vmatpush1.msra.mxu0 %v4011
        %4051 = vmatprep.subr.mxu0 0.0
        %4052 = vmatpush1.msra.mxu0 0.0
        %4053 = vmatprep.subr.mxu0 0.0
        %4054 = vmatpush1.msra.mxu0 0.0
        %4055 = vmatprep.subr.mxu0 0.0
        %4056 = vmatpush1.msra.mxu0 0.0
        %4057 = vmatprep.subr.mxu0 0.0
        %4058 = vmatpush1.msra.mxu0 0.0
        %4059 = vmatprep.subr.mxu0 0.0
        %4060 = vmatpush1.msra.mxu0 0.0
        %4061 = vmatprep.subr.mxu0 0.0
        %4062 = vmatpush1.msra.mxu0 0.0
        %4063 = vmatprep.subr.mxu0 0.0
        %4064 = vmatpush1.msra.mxu0 0.0
        %4065 = vmatprep.subr.mxu0 0.0
        %4066 = vmatpush1.msra.mxu0 0.0
        %4067 = vmatprep.subr.mxu0 0.0
        %4068 = vmatpush1.msra.mxu0 0.0
        %4069 = vmatprep.subr.mxu0 0.0
        %4070 = vmatpush1.msra.mxu0 0.0
        %4071 = vmatprep.subr.mxu0 0.0
        %4072 = vmatpush1.msra.mxu0 0.0
        %4073 = vmatprep.subr.mxu0 0.0
        %4074 = vmatpush1.msra.mxu0 0.0
        %4075 = vmatprep.subr.mxu0 0.0
        %4076 = vmatpush1.msra.mxu0 0.0
        %4077 = vmatprep.subr.mxu0 0.0
        %4078 = vmatpush1.msra.mxu0 0.0
        %4079 = vmatprep.subr.mxu0 0.0
        %4080 = vmatpush1.msra.mxu0 0.0
        %4081 = vmatprep.subr.mxu0 0.0
        %4082 = vmatpush1.msra.mxu0 0.0
        %4083 = vmatprep.mubr.f32.mxu0 0.0
        %4084 = vmatmul.mubr.f32.gmra.mrb[0].mxu0 %v3980
        %v4085 = vpop.f32.mrb[0].mxu0
        %v4086 = vadd.f32 %v4017, %v4085
        %v4087 = vpop.f32.mrb[0].mxu0
        %4088 = vmatprep.mubr.f32.mxu0 0.0
        %4089 = vmatmul.mubr.f32.gmra.mrb[0].mxu0 %v3981
        %v4090 = vpop.f32.mrb[0].mxu0
        %v4091 = vadd.f32 %v4017, %v4090
        %v4092 = vpop.f32.mrb[0].mxu0
        %4093 = vmatprep.mubr.f32.mxu0 0.0
        %4094 = vmatmul.mubr.f32.gmra.mrb[0].mxu0 %v3982
        %v4095 = vpop.f32.mrb[0].mxu0
        %v4096 = vadd.f32 %v4017, %v4095
        %v4097 = vpop.f32.mrb[0].mxu0
        %4098 = vmatprep.mubr.f32.mxu0 0.0
        %4099 = vmatmul.mubr.f32.gmra.mrb[0].mxu0 %v3983
        %v4100 = vpop.f32.mrb[0].mxu0
        %v4101 = vadd.f32 %v4017, %v4100
        %v4102 = vpop.f32.mrb[0].mxu0
        %4103 = vmatprep.mubr.f32.mxu0 0.0
        %4104 = vmatmul.mubr.f32.gmra.mrb[0].mxu0 %v3984
        %v4105 = vpop.f32.mrb[0].mxu0
        %v4106 = vadd.f32 %v4017, %v4105
        %v4107 = vpop.f32.mrb[0].mxu0
        %4108 = vmatprep.mubr.f32.mxu0 0.0
        %4109 = vmatmul.mubr.f32.gmra.mrb[0].mxu0 %v3985
        %v4110 = vpop.f32.mrb[0].mxu0
        %v4111 = vadd.f32 %v4017, %v4110
        %v4112 = vpop.f32.mrb[0].mxu0
        %4113 = vmatprep.mubr.f32.mxu0 0.0
        %4114 = vmatmul.mubr.f32.gmra.mrb[0].mxu0 %v3986
        %v4115 = vpop.f32.mrb[0].mxu0
        %v4116 = vadd.f32 %v4017, %v4115
        %v4117 = vpop.f32.mrb[0].mxu0
        %4118 = vmatprep.mubr.f32.mxu0 0.0
        %4119 = vmatmul.mubr.f32.gmra.mrb[0].mxu0 %v3987
        %v4120 = vpop.f32.mrb[0].mxu0
        %v4121 = vadd.f32 %v4017, %v4120
        %v4122 = vpop.f32.mrb[0].mxu0
        %4123 = vmatprep.mubr.f32.mxu0 0.0
        %4124 = vmatmul.mubr.f32.gmra.mrb[0].mxu0 %v3988
        %v4125 = vpop.f32.mrb[0].mxu0
        %v4126 = vadd.f32 %v4017, %v4125
        %v4127 = vpop.f32.mrb[0].mxu0
        %4128 = vmatprep.mubr.f32.mxu0 0.0
        %4129 = vmatmul.mubr.f32.gmra.mrb[0].mxu0 %v3989
        %v4130 = vpop.f32.mrb[0].mxu0
        %v4131 = vadd.f32 %v4017, %v4130
        %v4132 = vpop.f32.mrb[0].mxu0
        %4133 = vmatprep.mubr.f32.mxu0 0.0
        %4134 = vmatmul.mubr.f32.gmra.mrb[0].mxu0 %v3990
        %v4135 = vpop.f32.mrb[0].mxu0
        %v4136 = vadd.f32 %v4017, %v4135
        %v4137 = vpop.f32.mrb[0].mxu0
        %4138 = vmatprep.mubr.f32.mxu0 0.0
        %4139 = vmatmul.mubr.f32.gmra.mrb[0].mxu0 %v3991
        %v4140 = vpop.f32.mrb[0].mxu0
        %v4141 = vadd.f32 %v4017, %v4140
        %v4142 = vpop.f32.mrb[0].mxu0
        %4143 = vmatprep.mubr.f32.mxu0 0.0
        %4144 = vmatmul.mubr.f32.gmra.mrb[0].mxu0 %v3992
        %v4145 = vpop.f32.mrb[0].mxu0
        %v4146 = vadd.f32 %v4017, %v4145
        %v4147 = vpop.f32.mrb[0].mxu0
        %4148 = vmatprep.mubr.f32.mxu0 0.0
        %4149 = vmatmul.mubr.f32.gmra.mrb[0].mxu0 %v3993
        %v4150 = vpop.f32.mrb[0].mxu0
        %v4151 = vadd.f32 %v4017, %v4150
        %v4152 = vpop.f32.mrb[0].mxu0
        %4153 = vmatprep.mubr.f32.mxu0 0.0
        %4154 = vmatmul.mubr.f32.gmra.mrb[0].mxu0 %v3994
        %v4155 = vpop.f32.mrb[0].mxu0
        %v4156 = vadd.f32 %v4017, %v4155
        %v4157 = vpop.f32.mrb[0].mxu0
        %4158 = vmatprep.mubr.f32.mxu0 0.0
        %4159 = vmatmul.mubr.f32.gmra.mrb[0].mxu0 %v3995
        %v4160 = vpop.f32.mrb[0].mxu0
        %v4161 = vadd.f32 %v4017, %v4160
        %v4162 = vpop.f32.mrb[0].mxu0
        %4163 = vdwg.mxu0
        %4164 = vst.msk [vmem:[%s348] sm:$0xff] %vm373, %v4086
        %4165 = vst.msk [vmem:[%s348 + $0x8] sm:$0xff] %vm373, %v4091
        %4166 = vst.msk [vmem:[%s348 + $0x10] sm:$0xff] %vm373, %v4096
        %4167 = vst.msk [vmem:[%s348 + $0x18] sm:$0xff] %vm373, %v4101
        %4168 = vst.msk [vmem:[%s348 + $0x20] sm:$0xff] %vm373, %v4106
        %4169 = vst.msk [vmem:[%s348 + $0x28] sm:$0xff] %vm373, %v4111
        %4170 = vst.msk [vmem:[%s348 + $0x30] sm:$0xff] %vm373, %v4116
        %4171 = vst.msk [vmem:[%s348 + $0x38] sm:$0xff] %vm373, %v4121
        %4172 = vst.msk [vmem:[%s348 + $0x40] sm:$0xff] %vm373, %v4126
        %4173 = vst.msk [vmem:[%s348 + $0x48] sm:$0xff] %vm373, %v4131
        %4174 = vst.msk [vmem:[%s348 + $0x50] sm:$0xff] %vm373, %v4136
        %4175 = vst.msk [vmem:[%s348 + $0x58] sm:$0xff] %vm373, %v4141
        %4176 = vst.msk [vmem:[%s348 + $0x60] sm:$0xff] %vm373, %v4146
        %4177 = vst.msk [vmem:[%s348 + $0x68] sm:$0xff] %vm373, %v4151
        %4178 = vst.msk [vmem:[%s348 + $0x70] sm:$0xff] %vm373, %v4156
        %4179 = vst.msk [vmem:[%s348 + $0x78] sm:$0xff] %vm373, %v4161
        %s4180 = smul.u32 16, %s24
        %p4181 = scmp.lt.s32.totalorder %s23, 1
        %s4182 = scalar_select %p4181, %s23, 1
        %p4183 = scmp.lt.s32.totalorder %s4180, 31
        %s4184 = scalar_select %p4183, %s4180, 31
        %s4185 = smul.addr %s4182, 32
        %s4186 = sadd.s32 %s4184, %s4185
        %s4187 = smul.addr %s4186, 8
        %s4188 = scalar_lea.vmem %s7, %s4187
        // Predicated region
        $region53: #{tpu_custom_call.1} parent=47 // pred_check
          %p4189 = pneg %p210
        $region54: #{tpu_custom_call.1} parent=47 // pred_check_branch
          %4191 = sbr.rel (%p4189) target = $region56
        $region55: #{tpu_custom_call.1} parent=47 // pred_region
          %s4192 = smul.u32 16, %s24
        $region56: #{tpu_custom_call.1} parent=47 // pred_fallthru
          _
      $region48: #{tpu_custom_call.1} parent=5 // pred_fallthru
        _
      %p4193 = scmp.le.s32.totalorder 2, %s14
      // Predicated region
      $region57: #{tpu_custom_call.1} parent=5 // pred_check
        %p4194 = pneg %p4193
      $region58: #{tpu_custom_call.1} parent=5 // pred_check_branch
        %4196 = sbr.rel (%p4194) target = $region60
      $region59: #{tpu_custom_call.1} parent=5 // pred_region
        %s4197 = ssub.s32 %s14, 2
        // Predicated region
        $region61: #{tpu_custom_call.1} parent=59 // pred_check
          %p4198 = pneg %p216
        $region62: #{tpu_custom_call.1} parent=59 // pred_check_branch
          %4200 = sbr.rel (%p4198) target = $region64
        $region63: #{tpu_custom_call.1} parent=59 // pred_region
          %s4201 = smul.u32 16, %s26
          %p4202 = scmp.lt.s32.totalorder %s25, 1
          %s4203 = scalar_select %p4202, %s25, 1
          %p4204 = scmp.lt.s32.totalorder %s4201, 31
          %s4205 = scalar_select %p4204, %s4201, 31
          %s4206 = smul.addr %s4203, 32
          %s4207 = sadd.s32 %s4205, %s4206
          %s4208 = smul.addr %s4207, 8
          %s4209 = scalar_lea.vmem %s7, %s4208
        $region64: #{tpu_custom_call.1} parent=59 // pred_fallthru
          _
      $region60: #{tpu_custom_call.1} parent=5 // pred_fallthru
        _
    $region6: #{tpu_custom_call.1} parent=1 // loop_footer
      %s18 = sadd.s32 1, %s14
    $region7: #{tpu_custom_call.1} parent=1 // loop_footer_branch
      %13 = sbr.rel target = $region3
    $region8: #{tpu_custom_call.1} parent=1 // loop_exit
      _
    %4210 = vsyncpa [#allocation3], 1
    %s4211 = scalar_lea.sflag [#allocation3], 1
    %4212 = vsyncpa %s4211, 1

</llo_original>
